<compile_context>
chip_gen: v7x
topology: tpu7x:2x2x1
jax: 0.10.0
libtpu: 0.0.40
codegen_flags: <defaults>
</compile_context>

<pallas_src>
import functools

import jax
import jax.numpy as jnp
from jax.experimental import pallas as pl
from jax.experimental.pallas import tpu as pltpu

KSIZE = 7
PAD = (KSIZE - 1) // 2  # 3


def _spatial_gate_kernel(w_ref, b_ref, cmask_ref, x_ref, o_ref, rowpad_ref, *,
                         C, H, W, CC, TB):
    # w_ref:      (2*KSIZE*KSIZE,) f32 SMEM  (BN-folded conv weight, flattened [ci, kh, kw])
    # b_ref:      (1,)             f32 SMEM  (BN-folded bias)
    # cmask_ref:  (KSIZE, H*W)     f32 VMEM  (per-kw column-validity masks)
    # x_ref:      (TB, C, H*W)     input block, lane-dense (TB batch elements)
    # o_ref:      (TB, C, H*W)     output block, lane-dense
    # rowpad_ref: (2, (H+2*PAD)*W + 2*PAD) f32 VMEM scratch (row-padded flat pooled maps)
    HW = H * W
    L = (H + 2 * PAD) * W + 2 * PAD     # row-padded flat plane length
    S = PAD * W + PAD                   # store offset of the real plane inside the scratch
    nfull = C // CC
    rem = C - nfull * CC
    nsub = CC // 8                      # 8-sublane sub-chunks per loaded channel chunk
    unroll = max(1, min(4, nfull))

    # Read the (BN-folded) conv weights / bias from SMEM once per grid step.
    wts = [w_ref[i] for i in range(2 * KSIZE * KSIZE)]
    bias = b_ref[0]

    # Zero the row-padded scratch once per grid step.  The interior is overwritten per batch
    # element below; the zero borders provide the conv's top/bottom (row) zero-padding.
    rowpad_ref[...] = jnp.zeros((2, L), dtype=jnp.float32)

    for b in range(TB):
        # ---- Phase 1: channel pool (max & mean over C), streamed in CC-channel chunks.
        # Per-chunk work stays elementwise on the VPU; the cross-sublane (XLU) reduce
        # happens once per image.
        if nfull > 0:
            def pool_body(i, carry):
                m, s = carry
                c0 = pl.multiple_of(i * CC, CC)
                blk = x_ref[b, pl.ds(c0, CC), :].astype(jnp.float32)   # (CC, HW)
                for j in range(nsub):
                    part = blk[j * 8:(j + 1) * 8, :]
                    m = jnp.maximum(m, part)
                    s = s + part
                return m, s

            m0 = jnp.full((8, HW), -jnp.inf, dtype=jnp.float32)
            s0 = jnp.zeros((8, HW), dtype=jnp.float32)
            m_acc, s_acc = jax.lax.fori_loop(0, nfull, pool_body, (m0, s0),
                                             unroll=unroll)
            p_max = jnp.max(m_acc, axis=0, keepdims=True)
            p_sum = jnp.sum(s_acc, axis=0, keepdims=True)
            if rem > 0:                                                # static tail chunk
                tail = x_ref[b, C - rem:C, :].astype(jnp.float32)
                p_max = jnp.maximum(p_max, jnp.max(tail, axis=0, keepdims=True))
                p_sum = p_sum + jnp.sum(tail, axis=0, keepdims=True)
        else:                                                          # C < CC: one chunk
            tail = x_ref[b, :, :].astype(jnp.float32)                  # (C, HW)
            p_max = jnp.max(tail, axis=0, keepdims=True)
            p_sum = jnp.sum(tail, axis=0, keepdims=True)
        p_mean = p_sum * jnp.float32(1.0 / C)

        # ---- Phase 2: ONE dense store per pooled plane into the row-padded flat scratch
        # (replaces the former ~3*H masked per-row stores).
        rowpad_ref[0:1, S:S + HW] = p_max
        rowpad_ref[1:2, S:S + HW] = p_mean

        # ---- Phase 3: 7x7 conv (2 -> 1 channel) directly in the lane-dense flat layout.
        # Window at offset kh*W + kw reads element (h+kh-PAD, w+kw-PAD): rows out of range
        # hit the zero borders; column wrap-around is zeroed by the per-kw mask.
        acc = jnp.full((1, HW), bias, dtype=jnp.float32)               # bias folded into init
        for kw in range(KSIZE):
            part = None
            for ci in range(2):
                for kh in range(KSIZE):
                    off = kh * W + kw
                    v = rowpad_ref[ci:ci + 1, off:off + HW]            # (1, HW) shifted load
                    wval = wts[ci * KSIZE * KSIZE + kh * KSIZE + kw]
                    part = wval * v if part is None else part + wval * v
            acc = acc + part * cmask_ref[kw:kw + 1, :]

        scale = jax.nn.sigmoid(acc).astype(o_ref.dtype)                # (1, HW) lane-dense

        # ---- Phase 4: out = x * scale, streamed per channel chunk in x's native dtype.
        if nfull > 0:
            scale_b = jnp.broadcast_to(scale, (CC, HW))                # hoisted broadcast

            def mul_body(i, carry):
                c0 = pl.multiple_of(i * CC, CC)
                sl = pl.ds(c0, CC)
                o_ref[b, sl, :] = (x_ref[b, sl, :] * scale_b).astype(o_ref.dtype)
                return carry

            jax.lax.fori_loop(0, nfull, mul_body, 0, unroll=unroll)
        if rem > 0:
            o_ref[b, C - rem:C, :] = (x_ref[b, C - rem:C, :] * scale).astype(o_ref.dtype)


def spatial_gate(x, conv_w, bn_gamma, bn_beta, bn_mean, bn_var, eps=1e-5):
    """x: (N, C, H, W); conv_w: (1, 2, KSIZE, KSIZE). Returns (N, C, H, W)."""
    N, C, H, W = x.shape
    HW = H * W
    L = (H + 2 * PAD) * W + 2 * PAD

    # Fold inference-mode BatchNorm2d(1) into the conv weight + a scalar bias.
    a = bn_gamma / jnp.sqrt(bn_var + eps)                    # scalar
    bias = bn_beta - bn_mean * a                             # scalar
    w_flat = (conv_w[0] * a).astype(jnp.float32).reshape(-1)  # (2*KSIZE*KSIZE,), [ci, kh, kw]
    b_arr = jnp.asarray(bias, jnp.float32).reshape(1)

    # Per-kw column-validity masks for the flat-layout conv (precomputed host/XLA side).
    col = jnp.arange(HW, dtype=jnp.int32) % W
    cmask = jnp.stack(
        [((col + (kw - PAD) >= 0) & (col + (kw - PAD) < W)).astype(jnp.float32)
         for kw in range(KSIZE)], axis=0)                    # (KSIZE, HW)

    # Lane-dense layout: free (contiguous) reshape so H*W is the 128-lane axis.
    x_r = x.reshape(N, C, HW)

    elt = jnp.dtype(x.dtype).itemsize
    # Dtype-aware channel chunk: one native sublane tile (8 f32 / 16 bf16 / 32 int8).
    CC = {4: 8, 2: 16, 1: 32}.get(elt, 8)

    # Batch multiple images per grid step when the per-image block is small, to amortize
    # the ~0.35 us per-grid-step overhead (the kernel is HBM-bound).
    per_img = C * HW * elt
    TB = 1
    for d in range(1, N + 1):
        if N % d == 0 and d <= 16 and d * per_img <= (2 << 20):
            TB = d

    kernel = functools.partial(_spatial_gate_kernel, C=C, H=H, W=W, CC=CC, TB=TB)

    block_bytes = TB * per_img
    scratch_bytes = 2 * (((L + 127) // 128) * 128) * 4 * 4   # generous (tile padding)
    mask_bytes = 2 * KSIZE * HW * 4
    vmem_need = 4 * block_bytes + scratch_bytes + mask_bytes + (2 << 20)

    # Generation-aware VMEM budget: ~80% of physical (v5e/v6e: 128 MiB, v7x: 64 MiB).
    try:
        phys_vmem = int(pltpu.get_tpu_info().vmem_capacity_bytes)
    except Exception:
        phys_vmem = 64 * 1024 * 1024
    vmem_limit = int(min(max(vmem_need, 32 * 1024 * 1024), int(phys_vmem * 0.8)))
    # TODO(synk): if 4*block_bytes exceeds this budget (huge C*HW, mainly on v7x), fall back
    #             to a channel/spatial-tiled grid or single-buffer the output.

    cost = pl.CostEstimate(
        flops=int(N * (3 * C * HW + (2 * 2 * KSIZE * KSIZE + KSIZE) * HW)),
        transcendentals=int(N * HW),
        bytes_accessed=int(2 * N * C * HW * elt),
    )

    out_r = pl.pallas_call(
        kernel,
        out_shape=jax.ShapeDtypeStruct((N, C, HW), x.dtype),
        grid_spec=pltpu.PrefetchScalarGridSpec(
            num_scalar_prefetch=0,
            grid=(N // TB,),
            in_specs=[
                pl.BlockSpec(memory_space=pltpu.MemorySpace.SMEM),   # folded conv weights
                pl.BlockSpec(memory_space=pltpu.MemorySpace.SMEM),   # folded bias
                pl.BlockSpec((KSIZE, HW), lambda n: (0, 0)),         # column masks
                pl.BlockSpec((TB, C, HW), lambda n: (n, 0, 0)),      # x, lane-dense
            ],
            out_specs=pl.BlockSpec((TB, C, HW), lambda n: (n, 0, 0)),
            scratch_shapes=[
                pltpu.VMEM((2, L), jnp.float32),                     # row-padded pooled maps
            ],
        ),
        compiler_params=pltpu.CompilerParams(
            dimension_semantics=("parallel",),     # batch blocks independent -> megacore shard
            vmem_limit_bytes=vmem_limit,
        ),
        cost_estimate=cost,
        # Output fully overwrites x; alias its HBM buffer (donate x at the caller to avoid
        # a defensive copy).
        input_output_aliases={3: 0},
    )(w_flat, b_arr, cmask, x_r)

    return out_r.reshape(N, C, H, W)


def spatial_gate_reference(x, conv_w, bn_gamma, bn_beta, bn_mean, bn_var, eps=1e-5):
    """Pure-JAX reference (same math, XLA conv)."""
    x_max = jnp.max(x, axis=1, keepdims=True)
    x_mean = jnp.mean(x, axis=1, keepdims=True)
    comp = jnp.concatenate([x_max, x_mean], axis=1)            # (N, 2, H, W)
    conv = jax.lax.conv_general_dilated(
        comp, conv_w, window_strides=(1, 1), padding=[(PAD, PAD), (PAD, PAD)],
        dimension_numbers=("NCHW", "OIHW", "NCHW"))
    bn = bn_gamma * (conv - bn_mean) / jnp.sqrt(bn_var + eps) + bn_beta
    return x * jax.nn.sigmoid(bn)


if __name__ == "__main__":
    key = jax.random.PRNGKey(0)
    kx, kw = jax.random.split(key)

    # C=36 exercises the chunked pool/mul loops (nfull=4), the remainder tail (rem=4),
    # and the TB=2 batched-block path, while staying small.
    N, C, H, W = 2, 36, 16, 16
    x = jax.random.normal(kx, (N, C, H, W), dtype=jnp.float32)

    # Deterministic parameter init (synthetic, fresh-module style) with non-trivial BN stats
    # so the BN fold is actually validated.
    fan_in = 2 * KSIZE * KSIZE
    conv_w = jax.random.normal(kw, (1, 2, KSIZE, KSIZE), dtype=jnp.float32) / jnp.sqrt(fan_in)
    bn_gamma = jnp.float32(1.25)
    bn_beta = jnp.float32(0.1)
    bn_mean = jnp.float32(0.05)
    bn_var = jnp.float32(0.8)

    out = spatial_gate(x, conv_w, bn_gamma, bn_beta, bn_mean, bn_var)
    out = jax.block_until_ready(out)

    ref = spatial_gate_reference(x, conv_w, bn_gamma, bn_beta, bn_mean, bn_var)
    assert out.shape == x.shape and out.dtype == x.dtype
    assert jnp.allclose(out, ref, rtol=1e-5, atol=1e-5), "mismatch vs. JAX reference"

    print("KERNEL_OK")
</pallas_src>

<mosaic_0001>
module attributes {stable_mosaic.version = 11 : i64} {
  func.func @_spatial_gate_kernel(%arg0: i32, %arg1: memref<98xf32, #tpu.memory_space<smem>>, %arg2: memref<1xf32, #tpu.memory_space<smem>>, %arg3: memref<7x256xf32, #tpu.memory_space<vmem>>, %arg4: memref<2x36x256xf32, #tpu.memory_space<vmem>>, %arg5: memref<2x36x256xf32, #tpu.memory_space<vmem>>, %arg6: memref<2x358xf32, #tpu.memory_space<vmem>>) attributes {dimension_semantics = [#tpu.dimension_semantics<parallel>], iteration_bounds = array<i64: 1>, scalar_prefetch = 0 : i64, scratch_operands = 1 : i64, tpu.core_type = #tpu.core_type<tc>, window_params = [{transform_indices = @transform_0, window_bounds = array<i64: 98>}, {transform_indices = @transform_1, window_bounds = array<i64: 1>}, {pipeline_mode = #tpu.pipeline_mode<synchronous>, transform_indices = @transform_2, window_bounds = array<i64: 7, 256>}, {transform_indices = @transform_3, window_bounds = array<i64: 2, 36, 256>}, {transform_indices = @transform_4, window_bounds = array<i64: 2, 36, 256>}]} {
    %c0 = arith.constant 0 : index
    %0 = memref.load %arg1[%c0] : memref<98xf32, #tpu.memory_space<smem>>
    %c1 = arith.constant 1 : index
    %1 = memref.load %arg1[%c1] : memref<98xf32, #tpu.memory_space<smem>>
    %c2 = arith.constant 2 : index
    %2 = memref.load %arg1[%c2] : memref<98xf32, #tpu.memory_space<smem>>
    %c3 = arith.constant 3 : index
    %3 = memref.load %arg1[%c3] : memref<98xf32, #tpu.memory_space<smem>>
    %c4 = arith.constant 4 : index
    %4 = memref.load %arg1[%c4] : memref<98xf32, #tpu.memory_space<smem>>
    %c5 = arith.constant 5 : index
    %5 = memref.load %arg1[%c5] : memref<98xf32, #tpu.memory_space<smem>>
    %c6 = arith.constant 6 : index
    %6 = memref.load %arg1[%c6] : memref<98xf32, #tpu.memory_space<smem>>
    %c7 = arith.constant 7 : index
    %7 = memref.load %arg1[%c7] : memref<98xf32, #tpu.memory_space<smem>>
    %c8 = arith.constant 8 : index
    %8 = memref.load %arg1[%c8] : memref<98xf32, #tpu.memory_space<smem>>
    %c9 = arith.constant 9 : index
    %9 = memref.load %arg1[%c9] : memref<98xf32, #tpu.memory_space<smem>>
    %c10 = arith.constant 10 : index
    %10 = memref.load %arg1[%c10] : memref<98xf32, #tpu.memory_space<smem>>
    %c11 = arith.constant 11 : index
    %11 = memref.load %arg1[%c11] : memref<98xf32, #tpu.memory_space<smem>>
    %c12 = arith.constant 12 : index
    %12 = memref.load %arg1[%c12] : memref<98xf32, #tpu.memory_space<smem>>
    %c13 = arith.constant 13 : index
    %13 = memref.load %arg1[%c13] : memref<98xf32, #tpu.memory_space<smem>>
    %c14 = arith.constant 14 : index
    %14 = memref.load %arg1[%c14] : memref<98xf32, #tpu.memory_space<smem>>
    %c15 = arith.constant 15 : index
    %15 = memref.load %arg1[%c15] : memref<98xf32, #tpu.memory_space<smem>>
    %c16 = arith.constant 16 : index
    %16 = memref.load %arg1[%c16] : memref<98xf32, #tpu.memory_space<smem>>
    %c17 = arith.constant 17 : index
    %17 = memref.load %arg1[%c17] : memref<98xf32, #tpu.memory_space<smem>>
    %c18 = arith.constant 18 : index
    %18 = memref.load %arg1[%c18] : memref<98xf32, #tpu.memory_space<smem>>
    %c19 = arith.constant 19 : index
    %19 = memref.load %arg1[%c19] : memref<98xf32, #tpu.memory_space<smem>>
    %c20 = arith.constant 20 : index
    %20 = memref.load %arg1[%c20] : memref<98xf32, #tpu.memory_space<smem>>
    %c21 = arith.constant 21 : index
    %21 = memref.load %arg1[%c21] : memref<98xf32, #tpu.memory_space<smem>>
    %c22 = arith.constant 22 : index
    %22 = memref.load %arg1[%c22] : memref<98xf32, #tpu.memory_space<smem>>
    %c23 = arith.constant 23 : index
    %23 = memref.load %arg1[%c23] : memref<98xf32, #tpu.memory_space<smem>>
    %c24 = arith.constant 24 : index
    %24 = memref.load %arg1[%c24] : memref<98xf32, #tpu.memory_space<smem>>
    %c25 = arith.constant 25 : index
    %25 = memref.load %arg1[%c25] : memref<98xf32, #tpu.memory_space<smem>>
    %c26 = arith.constant 26 : index
    %26 = memref.load %arg1[%c26] : memref<98xf32, #tpu.memory_space<smem>>
    %c27 = arith.constant 27 : index
    %27 = memref.load %arg1[%c27] : memref<98xf32, #tpu.memory_space<smem>>
    %c28 = arith.constant 28 : index
    %28 = memref.load %arg1[%c28] : memref<98xf32, #tpu.memory_space<smem>>
    %c29 = arith.constant 29 : index
    %29 = memref.load %arg1[%c29] : memref<98xf32, #tpu.memory_space<smem>>
    %c30 = arith.constant 30 : index
    %30 = memref.load %arg1[%c30] : memref<98xf32, #tpu.memory_space<smem>>
    %c31 = arith.constant 31 : index
    %31 = memref.load %arg1[%c31] : memref<98xf32, #tpu.memory_space<smem>>
    %c32 = arith.constant 32 : index
    %32 = memref.load %arg1[%c32] : memref<98xf32, #tpu.memory_space<smem>>
    %c33 = arith.constant 33 : index
    %33 = memref.load %arg1[%c33] : memref<98xf32, #tpu.memory_space<smem>>
    %c34 = arith.constant 34 : index
    %34 = memref.load %arg1[%c34] : memref<98xf32, #tpu.memory_space<smem>>
    %c35 = arith.constant 35 : index
    %35 = memref.load %arg1[%c35] : memref<98xf32, #tpu.memory_space<smem>>
    %c36 = arith.constant 36 : index
    %36 = memref.load %arg1[%c36] : memref<98xf32, #tpu.memory_space<smem>>
    %c37 = arith.constant 37 : index
    %37 = memref.load %arg1[%c37] : memref<98xf32, #tpu.memory_space<smem>>
    %c38 = arith.constant 38 : index
    %38 = memref.load %arg1[%c38] : memref<98xf32, #tpu.memory_space<smem>>
    %c39 = arith.constant 39 : index
    %39 = memref.load %arg1[%c39] : memref<98xf32, #tpu.memory_space<smem>>
    %c40 = arith.constant 40 : index
    %40 = memref.load %arg1[%c40] : memref<98xf32, #tpu.memory_space<smem>>
    %c41 = arith.constant 41 : index
    %41 = memref.load %arg1[%c41] : memref<98xf32, #tpu.memory_space<smem>>
    %c42 = arith.constant 42 : index
    %42 = memref.load %arg1[%c42] : memref<98xf32, #tpu.memory_space<smem>>
    %c43 = arith.constant 43 : index
    %43 = memref.load %arg1[%c43] : memref<98xf32, #tpu.memory_space<smem>>
    %c44 = arith.constant 44 : index
    %44 = memref.load %arg1[%c44] : memref<98xf32, #tpu.memory_space<smem>>
    %c45 = arith.constant 45 : index
    %45 = memref.load %arg1[%c45] : memref<98xf32, #tpu.memory_space<smem>>
    %c46 = arith.constant 46 : index
    %46 = memref.load %arg1[%c46] : memref<98xf32, #tpu.memory_space<smem>>
    %c47 = arith.constant 47 : index
    %47 = memref.load %arg1[%c47] : memref<98xf32, #tpu.memory_space<smem>>
    %c48 = arith.constant 48 : index
    %48 = memref.load %arg1[%c48] : memref<98xf32, #tpu.memory_space<smem>>
    %c49 = arith.constant 49 : index
    %49 = memref.load %arg1[%c49] : memref<98xf32, #tpu.memory_space<smem>>
    %c50 = arith.constant 50 : index
    %50 = memref.load %arg1[%c50] : memref<98xf32, #tpu.memory_space<smem>>
    %c51 = arith.constant 51 : index
    %51 = memref.load %arg1[%c51] : memref<98xf32, #tpu.memory_space<smem>>
    %c52 = arith.constant 52 : index
    %52 = memref.load %arg1[%c52] : memref<98xf32, #tpu.memory_space<smem>>
    %c53 = arith.constant 53 : index
    %53 = memref.load %arg1[%c53] : memref<98xf32, #tpu.memory_space<smem>>
    %c54 = arith.constant 54 : index
    %54 = memref.load %arg1[%c54] : memref<98xf32, #tpu.memory_space<smem>>
    %c55 = arith.constant 55 : index
    %55 = memref.load %arg1[%c55] : memref<98xf32, #tpu.memory_space<smem>>
    %c56 = arith.constant 56 : index
    %56 = memref.load %arg1[%c56] : memref<98xf32, #tpu.memory_space<smem>>
    %c57 = arith.constant 57 : index
    %57 = memref.load %arg1[%c57] : memref<98xf32, #tpu.memory_space<smem>>
    %c58 = arith.constant 58 : index
    %58 = memref.load %arg1[%c58] : memref<98xf32, #tpu.memory_space<smem>>
    %c59 = arith.constant 59 : index
    %59 = memref.load %arg1[%c59] : memref<98xf32, #tpu.memory_space<smem>>
    %c60 = arith.constant 60 : index
    %60 = memref.load %arg1[%c60] : memref<98xf32, #tpu.memory_space<smem>>
    %c61 = arith.constant 61 : index
    %61 = memref.load %arg1[%c61] : memref<98xf32, #tpu.memory_space<smem>>
    %c62 = arith.constant 62 : index
    %62 = memref.load %arg1[%c62] : memref<98xf32, #tpu.memory_space<smem>>
    %c63 = arith.constant 63 : index
    %63 = memref.load %arg1[%c63] : memref<98xf32, #tpu.memory_space<smem>>
    %c64 = arith.constant 64 : index
    %64 = memref.load %arg1[%c64] : memref<98xf32, #tpu.memory_space<smem>>
    %c65 = arith.constant 65 : index
    %65 = memref.load %arg1[%c65] : memref<98xf32, #tpu.memory_space<smem>>
    %c66 = arith.constant 66 : index
    %66 = memref.load %arg1[%c66] : memref<98xf32, #tpu.memory_space<smem>>
    %c67 = arith.constant 67 : index
    %67 = memref.load %arg1[%c67] : memref<98xf32, #tpu.memory_space<smem>>
    %c68 = arith.constant 68 : index
    %68 = memref.load %arg1[%c68] : memref<98xf32, #tpu.memory_space<smem>>
    %c69 = arith.constant 69 : index
    %69 = memref.load %arg1[%c69] : memref<98xf32, #tpu.memory_space<smem>>
    %c70 = arith.constant 70 : index
    %70 = memref.load %arg1[%c70] : memref<98xf32, #tpu.memory_space<smem>>
    %c71 = arith.constant 71 : index
    %71 = memref.load %arg1[%c71] : memref<98xf32, #tpu.memory_space<smem>>
    %c72 = arith.constant 72 : index
    %72 = memref.load %arg1[%c72] : memref<98xf32, #tpu.memory_space<smem>>
    %c73 = arith.constant 73 : index
    %73 = memref.load %arg1[%c73] : memref<98xf32, #tpu.memory_space<smem>>
    %c74 = arith.constant 74 : index
    %74 = memref.load %arg1[%c74] : memref<98xf32, #tpu.memory_space<smem>>
    %c75 = arith.constant 75 : index
    %75 = memref.load %arg1[%c75] : memref<98xf32, #tpu.memory_space<smem>>
    %c76 = arith.constant 76 : index
    %76 = memref.load %arg1[%c76] : memref<98xf32, #tpu.memory_space<smem>>
    %c77 = arith.constant 77 : index
    %77 = memref.load %arg1[%c77] : memref<98xf32, #tpu.memory_space<smem>>
    %c78 = arith.constant 78 : index
    %78 = memref.load %arg1[%c78] : memref<98xf32, #tpu.memory_space<smem>>
    %c79 = arith.constant 79 : index
    %79 = memref.load %arg1[%c79] : memref<98xf32, #tpu.memory_space<smem>>
    %c80 = arith.constant 80 : index
    %80 = memref.load %arg1[%c80] : memref<98xf32, #tpu.memory_space<smem>>
    %c81 = arith.constant 81 : index
    %81 = memref.load %arg1[%c81] : memref<98xf32, #tpu.memory_space<smem>>
    %c82 = arith.constant 82 : index
    %82 = memref.load %arg1[%c82] : memref<98xf32, #tpu.memory_space<smem>>
    %c83 = arith.constant 83 : index
    %83 = memref.load %arg1[%c83] : memref<98xf32, #tpu.memory_space<smem>>
    %c84 = arith.constant 84 : index
    %84 = memref.load %arg1[%c84] : memref<98xf32, #tpu.memory_space<smem>>
    %c85 = arith.constant 85 : index
    %85 = memref.load %arg1[%c85] : memref<98xf32, #tpu.memory_space<smem>>
    %c86 = arith.constant 86 : index
    %86 = memref.load %arg1[%c86] : memref<98xf32, #tpu.memory_space<smem>>
    %c87 = arith.constant 87 : index
    %87 = memref.load %arg1[%c87] : memref<98xf32, #tpu.memory_space<smem>>
    %c88 = arith.constant 88 : index
    %88 = memref.load %arg1[%c88] : memref<98xf32, #tpu.memory_space<smem>>
    %c89 = arith.constant 89 : index
    %89 = memref.load %arg1[%c89] : memref<98xf32, #tpu.memory_space<smem>>
    %c90 = arith.constant 90 : index
    %90 = memref.load %arg1[%c90] : memref<98xf32, #tpu.memory_space<smem>>
    %c91 = arith.constant 91 : index
    %91 = memref.load %arg1[%c91] : memref<98xf32, #tpu.memory_space<smem>>
    %c92 = arith.constant 92 : index
    %92 = memref.load %arg1[%c92] : memref<98xf32, #tpu.memory_space<smem>>
    %c93 = arith.constant 93 : index
    %93 = memref.load %arg1[%c93] : memref<98xf32, #tpu.memory_space<smem>>
    %c94 = arith.constant 94 : index
    %94 = memref.load %arg1[%c94] : memref<98xf32, #tpu.memory_space<smem>>
    %c95 = arith.constant 95 : index
    %95 = memref.load %arg1[%c95] : memref<98xf32, #tpu.memory_space<smem>>
    %c96 = arith.constant 96 : index
    %96 = memref.load %arg1[%c96] : memref<98xf32, #tpu.memory_space<smem>>
    %c97 = arith.constant 97 : index
    %97 = memref.load %arg1[%c97] : memref<98xf32, #tpu.memory_space<smem>>
    %c0_0 = arith.constant 0 : index
    %98 = memref.load %arg2[%c0_0] : memref<1xf32, #tpu.memory_space<smem>>
    %cst = arith.constant 0.000000e+00 : f32
    %99 = vector.broadcast %cst : f32 to vector<2x358xf32>
    %c0_1 = arith.constant 0 : index
    %c0_2 = arith.constant 0 : index
    %100 = vector.load %arg6[%c0_1, %c0_2] : memref<2x358xf32, #tpu.memory_space<vmem>>, vector<2x358xf32>
    tpu.vector_store %arg6[%c0_1, %c0_2], %99 {strides = array<i32>} : memref<2x358xf32, #tpu.memory_space<vmem>>, vector<2x358xf32>,
    %cst_3 = arith.constant 0xFF800000 : f32
    %101 = vector.broadcast %cst_3 : f32 to vector<8x256xf32>
    %cst_4 = arith.constant 0.000000e+00 : f32
    %102 = vector.broadcast %cst_4 : f32 to vector<8x256xf32>
    %c0_i32 = arith.constant 0 : i32
    %c8_i32 = arith.constant 8 : i32
    %103 = arith.muli %c0_i32, %c8_i32 : i32
    %104 = tpu.assume_multiple %103, 8 : i32
    %c0_5 = arith.constant 0 : index
    %105 = arith.index_cast %104 : i32 to index
    %c0_6 = arith.constant 0 : index
    %106 = vector.load %arg4[%c0_5, %105, %c0_6] : memref<2x36x256xf32, #tpu.memory_space<vmem>>, vector<1x8x256xf32>
    %107 = vector.shape_cast %106 : vector<1x8x256xf32> to vector<8x256xf32>
    %108 = arith.maximumf %101, %107 : vector<8x256xf32>
    %109 = arith.addf %102, %107 : vector<8x256xf32>
    %c1_i32 = arith.constant 1 : i32
    %c8_i32_7 = arith.constant 8 : i32
    %110 = arith.muli %c1_i32, %c8_i32_7 : i32
    %111 = tpu.assume_multiple %110, 8 : i32
    %c0_8 = arith.constant 0 : index
    %112 = arith.index_cast %111 : i32 to index
    %c0_9 = arith.constant 0 : index
    %113 = vector.load %arg4[%c0_8, %112, %c0_9] : memref<2x36x256xf32, #tpu.memory_space<vmem>>, vector<1x8x256xf32>
    %114 = vector.shape_cast %113 : vector<1x8x256xf32> to vector<8x256xf32>
    %115 = arith.maximumf %108, %114 : vector<8x256xf32>
    %116 = arith.addf %109, %114 : vector<8x256xf32>
    %c2_i32 = arith.constant 2 : i32
    %c8_i32_10 = arith.constant 8 : i32
    %117 = arith.muli %c2_i32, %c8_i32_10 : i32
    %118 = tpu.assume_multiple %117, 8 : i32
    %c0_11 = arith.constant 0 : index
    %119 = arith.index_cast %118 : i32 to index
    %c0_12 = arith.constant 0 : index
    %120 = vector.load %arg4[%c0_11, %119, %c0_12] : memref<2x36x256xf32, #tpu.memory_space<vmem>>, vector<1x8x256xf32>
    %121 = vector.shape_cast %120 : vector<1x8x256xf32> to vector<8x256xf32>
    %122 = arith.maximumf %115, %121 : vector<8x256xf32>
    %123 = arith.addf %116, %121 : vector<8x256xf32>
    %c3_i32 = arith.constant 3 : i32
    %c8_i32_13 = arith.constant 8 : i32
    %124 = arith.muli %c3_i32, %c8_i32_13 : i32
    %125 = tpu.assume_multiple %124, 8 : i32
    %c0_14 = arith.constant 0 : index
    %126 = arith.index_cast %125 : i32 to index
    %c0_15 = arith.constant 0 : index
    %127 = vector.load %arg4[%c0_14, %126, %c0_15] : memref<2x36x256xf32, #tpu.memory_space<vmem>>, vector<1x8x256xf32>
    %128 = vector.shape_cast %127 : vector<1x8x256xf32> to vector<8x256xf32>
    %129 = arith.maximumf %122, %128 : vector<8x256xf32>
    %130 = arith.addf %123, %128 : vector<8x256xf32>
    %c4_i32 = arith.constant 4 : i32
    %cst_16 = arith.constant dense<0xFF800000> : vector<256xf32>
    %131 = vector.multi_reduction <maximumf>, %129, %cst_16 [0] : vector<8x256xf32> to vector<256xf32>
    %132 = vector.shape_cast %131 : vector<256xf32> to vector<1x256xf32>
    %cst_17 = arith.constant dense<0.000000e+00> : vector<256xf32>
    %133 = vector.multi_reduction <add>, %130, %cst_17 [0] : vector<8x256xf32> to vector<256xf32>
    %134 = vector.shape_cast %133 : vector<256xf32> to vector<1x256xf32>
    %c0_18 = arith.constant 0 : index
    %c32_19 = arith.constant 32 : index
    %c0_20 = arith.constant 0 : index
    %135 = vector.load %arg4[%c0_18, %c32_19, %c0_20] : memref<2x36x256xf32, #tpu.memory_space<vmem>>, vector<1x4x256xf32>
    %136 = vector.shape_cast %135 : vector<1x4x256xf32> to vector<4x256xf32>
    %cst_21 = arith.constant dense<0xFF800000> : vector<256xf32>
    %137 = vector.multi_reduction <maximumf>, %136, %cst_21 [0] : vector<4x256xf32> to vector<256xf32>
    %138 = vector.shape_cast %137 : vector<256xf32> to vector<1x256xf32>
    %139 = arith.maximumf %132, %138 : vector<1x256xf32>
    %cst_22 = arith.constant dense<0.000000e+00> : vector<256xf32>
    %140 = vector.multi_reduction <add>, %136, %cst_22 [0] : vector<4x256xf32> to vector<256xf32>
    %141 = vector.shape_cast %140 : vector<256xf32> to vector<1x256xf32>
    %142 = arith.addf %134, %141 : vector<1x256xf32>
    %cst_23 = arith.constant 0.027777778 : f32
    %143 = vector.broadcast %cst_23 : f32 to vector<1x256xf32>
    %144 = arith.mulf %142, %143 : vector<1x256xf32>
    %c0_24 = arith.constant 0 : index
    %c51_25 = arith.constant 51 : index
    %145 = vector.load %arg6[%c0_24, %c51_25] : memref<2x358xf32, #tpu.memory_space<vmem>>, vector<1x256xf32>
    tpu.vector_store %arg6[%c0_24, %c51_25], %139 {strides = array<i32>} : memref<2x358xf32, #tpu.memory_space<vmem>>, vector<1x256xf32>,
    %c1_26 = arith.constant 1 : index
    %c51_27 = arith.constant 51 : index
    %146 = vector.load %arg6[%c1_26, %c51_27] : memref<2x358xf32, #tpu.memory_space<vmem>>, vector<1x256xf32>
    tpu.vector_store %arg6[%c1_26, %c51_27], %144 {strides = array<i32>} : memref<2x358xf32, #tpu.memory_space<vmem>>, vector<1x256xf32>,
    %147 = vector.broadcast %98 : f32 to vector<1x256xf32>
    %c0_28 = arith.constant 0 : index
    %c0_29 = arith.constant 0 : index
    %148 = vector.load %arg6[%c0_28, %c0_29] : memref<2x358xf32, #tpu.memory_space<vmem>>, vector<1x256xf32>
    %149 = vector.broadcast %0 : f32 to vector<1x256xf32>
    %150 = arith.mulf %149, %148 : vector<1x256xf32>
    %c0_30 = arith.constant 0 : index
    %c16_31 = arith.constant 16 : index
    %151 = vector.load %arg6[%c0_30, %c16_31] : memref<2x358xf32, #tpu.memory_space<vmem>>, vector<1x256xf32>
    %152 = vector.broadcast %7 : f32 to vector<1x256xf32>
    %153 = arith.mulf %152, %151 : vector<1x256xf32>
    %154 = arith.addf %150, %153 : vector<1x256xf32>
    %c0_32 = arith.constant 0 : index
    %c32_33 = arith.constant 32 : index
    %155 = vector.load %arg6[%c0_32, %c32_33] : memref<2x358xf32, #tpu.memory_space<vmem>>, vector<1x256xf32>
    %156 = vector.broadcast %14 : f32 to vector<1x256xf32>
    %157 = arith.mulf %156, %155 : vector<1x256xf32>
    %158 = arith.addf %154, %157 : vector<1x256xf32>
    %c0_34 = arith.constant 0 : index
    %c48_35 = arith.constant 48 : index
    %159 = vector.load %arg6[%c0_34, %c48_35] : memref<2x358xf32, #tpu.memory_space<vmem>>, vector<1x256xf32>
    %160 = vector.broadcast %21 : f32 to vector<1x256xf32>
    %161 = arith.mulf %160, %159 : vector<1x256xf32>
    %162 = arith.addf %158, %161 : vector<1x256xf32>
    %c0_36 = arith.constant 0 : index
    %c64_37 = arith.constant 64 : index
    %163 = vector.load %arg6[%c0_36, %c64_37] : memref<2x358xf32, #tpu.memory_space<vmem>>, vector<1x256xf32>
    %164 = vector.broadcast %28 : f32 to vector<1x256xf32>
    %165 = arith.mulf %164, %163 : vector<1x256xf32>
    %166 = arith.addf %162, %165 : vector<1x256xf32>
    %c0_38 = arith.constant 0 : index
    %c80_39 = arith.constant 80 : index
    %167 = vector.load %arg6[%c0_38, %c80_39] : memref<2x358xf32, #tpu.memory_space<vmem>>, vector<1x256xf32>
    %168 = vector.broadcast %35 : f32 to vector<1x256xf32>
    %169 = arith.mulf %168, %167 : vector<1x256xf32>
    %170 = arith.addf %166, %169 : vector<1x256xf32>
    %c0_40 = arith.constant 0 : index
    %c96_41 = arith.constant 96 : index
    %171 = vector.load %arg6[%c0_40, %c96_41] : memref<2x358xf32, #tpu.memory_space<vmem>>, vector<1x256xf32>
    %172 = vector.broadcast %42 : f32 to vector<1x256xf32>
    %173 = arith.mulf %172, %171 : vector<1x256xf32>
    %174 = arith.addf %170, %173 : vector<1x256xf32>
    %c1_42 = arith.constant 1 : index
    %c0_43 = arith.constant 0 : index
    %175 = vector.load %arg6[%c1_42, %c0_43] : memref<2x358xf32, #tpu.memory_space<vmem>>, vector<1x256xf32>
    %176 = vector.broadcast %49 : f32 to vector<1x256xf32>
    %177 = arith.mulf %176, %175 : vector<1x256xf32>
    %178 = arith.addf %174, %177 : vector<1x256xf32>
    %c1_44 = arith.constant 1 : index
    %c16_45 = arith.constant 16 : index
    %179 = vector.load %arg6[%c1_44, %c16_45] : memref<2x358xf32, #tpu.memory_space<vmem>>, vector<1x256xf32>
    %180 = vector.broadcast %56 : f32 to vector<1x256xf32>
    %181 = arith.mulf %180, %179 : vector<1x256xf32>
    %182 = arith.addf %178, %181 : vector<1x256xf32>
    %c1_46 = arith.constant 1 : index
    %c32_47 = arith.constant 32 : index
    %183 = vector.load %arg6[%c1_46, %c32_47] : memref<2x358xf32, #tpu.memory_space<vmem>>, vector<1x256xf32>
    %184 = vector.broadcast %63 : f32 to vector<1x256xf32>
    %185 = arith.mulf %184, %183 : vector<1x256xf32>
    %186 = arith.addf %182, %185 : vector<1x256xf32>
    %c1_48 = arith.constant 1 : index
    %c48_49 = arith.constant 48 : index
    %187 = vector.load %arg6[%c1_48, %c48_49] : memref<2x358xf32, #tpu.memory_space<vmem>>, vector<1x256xf32>
    %188 = vector.broadcast %70 : f32 to vector<1x256xf32>
    %189 = arith.mulf %188, %187 : vector<1x256xf32>
    %190 = arith.addf %186, %189 : vector<1x256xf32>
    %c1_50 = arith.constant 1 : index
    %c64_51 = arith.constant 64 : index
    %191 = vector.load %arg6[%c1_50, %c64_51] : memref<2x358xf32, #tpu.memory_space<vmem>>, vector<1x256xf32>
    %192 = vector.broadcast %77 : f32 to vector<1x256xf32>
    %193 = arith.mulf %192, %191 : vector<1x256xf32>
    %194 = arith.addf %190, %193 : vector<1x256xf32>
    %c1_52 = arith.constant 1 : index
    %c80_53 = arith.constant 80 : index
    %195 = vector.load %arg6[%c1_52, %c80_53] : memref<2x358xf32, #tpu.memory_space<vmem>>, vector<1x256xf32>
    %196 = vector.broadcast %84 : f32 to vector<1x256xf32>
    %197 = arith.mulf %196, %195 : vector<1x256xf32>
    %198 = arith.addf %194, %197 : vector<1x256xf32>
    %c1_54 = arith.constant 1 : index
    %c96_55 = arith.constant 96 : index
    %199 = vector.load %arg6[%c1_54, %c96_55] : memref<2x358xf32, #tpu.memory_space<vmem>>, vector<1x256xf32>
    %200 = vector.broadcast %91 : f32 to vector<1x256xf32>
    %201 = arith.mulf %200, %199 : vector<1x256xf32>
    %202 = arith.addf %198, %201 : vector<1x256xf32>
    %c0_56 = arith.constant 0 : index
    %c0_57 = arith.constant 0 : index
    %203 = vector.load %arg3[%c0_56, %c0_57] : memref<7x256xf32, #tpu.memory_space<vmem>>, vector<1x256xf32>
    %204 = arith.mulf %202, %203 : vector<1x256xf32>
    %205 = arith.addf %147, %204 : vector<1x256xf32>
    %c0_58 = arith.constant 0 : index
    %c1_59 = arith.constant 1 : index
    %206 = vector.load %arg6[%c0_58, %c1_59] : memref<2x358xf32, #tpu.memory_space<vmem>>, vector<1x256xf32>
    %207 = vector.broadcast %1 : f32 to vector<1x256xf32>
    %208 = arith.mulf %207, %206 : vector<1x256xf32>
    %c0_60 = arith.constant 0 : index
    %c17_61 = arith.constant 17 : index
    %209 = vector.load %arg6[%c0_60, %c17_61] : memref<2x358xf32, #tpu.memory_space<vmem>>, vector<1x256xf32>
    %210 = vector.broadcast %8 : f32 to vector<1x256xf32>
    %211 = arith.mulf %210, %209 : vector<1x256xf32>
    %212 = arith.addf %208, %211 : vector<1x256xf32>
    %c0_62 = arith.constant 0 : index
    %c33_63 = arith.constant 33 : index
    %213 = vector.load %arg6[%c0_62, %c33_63] : memref<2x358xf32, #tpu.memory_space<vmem>>, vector<1x256xf32>
    %214 = vector.broadcast %15 : f32 to vector<1x256xf32>
    %215 = arith.mulf %214, %213 : vector<1x256xf32>
    %216 = arith.addf %212, %215 : vector<1x256xf32>
    %c0_64 = arith.constant 0 : index
    %c49_65 = arith.constant 49 : index
    %217 = vector.load %arg6[%c0_64, %c49_65] : memref<2x358xf32, #tpu.memory_space<vmem>>, vector<1x256xf32>
    %218 = vector.broadcast %22 : f32 to vector<1x256xf32>
    %219 = arith.mulf %218, %217 : vector<1x256xf32>
    %220 = arith.addf %216, %219 : vector<1x256xf32>
    %c0_66 = arith.constant 0 : index
    %c65_67 = arith.constant 65 : index
    %221 = vector.load %arg6[%c0_66, %c65_67] : memref<2x358xf32, #tpu.memory_space<vmem>>, vector<1x256xf32>
    %222 = vector.broadcast %29 : f32 to vector<1x256xf32>
    %223 = arith.mulf %222, %221 : vector<1x256xf32>
    %224 = arith.addf %220, %223 : vector<1x256xf32>
    %c0_68 = arith.constant 0 : index
    %c81_69 = arith.constant 81 : index
    %225 = vector.load %arg6[%c0_68, %c81_69] : memref<2x358xf32, #tpu.memory_space<vmem>>, vector<1x256xf32>
    %226 = vector.broadcast %36 : f32 to vector<1x256xf32>
    %227 = arith.mulf %226, %225 : vector<1x256xf32>
    %228 = arith.addf %224, %227 : vector<1x256xf32>
    %c0_70 = arith.constant 0 : index
    %c97_71 = arith.constant 97 : index
    %229 = vector.load %arg6[%c0_70, %c97_71] : memref<2x358xf32, #tpu.memory_space<vmem>>, vector<1x256xf32>
    %230 = vector.broadcast %43 : f32 to vector<1x256xf32>
    %231 = arith.mulf %230, %229 : vector<1x256xf32>
    %232 = arith.addf %228, %231 : vector<1x256xf32>
    %c1_72 = arith.constant 1 : index
    %c1_73 = arith.constant 1 : index
    %233 = vector.load %arg6[%c1_72, %c1_73] : memref<2x358xf32, #tpu.memory_space<vmem>>, vector<1x256xf32>
    %234 = vector.broadcast %50 : f32 to vector<1x256xf32>
    %235 = arith.mulf %234, %233 : vector<1x256xf32>
    %236 = arith.addf %232, %235 : vector<1x256xf32>
    %c1_74 = arith.constant 1 : index
    %c17_75 = arith.constant 17 : index
    %237 = vector.load %arg6[%c1_74, %c17_75] : memref<2x358xf32, #tpu.memory_space<vmem>>, vector<1x256xf32>
    %238 = vector.broadcast %57 : f32 to vector<1x256xf32>
    %239 = arith.mulf %238, %237 : vector<1x256xf32>
    %240 = arith.addf %236, %239 : vector<1x256xf32>
    %c1_76 = arith.constant 1 : index
    %c33_77 = arith.constant 33 : index
    %241 = vector.load %arg6[%c1_76, %c33_77] : memref<2x358xf32, #tpu.memory_space<vmem>>, vector<1x256xf32>
    %242 = vector.broadcast %64 : f32 to vector<1x256xf32>
    %243 = arith.mulf %242, %241 : vector<1x256xf32>
    %244 = arith.addf %240, %243 : vector<1x256xf32>
    %c1_78 = arith.constant 1 : index
    %c49_79 = arith.constant 49 : index
    %245 = vector.load %arg6[%c1_78, %c49_79] : memref<2x358xf32, #tpu.memory_space<vmem>>, vector<1x256xf32>
    %246 = vector.broadcast %71 : f32 to vector<1x256xf32>
    %247 = arith.mulf %246, %245 : vector<1x256xf32>
    %248 = arith.addf %244, %247 : vector<1x256xf32>
    %c1_80 = arith.constant 1 : index
    %c65_81 = arith.constant 65 : index
    %249 = vector.load %arg6[%c1_80, %c65_81] : memref<2x358xf32, #tpu.memory_space<vmem>>, vector<1x256xf32>
    %250 = vector.broadcast %78 : f32 to vector<1x256xf32>
    %251 = arith.mulf %250, %249 : vector<1x256xf32>
    %252 = arith.addf %248, %251 : vector<1x256xf32>
    %c1_82 = arith.constant 1 : index
    %c81_83 = arith.constant 81 : index
    %253 = vector.load %arg6[%c1_82, %c81_83] : memref<2x358xf32, #tpu.memory_space<vmem>>, vector<1x256xf32>
    %254 = vector.broadcast %85 : f32 to vector<1x256xf32>
    %255 = arith.mulf %254, %253 : vector<1x256xf32>
    %256 = arith.addf %252, %255 : vector<1x256xf32>
    %c1_84 = arith.constant 1 : index
    %c97_85 = arith.constant 97 : index
    %257 = vector.load %arg6[%c1_84, %c97_85] : memref<2x358xf32, #tpu.memory_space<vmem>>, vector<1x256xf32>
    %258 = vector.broadcast %92 : f32 to vector<1x256xf32>
    %259 = arith.mulf %258, %257 : vector<1x256xf32>
    %260 = arith.addf %256, %259 : vector<1x256xf32>
    %c1_86 = arith.constant 1 : index
    %c0_87 = arith.constant 0 : index
    %261 = vector.load %arg3[%c1_86, %c0_87] : memref<7x256xf32, #tpu.memory_space<vmem>>, vector<1x256xf32>
    %262 = arith.mulf %260, %261 : vector<1x256xf32>
    %263 = arith.addf %205, %262 : vector<1x256xf32>
    %c0_88 = arith.constant 0 : index
    %c2_89 = arith.constant 2 : index
    %264 = vector.load %arg6[%c0_88, %c2_89] : memref<2x358xf32, #tpu.memory_space<vmem>>, vector<1x256xf32>
    %265 = vector.broadcast %2 : f32 to vector<1x256xf32>
    %266 = arith.mulf %265, %264 : vector<1x256xf32>
    %c0_90 = arith.constant 0 : index
    %c18_91 = arith.constant 18 : index
    %267 = vector.load %arg6[%c0_90, %c18_91] : memref<2x358xf32, #tpu.memory_space<vmem>>, vector<1x256xf32>
    %268 = vector.broadcast %9 : f32 to vector<1x256xf32>
    %269 = arith.mulf %268, %267 : vector<1x256xf32>
    %270 = arith.addf %266, %269 : vector<1x256xf32>
    %c0_92 = arith.constant 0 : index
    %c34_93 = arith.constant 34 : index
    %271 = vector.load %arg6[%c0_92, %c34_93] : memref<2x358xf32, #tpu.memory_space<vmem>>, vector<1x256xf32>
    %272 = vector.broadcast %16 : f32 to vector<1x256xf32>
    %273 = arith.mulf %272, %271 : vector<1x256xf32>
    %274 = arith.addf %270, %273 : vector<1x256xf32>
    %c0_94 = arith.constant 0 : index
    %c50_95 = arith.constant 50 : index
    %275 = vector.load %arg6[%c0_94, %c50_95] : memref<2x358xf32, #tpu.memory_space<vmem>>, vector<1x256xf32>
    %276 = vector.broadcast %23 : f32 to vector<1x256xf32>
    %277 = arith.mulf %276, %275 : vector<1x256xf32>
    %278 = arith.addf %274, %277 : vector<1x256xf32>
    %c0_96 = arith.constant 0 : index
    %c66_97 = arith.constant 66 : index
    %279 = vector.load %arg6[%c0_96, %c66_97] : memref<2x358xf32, #tpu.memory_space<vmem>>, vector<1x256xf32>
    %280 = vector.broadcast %30 : f32 to vector<1x256xf32>
    %281 = arith.mulf %280, %279 : vector<1x256xf32>
    %282 = arith.addf %278, %281 : vector<1x256xf32>
    %c0_98 = arith.constant 0 : index
    %c82_99 = arith.constant 82 : index
    %283 = vector.load %arg6[%c0_98, %c82_99] : memref<2x358xf32, #tpu.memory_space<vmem>>, vector<1x256xf32>
    %284 = vector.broadcast %37 : f32 to vector<1x256xf32>
    %285 = arith.mulf %284, %283 : vector<1x256xf32>
    %286 = arith.addf %282, %285 : vector<1x256xf32>
    %c0_100 = arith.constant 0 : index
    %c98 = arith.constant 98 : index
    %287 = vector.load %arg6[%c0_100, %c98] : memref<2x358xf32, #tpu.memory_space<vmem>>, vector<1x256xf32>
    %288 = vector.broadcast %44 : f32 to vector<1x256xf32>
    %289 = arith.mulf %288, %287 : vector<1x256xf32>
    %290 = arith.addf %286, %289 : vector<1x256xf32>
    %c1_101 = arith.constant 1 : index
    %c2_102 = arith.constant 2 : index
    %291 = vector.load %arg6[%c1_101, %c2_102] : memref<2x358xf32, #tpu.memory_space<vmem>>, vector<1x256xf32>
    %292 = vector.broadcast %51 : f32 to vector<1x256xf32>
    %293 = arith.mulf %292, %291 : vector<1x256xf32>
    %294 = arith.addf %290, %293 : vector<1x256xf32>
    %c1_103 = arith.constant 1 : index
    %c18_104 = arith.constant 18 : index
    %295 = vector.load %arg6[%c1_103, %c18_104] : memref<2x358xf32, #tpu.memory_space<vmem>>, vector<1x256xf32>
    %296 = vector.broadcast %58 : f32 to vector<1x256xf32>
    %297 = arith.mulf %296, %295 : vector<1x256xf32>
    %298 = arith.addf %294, %297 : vector<1x256xf32>
    %c1_105 = arith.constant 1 : index
    %c34_106 = arith.constant 34 : index
    %299 = vector.load %arg6[%c1_105, %c34_106] : memref<2x358xf32, #tpu.memory_space<vmem>>, vector<1x256xf32>
    %300 = vector.broadcast %65 : f32 to vector<1x256xf32>
    %301 = arith.mulf %300, %299 : vector<1x256xf32>
    %302 = arith.addf %298, %301 : vector<1x256xf32>
    %c1_107 = arith.constant 1 : index
    %c50_108 = arith.constant 50 : index
    %303 = vector.load %arg6[%c1_107, %c50_108] : memref<2x358xf32, #tpu.memory_space<vmem>>, vector<1x256xf32>
    %304 = vector.broadcast %72 : f32 to vector<1x256xf32>
    %305 = arith.mulf %304, %303 : vector<1x256xf32>
    %306 = arith.addf %302, %305 : vector<1x256xf32>
    %c1_109 = arith.constant 1 : index
    %c66_110 = arith.constant 66 : index
    %307 = vector.load %arg6[%c1_109, %c66_110] : memref<2x358xf32, #tpu.memory_space<vmem>>, vector<1x256xf32>
    %308 = vector.broadcast %79 : f32 to vector<1x256xf32>
    %309 = arith.mulf %308, %307 : vector<1x256xf32>
    %310 = arith.addf %306, %309 : vector<1x256xf32>
    %c1_111 = arith.constant 1 : index
    %c82_112 = arith.constant 82 : index
    %311 = vector.load %arg6[%c1_111, %c82_112] : memref<2x358xf32, #tpu.memory_space<vmem>>, vector<1x256xf32>
    %312 = vector.broadcast %86 : f32 to vector<1x256xf32>
    %313 = arith.mulf %312, %311 : vector<1x256xf32>
    %314 = arith.addf %310, %313 : vector<1x256xf32>
    %c1_113 = arith.constant 1 : index
    %c98_114 = arith.constant 98 : index
    %315 = vector.load %arg6[%c1_113, %c98_114] : memref<2x358xf32, #tpu.memory_space<vmem>>, vector<1x256xf32>
    %316 = vector.broadcast %93 : f32 to vector<1x256xf32>
    %317 = arith.mulf %316, %315 : vector<1x256xf32>
    %318 = arith.addf %314, %317 : vector<1x256xf32>
    %c2_115 = arith.constant 2 : index
    %c0_116 = arith.constant 0 : index
    %319 = vector.load %arg3[%c2_115, %c0_116] : memref<7x256xf32, #tpu.memory_space<vmem>>, vector<1x256xf32>
    %320 = arith.mulf %318, %319 : vector<1x256xf32>
    %321 = arith.addf %263, %320 : vector<1x256xf32>
    %c0_117 = arith.constant 0 : index
    %c3_118 = arith.constant 3 : index
    %322 = vector.load %arg6[%c0_117, %c3_118] : memref<2x358xf32, #tpu.memory_space<vmem>>, vector<1x256xf32>
    %323 = vector.broadcast %3 : f32 to vector<1x256xf32>
    %324 = arith.mulf %323, %322 : vector<1x256xf32>
    %c0_119 = arith.constant 0 : index
    %c19_120 = arith.constant 19 : index
    %325 = vector.load %arg6[%c0_119, %c19_120] : memref<2x358xf32, #tpu.memory_space<vmem>>, vector<1x256xf32>
    %326 = vector.broadcast %10 : f32 to vector<1x256xf32>
    %327 = arith.mulf %326, %325 : vector<1x256xf32>
    %328 = arith.addf %324, %327 : vector<1x256xf32>
    %c0_121 = arith.constant 0 : index
    %c35_122 = arith.constant 35 : index
    %329 = vector.load %arg6[%c0_121, %c35_122] : memref<2x358xf32, #tpu.memory_space<vmem>>, vector<1x256xf32>
    %330 = vector.broadcast %17 : f32 to vector<1x256xf32>
    %331 = arith.mulf %330, %329 : vector<1x256xf32>
    %332 = arith.addf %328, %331 : vector<1x256xf32>
    %c0_123 = arith.constant 0 : index
    %c51_124 = arith.constant 51 : index
    %333 = vector.load %arg6[%c0_123, %c51_124] : memref<2x358xf32, #tpu.memory_space<vmem>>, vector<1x256xf32>
    %334 = vector.broadcast %24 : f32 to vector<1x256xf32>
    %335 = arith.mulf %334, %333 : vector<1x256xf32>
    %336 = arith.addf %332, %335 : vector<1x256xf32>
    %c0_125 = arith.constant 0 : index
    %c67_126 = arith.constant 67 : index
    %337 = vector.load %arg6[%c0_125, %c67_126] : memref<2x358xf32, #tpu.memory_space<vmem>>, vector<1x256xf32>
    %338 = vector.broadcast %31 : f32 to vector<1x256xf32>
    %339 = arith.mulf %338, %337 : vector<1x256xf32>
    %340 = arith.addf %336, %339 : vector<1x256xf32>
    %c0_127 = arith.constant 0 : index
    %c83_128 = arith.constant 83 : index
    %341 = vector.load %arg6[%c0_127, %c83_128] : memref<2x358xf32, #tpu.memory_space<vmem>>, vector<1x256xf32>
    %342 = vector.broadcast %38 : f32 to vector<1x256xf32>
    %343 = arith.mulf %342, %341 : vector<1x256xf32>
    %344 = arith.addf %340, %343 : vector<1x256xf32>
    %c0_129 = arith.constant 0 : index
    %c99 = arith.constant 99 : index
    %345 = vector.load %arg6[%c0_129, %c99] : memref<2x358xf32, #tpu.memory_space<vmem>>, vector<1x256xf32>
    %346 = vector.broadcast %45 : f32 to vector<1x256xf32>
    %347 = arith.mulf %346, %345 : vector<1x256xf32>
    %348 = arith.addf %344, %347 : vector<1x256xf32>
    %c1_130 = arith.constant 1 : index
    %c3_131 = arith.constant 3 : index
    %349 = vector.load %arg6[%c1_130, %c3_131] : memref<2x358xf32, #tpu.memory_space<vmem>>, vector<1x256xf32>
    %350 = vector.broadcast %52 : f32 to vector<1x256xf32>
    %351 = arith.mulf %350, %349 : vector<1x256xf32>
    %352 = arith.addf %348, %351 : vector<1x256xf32>
    %c1_132 = arith.constant 1 : index
    %c19_133 = arith.constant 19 : index
    %353 = vector.load %arg6[%c1_132, %c19_133] : memref<2x358xf32, #tpu.memory_space<vmem>>, vector<1x256xf32>
    %354 = vector.broadcast %59 : f32 to vector<1x256xf32>
    %355 = arith.mulf %354, %353 : vector<1x256xf32>
    %356 = arith.addf %352, %355 : vector<1x256xf32>
    %c1_134 = arith.constant 1 : index
    %c35_135 = arith.constant 35 : index
    %357 = vector.load %arg6[%c1_134, %c35_135] : memref<2x358xf32, #tpu.memory_space<vmem>>, vector<1x256xf32>
    %358 = vector.broadcast %66 : f32 to vector<1x256xf32>
    %359 = arith.mulf %358, %357 : vector<1x256xf32>
    %360 = arith.addf %356, %359 : vector<1x256xf32>
    %c1_136 = arith.constant 1 : index
    %c51_137 = arith.constant 51 : index
    %361 = vector.load %arg6[%c1_136, %c51_137] : memref<2x358xf32, #tpu.memory_space<vmem>>, vector<1x256xf32>
    %362 = vector.broadcast %73 : f32 to vector<1x256xf32>
    %363 = arith.mulf %362, %361 : vector<1x256xf32>
    %364 = arith.addf %360, %363 : vector<1x256xf32>
    %c1_138 = arith.constant 1 : index
    %c67_139 = arith.constant 67 : index
    %365 = vector.load %arg6[%c1_138, %c67_139] : memref<2x358xf32, #tpu.memory_space<vmem>>, vector<1x256xf32>
    %366 = vector.broadcast %80 : f32 to vector<1x256xf32>
    %367 = arith.mulf %366, %365 : vector<1x256xf32>
    %368 = arith.addf %364, %367 : vector<1x256xf32>
    %c1_140 = arith.constant 1 : index
    %c83_141 = arith.constant 83 : index
    %369 = vector.load %arg6[%c1_140, %c83_141] : memref<2x358xf32, #tpu.memory_space<vmem>>, vector<1x256xf32>
    %370 = vector.broadcast %87 : f32 to vector<1x256xf32>
    %371 = arith.mulf %370, %369 : vector<1x256xf32>
    %372 = arith.addf %368, %371 : vector<1x256xf32>
    %c1_142 = arith.constant 1 : index
    %c99_143 = arith.constant 99 : index
    %373 = vector.load %arg6[%c1_142, %c99_143] : memref<2x358xf32, #tpu.memory_space<vmem>>, vector<1x256xf32>
    %374 = vector.broadcast %94 : f32 to vector<1x256xf32>
    %375 = arith.mulf %374, %373 : vector<1x256xf32>
    %376 = arith.addf %372, %375 : vector<1x256xf32>
    %c3_144 = arith.constant 3 : index
    %c0_145 = arith.constant 0 : index
    %377 = vector.load %arg3[%c3_144, %c0_145] : memref<7x256xf32, #tpu.memory_space<vmem>>, vector<1x256xf32>
    %378 = arith.mulf %376, %377 : vector<1x256xf32>
    %379 = arith.addf %321, %378 : vector<1x256xf32>
    %c0_146 = arith.constant 0 : index
    %c4_147 = arith.constant 4 : index
    %380 = vector.load %arg6[%c0_146, %c4_147] : memref<2x358xf32, #tpu.memory_space<vmem>>, vector<1x256xf32>
    %381 = vector.broadcast %4 : f32 to vector<1x256xf32>
    %382 = arith.mulf %381, %380 : vector<1x256xf32>
    %c0_148 = arith.constant 0 : index
    %c20_149 = arith.constant 20 : index
    %383 = vector.load %arg6[%c0_148, %c20_149] : memref<2x358xf32, #tpu.memory_space<vmem>>, vector<1x256xf32>
    %384 = vector.broadcast %11 : f32 to vector<1x256xf32>
    %385 = arith.mulf %384, %383 : vector<1x256xf32>
    %386 = arith.addf %382, %385 : vector<1x256xf32>
    %c0_150 = arith.constant 0 : index
    %c36_151 = arith.constant 36 : index
    %387 = vector.load %arg6[%c0_150, %c36_151] : memref<2x358xf32, #tpu.memory_space<vmem>>, vector<1x256xf32>
    %388 = vector.broadcast %18 : f32 to vector<1x256xf32>
    %389 = arith.mulf %388, %387 : vector<1x256xf32>
    %390 = arith.addf %386, %389 : vector<1x256xf32>
    %c0_152 = arith.constant 0 : index
    %c52_153 = arith.constant 52 : index
    %391 = vector.load %arg6[%c0_152, %c52_153] : memref<2x358xf32, #tpu.memory_space<vmem>>, vector<1x256xf32>
    %392 = vector.broadcast %25 : f32 to vector<1x256xf32>
    %393 = arith.mulf %392, %391 : vector<1x256xf32>
    %394 = arith.addf %390, %393 : vector<1x256xf32>
    %c0_154 = arith.constant 0 : index
    %c68_155 = arith.constant 68 : index
    %395 = vector.load %arg6[%c0_154, %c68_155] : memref<2x358xf32, #tpu.memory_space<vmem>>, vector<1x256xf32>
    %396 = vector.broadcast %32 : f32 to vector<1x256xf32>
    %397 = arith.mulf %396, %395 : vector<1x256xf32>
    %398 = arith.addf %394, %397 : vector<1x256xf32>
    %c0_156 = arith.constant 0 : index
    %c84_157 = arith.constant 84 : index
    %399 = vector.load %arg6[%c0_156, %c84_157] : memref<2x358xf32, #tpu.memory_space<vmem>>, vector<1x256xf32>
    %400 = vector.broadcast %39 : f32 to vector<1x256xf32>
    %401 = arith.mulf %400, %399 : vector<1x256xf32>
    %402 = arith.addf %398, %401 : vector<1x256xf32>
    %c0_158 = arith.constant 0 : index
    %c100 = arith.constant 100 : index
    %403 = vector.load %arg6[%c0_158, %c100] : memref<2x358xf32, #tpu.memory_space<vmem>>, vector<1x256xf32>
    %404 = vector.broadcast %46 : f32 to vector<1x256xf32>
    %405 = arith.mulf %404, %403 : vector<1x256xf32>
    %406 = arith.addf %402, %405 : vector<1x256xf32>
    %c1_159 = arith.constant 1 : index
    %c4_160 = arith.constant 4 : index
    %407 = vector.load %arg6[%c1_159, %c4_160] : memref<2x358xf32, #tpu.memory_space<vmem>>, vector<1x256xf32>
    %408 = vector.broadcast %53 : f32 to vector<1x256xf32>
    %409 = arith.mulf %408, %407 : vector<1x256xf32>
    %410 = arith.addf %406, %409 : vector<1x256xf32>
    %c1_161 = arith.constant 1 : index
    %c20_162 = arith.constant 20 : index
    %411 = vector.load %arg6[%c1_161, %c20_162] : memref<2x358xf32, #tpu.memory_space<vmem>>, vector<1x256xf32>
    %412 = vector.broadcast %60 : f32 to vector<1x256xf32>
    %413 = arith.mulf %412, %411 : vector<1x256xf32>
    %414 = arith.addf %410, %413 : vector<1x256xf32>
    %c1_163 = arith.constant 1 : index
    %c36_164 = arith.constant 36 : index
    %415 = vector.load %arg6[%c1_163, %c36_164] : memref<2x358xf32, #tpu.memory_space<vmem>>, vector<1x256xf32>
    %416 = vector.broadcast %67 : f32 to vector<1x256xf32>
    %417 = arith.mulf %416, %415 : vector<1x256xf32>
    %418 = arith.addf %414, %417 : vector<1x256xf32>
    %c1_165 = arith.constant 1 : index
    %c52_166 = arith.constant 52 : index
    %419 = vector.load %arg6[%c1_165, %c52_166] : memref<2x358xf32, #tpu.memory_space<vmem>>, vector<1x256xf32>
    %420 = vector.broadcast %74 : f32 to vector<1x256xf32>
    %421 = arith.mulf %420, %419 : vector<1x256xf32>
    %422 = arith.addf %418, %421 : vector<1x256xf32>
    %c1_167 = arith.constant 1 : index
    %c68_168 = arith.constant 68 : index
    %423 = vector.load %arg6[%c1_167, %c68_168] : memref<2x358xf32, #tpu.memory_space<vmem>>, vector<1x256xf32>
    %424 = vector.broadcast %81 : f32 to vector<1x256xf32>
    %425 = arith.mulf %424, %423 : vector<1x256xf32>
    %426 = arith.addf %422, %425 : vector<1x256xf32>
    %c1_169 = arith.constant 1 : index
    %c84_170 = arith.constant 84 : index
    %427 = vector.load %arg6[%c1_169, %c84_170] : memref<2x358xf32, #tpu.memory_space<vmem>>, vector<1x256xf32>
    %428 = vector.broadcast %88 : f32 to vector<1x256xf32>
    %429 = arith.mulf %428, %427 : vector<1x256xf32>
    %430 = arith.addf %426, %429 : vector<1x256xf32>
    %c1_171 = arith.constant 1 : index
    %c100_172 = arith.constant 100 : index
    %431 = vector.load %arg6[%c1_171, %c100_172] : memref<2x358xf32, #tpu.memory_space<vmem>>, vector<1x256xf32>
    %432 = vector.broadcast %95 : f32 to vector<1x256xf32>
    %433 = arith.mulf %432, %431 : vector<1x256xf32>
    %434 = arith.addf %430, %433 : vector<1x256xf32>
    %c4_173 = arith.constant 4 : index
    %c0_174 = arith.constant 0 : index
    %435 = vector.load %arg3[%c4_173, %c0_174] : memref<7x256xf32, #tpu.memory_space<vmem>>, vector<1x256xf32>
    %436 = arith.mulf %434, %435 : vector<1x256xf32>
    %437 = arith.addf %379, %436 : vector<1x256xf32>
    %c0_175 = arith.constant 0 : index
    %c5_176 = arith.constant 5 : index
    %438 = vector.load %arg6[%c0_175, %c5_176] : memref<2x358xf32, #tpu.memory_space<vmem>>, vector<1x256xf32>
    %439 = vector.broadcast %5 : f32 to vector<1x256xf32>
    %440 = arith.mulf %439, %438 : vector<1x256xf32>
    %c0_177 = arith.constant 0 : index
    %c21_178 = arith.constant 21 : index
    %441 = vector.load %arg6[%c0_177, %c21_178] : memref<2x358xf32, #tpu.memory_space<vmem>>, vector<1x256xf32>
    %442 = vector.broadcast %12 : f32 to vector<1x256xf32>
    %443 = arith.mulf %442, %441 : vector<1x256xf32>
    %444 = arith.addf %440, %443 : vector<1x256xf32>
    %c0_179 = arith.constant 0 : index
    %c37_180 = arith.constant 37 : index
    %445 = vector.load %arg6[%c0_179, %c37_180] : memref<2x358xf32, #tpu.memory_space<vmem>>, vector<1x256xf32>
    %446 = vector.broadcast %19 : f32 to vector<1x256xf32>
    %447 = arith.mulf %446, %445 : vector<1x256xf32>
    %448 = arith.addf %444, %447 : vector<1x256xf32>
    %c0_181 = arith.constant 0 : index
    %c53_182 = arith.constant 53 : index
    %449 = vector.load %arg6[%c0_181, %c53_182] : memref<2x358xf32, #tpu.memory_space<vmem>>, vector<1x256xf32>
    %450 = vector.broadcast %26 : f32 to vector<1x256xf32>
    %451 = arith.mulf %450, %449 : vector<1x256xf32>
    %452 = arith.addf %448, %451 : vector<1x256xf32>
    %c0_183 = arith.constant 0 : index
    %c69_184 = arith.constant 69 : index
    %453 = vector.load %arg6[%c0_183, %c69_184] : memref<2x358xf32, #tpu.memory_space<vmem>>, vector<1x256xf32>
    %454 = vector.broadcast %33 : f32 to vector<1x256xf32>
    %455 = arith.mulf %454, %453 : vector<1x256xf32>
    %456 = arith.addf %452, %455 : vector<1x256xf32>
    %c0_185 = arith.constant 0 : index
    %c85_186 = arith.constant 85 : index
    %457 = vector.load %arg6[%c0_185, %c85_186] : memref<2x358xf32, #tpu.memory_space<vmem>>, vector<1x256xf32>
    %458 = vector.broadcast %40 : f32 to vector<1x256xf32>
    %459 = arith.mulf %458, %457 : vector<1x256xf32>
    %460 = arith.addf %456, %459 : vector<1x256xf32>
    %c0_187 = arith.constant 0 : index
    %c101 = arith.constant 101 : index
    %461 = vector.load %arg6[%c0_187, %c101] : memref<2x358xf32, #tpu.memory_space<vmem>>, vector<1x256xf32>
    %462 = vector.broadcast %47 : f32 to vector<1x256xf32>
    %463 = arith.mulf %462, %461 : vector<1x256xf32>
    %464 = arith.addf %460, %463 : vector<1x256xf32>
    %c1_188 = arith.constant 1 : index
    %c5_189 = arith.constant 5 : index
    %465 = vector.load %arg6[%c1_188, %c5_189] : memref<2x358xf32, #tpu.memory_space<vmem>>, vector<1x256xf32>
    %466 = vector.broadcast %54 : f32 to vector<1x256xf32>
    %467 = arith.mulf %466, %465 : vector<1x256xf32>
    %468 = arith.addf %464, %467 : vector<1x256xf32>
    %c1_190 = arith.constant 1 : index
    %c21_191 = arith.constant 21 : index
    %469 = vector.load %arg6[%c1_190, %c21_191] : memref<2x358xf32, #tpu.memory_space<vmem>>, vector<1x256xf32>
    %470 = vector.broadcast %61 : f32 to vector<1x256xf32>
    %471 = arith.mulf %470, %469 : vector<1x256xf32>
    %472 = arith.addf %468, %471 : vector<1x256xf32>
    %c1_192 = arith.constant 1 : index
    %c37_193 = arith.constant 37 : index
    %473 = vector.load %arg6[%c1_192, %c37_193] : memref<2x358xf32, #tpu.memory_space<vmem>>, vector<1x256xf32>
    %474 = vector.broadcast %68 : f32 to vector<1x256xf32>
    %475 = arith.mulf %474, %473 : vector<1x256xf32>
    %476 = arith.addf %472, %475 : vector<1x256xf32>
    %c1_194 = arith.constant 1 : index
    %c53_195 = arith.constant 53 : index
    %477 = vector.load %arg6[%c1_194, %c53_195] : memref<2x358xf32, #tpu.memory_space<vmem>>, vector<1x256xf32>
    %478 = vector.broadcast %75 : f32 to vector<1x256xf32>
    %479 = arith.mulf %478, %477 : vector<1x256xf32>
    %480 = arith.addf %476, %479 : vector<1x256xf32>
    %c1_196 = arith.constant 1 : index
    %c69_197 = arith.constant 69 : index
    %481 = vector.load %arg6[%c1_196, %c69_197] : memref<2x358xf32, #tpu.memory_space<vmem>>, vector<1x256xf32>
    %482 = vector.broadcast %82 : f32 to vector<1x256xf32>
    %483 = arith.mulf %482, %481 : vector<1x256xf32>
    %484 = arith.addf %480, %483 : vector<1x256xf32>
    %c1_198 = arith.constant 1 : index
    %c85_199 = arith.constant 85 : index
    %485 = vector.load %arg6[%c1_198, %c85_199] : memref<2x358xf32, #tpu.memory_space<vmem>>, vector<1x256xf32>
    %486 = vector.broadcast %89 : f32 to vector<1x256xf32>
    %487 = arith.mulf %486, %485 : vector<1x256xf32>
    %488 = arith.addf %484, %487 : vector<1x256xf32>
    %c1_200 = arith.constant 1 : index
    %c101_201 = arith.constant 101 : index
    %489 = vector.load %arg6[%c1_200, %c101_201] : memref<2x358xf32, #tpu.memory_space<vmem>>, vector<1x256xf32>
    %490 = vector.broadcast %96 : f32 to vector<1x256xf32>
    %491 = arith.mulf %490, %489 : vector<1x256xf32>
    %492 = arith.addf %488, %491 : vector<1x256xf32>
    %c5_202 = arith.constant 5 : index
    %c0_203 = arith.constant 0 : index
    %493 = vector.load %arg3[%c5_202, %c0_203] : memref<7x256xf32, #tpu.memory_space<vmem>>, vector<1x256xf32>
    %494 = arith.mulf %492, %493 : vector<1x256xf32>
    %495 = arith.addf %437, %494 : vector<1x256xf32>
    %c0_204 = arith.constant 0 : index
    %c6_205 = arith.constant 6 : index
    %496 = vector.load %arg6[%c0_204, %c6_205] : memref<2x358xf32, #tpu.memory_space<vmem>>, vector<1x256xf32>
    %497 = vector.broadcast %6 : f32 to vector<1x256xf32>
    %498 = arith.mulf %497, %496 : vector<1x256xf32>
    %c0_206 = arith.constant 0 : index
    %c22_207 = arith.constant 22 : index
    %499 = vector.load %arg6[%c0_206, %c22_207] : memref<2x358xf32, #tpu.memory_space<vmem>>, vector<1x256xf32>
    %500 = vector.broadcast %13 : f32 to vector<1x256xf32>
    %501 = arith.mulf %500, %499 : vector<1x256xf32>
    %502 = arith.addf %498, %501 : vector<1x256xf32>
    %c0_208 = arith.constant 0 : index
    %c38_209 = arith.constant 38 : index
    %503 = vector.load %arg6[%c0_208, %c38_209] : memref<2x358xf32, #tpu.memory_space<vmem>>, vector<1x256xf32>
    %504 = vector.broadcast %20 : f32 to vector<1x256xf32>
    %505 = arith.mulf %504, %503 : vector<1x256xf32>
    %506 = arith.addf %502, %505 : vector<1x256xf32>
    %c0_210 = arith.constant 0 : index
    %c54_211 = arith.constant 54 : index
    %507 = vector.load %arg6[%c0_210, %c54_211] : memref<2x358xf32, #tpu.memory_space<vmem>>, vector<1x256xf32>
    %508 = vector.broadcast %27 : f32 to vector<1x256xf32>
    %509 = arith.mulf %508, %507 : vector<1x256xf32>
    %510 = arith.addf %506, %509 : vector<1x256xf32>
    %c0_212 = arith.constant 0 : index
    %c70_213 = arith.constant 70 : index
    %511 = vector.load %arg6[%c0_212, %c70_213] : memref<2x358xf32, #tpu.memory_space<vmem>>, vector<1x256xf32>
    %512 = vector.broadcast %34 : f32 to vector<1x256xf32>
    %513 = arith.mulf %512, %511 : vector<1x256xf32>
    %514 = arith.addf %510, %513 : vector<1x256xf32>
    %c0_214 = arith.constant 0 : index
    %c86_215 = arith.constant 86 : index
    %515 = vector.load %arg6[%c0_214, %c86_215] : memref<2x358xf32, #tpu.memory_space<vmem>>, vector<1x256xf32>
    %516 = vector.broadcast %41 : f32 to vector<1x256xf32>
    %517 = arith.mulf %516, %515 : vector<1x256xf32>
    %518 = arith.addf %514, %517 : vector<1x256xf32>
    %c0_216 = arith.constant 0 : index
    %c102 = arith.constant 102 : index
    %519 = vector.load %arg6[%c0_216, %c102] : memref<2x358xf32, #tpu.memory_space<vmem>>, vector<1x256xf32>
    %520 = vector.broadcast %48 : f32 to vector<1x256xf32>
    %521 = arith.mulf %520, %519 : vector<1x256xf32>
    %522 = arith.addf %518, %521 : vector<1x256xf32>
    %c1_217 = arith.constant 1 : index
    %c6_218 = arith.constant 6 : index
    %523 = vector.load %arg6[%c1_217, %c6_218] : memref<2x358xf32, #tpu.memory_space<vmem>>, vector<1x256xf32>
    %524 = vector.broadcast %55 : f32 to vector<1x256xf32>
    %525 = arith.mulf %524, %523 : vector<1x256xf32>
    %526 = arith.addf %522, %525 : vector<1x256xf32>
    %c1_219 = arith.constant 1 : index
    %c22_220 = arith.constant 22 : index
    %527 = vector.load %arg6[%c1_219, %c22_220] : memref<2x358xf32, #tpu.memory_space<vmem>>, vector<1x256xf32>
    %528 = vector.broadcast %62 : f32 to vector<1x256xf32>
    %529 = arith.mulf %528, %527 : vector<1x256xf32>
    %530 = arith.addf %526, %529 : vector<1x256xf32>
    %c1_221 = arith.constant 1 : index
    %c38_222 = arith.constant 38 : index
    %531 = vector.load %arg6[%c1_221, %c38_222] : memref<2x358xf32, #tpu.memory_space<vmem>>, vector<1x256xf32>
    %532 = vector.broadcast %69 : f32 to vector<1x256xf32>
    %533 = arith.mulf %532, %531 : vector<1x256xf32>
    %534 = arith.addf %530, %533 : vector<1x256xf32>
    %c1_223 = arith.constant 1 : index
    %c54_224 = arith.constant 54 : index
    %535 = vector.load %arg6[%c1_223, %c54_224] : memref<2x358xf32, #tpu.memory_space<vmem>>, vector<1x256xf32>
    %536 = vector.broadcast %76 : f32 to vector<1x256xf32>
    %537 = arith.mulf %536, %535 : vector<1x256xf32>
    %538 = arith.addf %534, %537 : vector<1x256xf32>
    %c1_225 = arith.constant 1 : index
    %c70_226 = arith.constant 70 : index
    %539 = vector.load %arg6[%c1_225, %c70_226] : memref<2x358xf32, #tpu.memory_space<vmem>>, vector<1x256xf32>
    %540 = vector.broadcast %83 : f32 to vector<1x256xf32>
    %541 = arith.mulf %540, %539 : vector<1x256xf32>
    %542 = arith.addf %538, %541 : vector<1x256xf32>
    %c1_227 = arith.constant 1 : index
    %c86_228 = arith.constant 86 : index
    %543 = vector.load %arg6[%c1_227, %c86_228] : memref<2x358xf32, #tpu.memory_space<vmem>>, vector<1x256xf32>
    %544 = vector.broadcast %90 : f32 to vector<1x256xf32>
    %545 = arith.mulf %544, %543 : vector<1x256xf32>
    %546 = arith.addf %542, %545 : vector<1x256xf32>
    %c1_229 = arith.constant 1 : index
    %c102_230 = arith.constant 102 : index
    %547 = vector.load %arg6[%c1_229, %c102_230] : memref<2x358xf32, #tpu.memory_space<vmem>>, vector<1x256xf32>
    %548 = vector.broadcast %97 : f32 to vector<1x256xf32>
    %549 = arith.mulf %548, %547 : vector<1x256xf32>
    %550 = arith.addf %546, %549 : vector<1x256xf32>
    %c6_231 = arith.constant 6 : index
    %c0_232 = arith.constant 0 : index
    %551 = vector.load %arg3[%c6_231, %c0_232] : memref<7x256xf32, #tpu.memory_space<vmem>>, vector<1x256xf32>
    %552 = arith.mulf %550, %551 : vector<1x256xf32>
    %553 = arith.addf %495, %552 : vector<1x256xf32>
    %554 = arith.negf %553 : vector<1x256xf32>
    %555 = math.exp %554 : vector<1x256xf32>
    %cst_233 = arith.constant 1.000000e+00 : f32
    %556 = vector.broadcast %cst_233 : f32 to vector<1x256xf32>
    %557 = arith.addf %556, %555 : vector<1x256xf32>
    %558 = arith.divf %556, %557 : vector<1x256xf32>
    %559 = vector.shape_cast %558 : vector<1x256xf32> to vector<1x256xf32>
    %560 = vector.broadcast %559 : vector<1x256xf32> to vector<8x256xf32>
    %c0_i32_234 = arith.constant 0 : i32
    %c8_i32_235 = arith.constant 8 : i32
    %561 = arith.muli %c0_i32_234, %c8_i32_235 : i32
    %562 = tpu.assume_multiple %561, 8 : i32
    %c0_236 = arith.constant 0 : index
    %563 = arith.index_cast %562 : i32 to index
    %c0_237 = arith.constant 0 : index
    %564 = vector.load %arg4[%c0_236, %563, %c0_237] : memref<2x36x256xf32, #tpu.memory_space<vmem>>, vector<1x8x256xf32>
    %565 = vector.shape_cast %564 : vector<1x8x256xf32> to vector<8x256xf32>
    %566 = arith.mulf %565, %560 : vector<8x256xf32>
    %c0_238 = arith.constant 0 : index
    %567 = arith.index_cast %562 : i32 to index
    %c0_239 = arith.constant 0 : index
    %568 = vector.load %arg5[%c0_238, %567, %c0_239] : memref<2x36x256xf32, #tpu.memory_space<vmem>>, vector<1x8x256xf32>
    %569 = vector.shape_cast %568 : vector<1x8x256xf32> to vector<8x256xf32>
    %570 = vector.shape_cast %566 : vector<8x256xf32> to vector<1x8x256xf32>
    tpu.vector_store %arg5[%c0_238, %567, %c0_239], %570 {strides = array<i32>} : memref<2x36x256xf32, #tpu.memory_space<vmem>>, vector<1x8x256xf32>,
    %c1_i32_240 = arith.constant 1 : i32
    %c8_i32_241 = arith.constant 8 : i32
    %571 = arith.muli %c1_i32_240, %c8_i32_241 : i32
    %572 = tpu.assume_multiple %571, 8 : i32
    %c0_242 = arith.constant 0 : index
    %573 = arith.index_cast %572 : i32 to index
    %c0_243 = arith.constant 0 : index
    %574 = vector.load %arg4[%c0_242, %573, %c0_243] : memref<2x36x256xf32, #tpu.memory_space<vmem>>, vector<1x8x256xf32>
    %575 = vector.shape_cast %574 : vector<1x8x256xf32> to vector<8x256xf32>
    %576 = arith.mulf %575, %560 : vector<8x256xf32>
    %c0_244 = arith.constant 0 : index
    %577 = arith.index_cast %572 : i32 to index
    %c0_245 = arith.constant 0 : index
    %578 = vector.load %arg5[%c0_244, %577, %c0_245] : memref<2x36x256xf32, #tpu.memory_space<vmem>>, vector<1x8x256xf32>
    %579 = vector.shape_cast %578 : vector<1x8x256xf32> to vector<8x256xf32>
    %580 = vector.shape_cast %576 : vector<8x256xf32> to vector<1x8x256xf32>
    tpu.vector_store %arg5[%c0_244, %577, %c0_245], %580 {strides = array<i32>} : memref<2x36x256xf32, #tpu.memory_space<vmem>>, vector<1x8x256xf32>,
    %c2_i32_246 = arith.constant 2 : i32
    %c8_i32_247 = arith.constant 8 : i32
    %581 = arith.muli %c2_i32_246, %c8_i32_247 : i32
    %582 = tpu.assume_multiple %581, 8 : i32
    %c0_248 = arith.constant 0 : index
    %583 = arith.index_cast %582 : i32 to index
    %c0_249 = arith.constant 0 : index
    %584 = vector.load %arg4[%c0_248, %583, %c0_249] : memref<2x36x256xf32, #tpu.memory_space<vmem>>, vector<1x8x256xf32>
    %585 = vector.shape_cast %584 : vector<1x8x256xf32> to vector<8x256xf32>
    %586 = arith.mulf %585, %560 : vector<8x256xf32>
    %c0_250 = arith.constant 0 : index
    %587 = arith.index_cast %582 : i32 to index
    %c0_251 = arith.constant 0 : index
    %588 = vector.load %arg5[%c0_250, %587, %c0_251] : memref<2x36x256xf32, #tpu.memory_space<vmem>>, vector<1x8x256xf32>
    %589 = vector.shape_cast %588 : vector<1x8x256xf32> to vector<8x256xf32>
    %590 = vector.shape_cast %586 : vector<8x256xf32> to vector<1x8x256xf32>
    tpu.vector_store %arg5[%c0_250, %587, %c0_251], %590 {strides = array<i32>} : memref<2x36x256xf32, #tpu.memory_space<vmem>>, vector<1x8x256xf32>,
    %c3_i32_252 = arith.constant 3 : i32
    %c8_i32_253 = arith.constant 8 : i32
    %591 = arith.muli %c3_i32_252, %c8_i32_253 : i32
    %592 = tpu.assume_multiple %591, 8 : i32
    %c0_254 = arith.constant 0 : index
    %593 = arith.index_cast %592 : i32 to index
    %c0_255 = arith.constant 0 : index
    %594 = vector.load %arg4[%c0_254, %593, %c0_255] : memref<2x36x256xf32, #tpu.memory_space<vmem>>, vector<1x8x256xf32>
    %595 = vector.shape_cast %594 : vector<1x8x256xf32> to vector<8x256xf32>
    %596 = arith.mulf %595, %560 : vector<8x256xf32>
    %c0_256 = arith.constant 0 : index
    %597 = arith.index_cast %592 : i32 to index
    %c0_257 = arith.constant 0 : index
    %598 = vector.load %arg5[%c0_256, %597, %c0_257] : memref<2x36x256xf32, #tpu.memory_space<vmem>>, vector<1x8x256xf32>
    %599 = vector.shape_cast %598 : vector<1x8x256xf32> to vector<8x256xf32>
    %600 = vector.shape_cast %596 : vector<8x256xf32> to vector<1x8x256xf32>
    tpu.vector_store %arg5[%c0_256, %597, %c0_257], %600 {strides = array<i32>} : memref<2x36x256xf32, #tpu.memory_space<vmem>>, vector<1x8x256xf32>,
    %c4_i32_258 = arith.constant 4 : i32
    %c0_259 = arith.constant 0 : index
    %c32_260 = arith.constant 32 : index
    %c0_261 = arith.constant 0 : index
    %601 = vector.load %arg4[%c0_259, %c32_260, %c0_261] : memref<2x36x256xf32, #tpu.memory_space<vmem>>, vector<1x4x256xf32>
    %602 = vector.shape_cast %601 : vector<1x4x256xf32> to vector<4x256xf32>
    %603 = vector.broadcast %558 : vector<1x256xf32> to vector<4x256xf32>
    %604 = arith.mulf %602, %603 : vector<4x256xf32>
    %c0_262 = arith.constant 0 : index
    %c32_263 = arith.constant 32 : index
    %c0_264 = arith.constant 0 : index
    %605 = vector.load %arg5[%c0_262, %c32_263, %c0_264] : memref<2x36x256xf32, #tpu.memory_space<vmem>>, vector<1x4x256xf32>
    %606 = vector.shape_cast %605 : vector<1x4x256xf32> to vector<4x256xf32>
    %607 = vector.shape_cast %604 : vector<4x256xf32> to vector<1x4x256xf32>
    tpu.vector_store %arg5[%c0_262, %c32_263, %c0_264], %607 {strides = array<i32>} : memref<2x36x256xf32, #tpu.memory_space<vmem>>, vector<1x4x256xf32>,
    %cst_265 = arith.constant 0xFF800000 : f32
    %608 = vector.broadcast %cst_265 : f32 to vector<8x256xf32>
    %cst_266 = arith.constant 0.000000e+00 : f32
    %609 = vector.broadcast %cst_266 : f32 to vector<8x256xf32>
    %c0_i32_267 = arith.constant 0 : i32
    %c8_i32_268 = arith.constant 8 : i32
    %610 = arith.muli %c0_i32_267, %c8_i32_268 : i32
    %611 = tpu.assume_multiple %610, 8 : i32
    %c1_269 = arith.constant 1 : index
    %612 = arith.index_cast %611 : i32 to index
    %c0_270 = arith.constant 0 : index
    %613 = vector.load %arg4[%c1_269, %612, %c0_270] : memref<2x36x256xf32, #tpu.memory_space<vmem>>, vector<1x8x256xf32>
    %614 = vector.shape_cast %613 : vector<1x8x256xf32> to vector<8x256xf32>
    %615 = arith.maximumf %608, %614 : vector<8x256xf32>
    %616 = arith.addf %609, %614 : vector<8x256xf32>
    %c1_i32_271 = arith.constant 1 : i32
    %c8_i32_272 = arith.constant 8 : i32
    %617 = arith.muli %c1_i32_271, %c8_i32_272 : i32
    %618 = tpu.assume_multiple %617, 8 : i32
    %c1_273 = arith.constant 1 : index
    %619 = arith.index_cast %618 : i32 to index
    %c0_274 = arith.constant 0 : index
    %620 = vector.load %arg4[%c1_273, %619, %c0_274] : memref<2x36x256xf32, #tpu.memory_space<vmem>>, vector<1x8x256xf32>
    %621 = vector.shape_cast %620 : vector<1x8x256xf32> to vector<8x256xf32>
    %622 = arith.maximumf %615, %621 : vector<8x256xf32>
    %623 = arith.addf %616, %621 : vector<8x256xf32>
    %c2_i32_275 = arith.constant 2 : i32
    %c8_i32_276 = arith.constant 8 : i32
    %624 = arith.muli %c2_i32_275, %c8_i32_276 : i32
    %625 = tpu.assume_multiple %624, 8 : i32
    %c1_277 = arith.constant 1 : index
    %626 = arith.index_cast %625 : i32 to index
    %c0_278 = arith.constant 0 : index
    %627 = vector.load %arg4[%c1_277, %626, %c0_278] : memref<2x36x256xf32, #tpu.memory_space<vmem>>, vector<1x8x256xf32>
    %628 = vector.shape_cast %627 : vector<1x8x256xf32> to vector<8x256xf32>
    %629 = arith.maximumf %622, %628 : vector<8x256xf32>
    %630 = arith.addf %623, %628 : vector<8x256xf32>
    %c3_i32_279 = arith.constant 3 : i32
    %c8_i32_280 = arith.constant 8 : i32
    %631 = arith.muli %c3_i32_279, %c8_i32_280 : i32
    %632 = tpu.assume_multiple %631, 8 : i32
    %c1_281 = arith.constant 1 : index
    %633 = arith.index_cast %632 : i32 to index
    %c0_282 = arith.constant 0 : index
    %634 = vector.load %arg4[%c1_281, %633, %c0_282] : memref<2x36x256xf32, #tpu.memory_space<vmem>>, vector<1x8x256xf32>
    %635 = vector.shape_cast %634 : vector<1x8x256xf32> to vector<8x256xf32>
    %636 = arith.maximumf %629, %635 : vector<8x256xf32>
    %637 = arith.addf %630, %635 : vector<8x256xf32>
    %c4_i32_283 = arith.constant 4 : i32
    %cst_284 = arith.constant dense<0xFF800000> : vector<256xf32>
    %638 = vector.multi_reduction <maximumf>, %636, %cst_284 [0] : vector<8x256xf32> to vector<256xf32>
    %639 = vector.shape_cast %638 : vector<256xf32> to vector<1x256xf32>
    %cst_285 = arith.constant dense<0.000000e+00> : vector<256xf32>
    %640 = vector.multi_reduction <add>, %637, %cst_285 [0] : vector<8x256xf32> to vector<256xf32>
    %641 = vector.shape_cast %640 : vector<256xf32> to vector<1x256xf32>
    %c1_286 = arith.constant 1 : index
    %c32_287 = arith.constant 32 : index
    %c0_288 = arith.constant 0 : index
    %642 = vector.load %arg4[%c1_286, %c32_287, %c0_288] : memref<2x36x256xf32, #tpu.memory_space<vmem>>, vector<1x4x256xf32>
    %643 = vector.shape_cast %642 : vector<1x4x256xf32> to vector<4x256xf32>
    %cst_289 = arith.constant dense<0xFF800000> : vector<256xf32>
    %644 = vector.multi_reduction <maximumf>, %643, %cst_289 [0] : vector<4x256xf32> to vector<256xf32>
    %645 = vector.shape_cast %644 : vector<256xf32> to vector<1x256xf32>
    %646 = arith.maximumf %639, %645 : vector<1x256xf32>
    %cst_290 = arith.constant dense<0.000000e+00> : vector<256xf32>
    %647 = vector.multi_reduction <add>, %643, %cst_290 [0] : vector<4x256xf32> to vector<256xf32>
    %648 = vector.shape_cast %647 : vector<256xf32> to vector<1x256xf32>
    %649 = arith.addf %641, %648 : vector<1x256xf32>
    %cst_291 = arith.constant 0.027777778 : f32
    %650 = vector.broadcast %cst_291 : f32 to vector<1x256xf32>
    %651 = arith.mulf %649, %650 : vector<1x256xf32>
    %c0_292 = arith.constant 0 : index
    %c51_293 = arith.constant 51 : index
    %652 = vector.load %arg6[%c0_292, %c51_293] : memref<2x358xf32, #tpu.memory_space<vmem>>, vector<1x256xf32>
    tpu.vector_store %arg6[%c0_292, %c51_293], %646 {strides = array<i32>} : memref<2x358xf32, #tpu.memory_space<vmem>>, vector<1x256xf32>,
    %c1_294 = arith.constant 1 : index
    %c51_295 = arith.constant 51 : index
    %653 = vector.load %arg6[%c1_294, %c51_295] : memref<2x358xf32, #tpu.memory_space<vmem>>, vector<1x256xf32>
    tpu.vector_store %arg6[%c1_294, %c51_295], %651 {strides = array<i32>} : memref<2x358xf32, #tpu.memory_space<vmem>>, vector<1x256xf32>,
    %654 = vector.broadcast %98 : f32 to vector<1x256xf32>
    %c0_296 = arith.constant 0 : index
    %c0_297 = arith.constant 0 : index
    %655 = vector.load %arg6[%c0_296, %c0_297] : memref<2x358xf32, #tpu.memory_space<vmem>>, vector<1x256xf32>
    %656 = vector.broadcast %0 : f32 to vector<1x256xf32>
    %657 = arith.mulf %656, %655 : vector<1x256xf32>
    %c0_298 = arith.constant 0 : index
    %c16_299 = arith.constant 16 : index
    %658 = vector.load %arg6[%c0_298, %c16_299] : memref<2x358xf32, #tpu.memory_space<vmem>>, vector<1x256xf32>
    %659 = vector.broadcast %7 : f32 to vector<1x256xf32>
    %660 = arith.mulf %659, %658 : vector<1x256xf32>
    %661 = arith.addf %657, %660 : vector<1x256xf32>
    %c0_300 = arith.constant 0 : index
    %c32_301 = arith.constant 32 : index
    %662 = vector.load %arg6[%c0_300, %c32_301] : memref<2x358xf32, #tpu.memory_space<vmem>>, vector<1x256xf32>
    %663 = vector.broadcast %14 : f32 to vector<1x256xf32>
    %664 = arith.mulf %663, %662 : vector<1x256xf32>
    %665 = arith.addf %661, %664 : vector<1x256xf32>
    %c0_302 = arith.constant 0 : index
    %c48_303 = arith.constant 48 : index
    %666 = vector.load %arg6[%c0_302, %c48_303] : memref<2x358xf32, #tpu.memory_space<vmem>>, vector<1x256xf32>
    %667 = vector.broadcast %21 : f32 to vector<1x256xf32>
    %668 = arith.mulf %667, %666 : vector<1x256xf32>
    %669 = arith.addf %665, %668 : vector<1x256xf32>
    %c0_304 = arith.constant 0 : index
    %c64_305 = arith.constant 64 : index
    %670 = vector.load %arg6[%c0_304, %c64_305] : memref<2x358xf32, #tpu.memory_space<vmem>>, vector<1x256xf32>
    %671 = vector.broadcast %28 : f32 to vector<1x256xf32>
    %672 = arith.mulf %671, %670 : vector<1x256xf32>
    %673 = arith.addf %669, %672 : vector<1x256xf32>
    %c0_306 = arith.constant 0 : index
    %c80_307 = arith.constant 80 : index
    %674 = vector.load %arg6[%c0_306, %c80_307] : memref<2x358xf32, #tpu.memory_space<vmem>>, vector<1x256xf32>
    %675 = vector.broadcast %35 : f32 to vector<1x256xf32>
    %676 = arith.mulf %675, %674 : vector<1x256xf32>
    %677 = arith.addf %673, %676 : vector<1x256xf32>
    %c0_308 = arith.constant 0 : index
    %c96_309 = arith.constant 96 : index
    %678 = vector.load %arg6[%c0_308, %c96_309] : memref<2x358xf32, #tpu.memory_space<vmem>>, vector<1x256xf32>
    %679 = vector.broadcast %42 : f32 to vector<1x256xf32>
    %680 = arith.mulf %679, %678 : vector<1x256xf32>
    %681 = arith.addf %677, %680 : vector<1x256xf32>
    %c1_310 = arith.constant 1 : index
    %c0_311 = arith.constant 0 : index
    %682 = vector.load %arg6[%c1_310, %c0_311] : memref<2x358xf32, #tpu.memory_space<vmem>>, vector<1x256xf32>
    %683 = vector.broadcast %49 : f32 to vector<1x256xf32>
    %684 = arith.mulf %683, %682 : vector<1x256xf32>
    %685 = arith.addf %681, %684 : vector<1x256xf32>
    %c1_312 = arith.constant 1 : index
    %c16_313 = arith.constant 16 : index
    %686 = vector.load %arg6[%c1_312, %c16_313] : memref<2x358xf32, #tpu.memory_space<vmem>>, vector<1x256xf32>
    %687 = vector.broadcast %56 : f32 to vector<1x256xf32>
    %688 = arith.mulf %687, %686 : vector<1x256xf32>
    %689 = arith.addf %685, %688 : vector<1x256xf32>
    %c1_314 = arith.constant 1 : index
    %c32_315 = arith.constant 32 : index
    %690 = vector.load %arg6[%c1_314, %c32_315] : memref<2x358xf32, #tpu.memory_space<vmem>>, vector<1x256xf32>
    %691 = vector.broadcast %63 : f32 to vector<1x256xf32>
    %692 = arith.mulf %691, %690 : vector<1x256xf32>
    %693 = arith.addf %689, %692 : vector<1x256xf32>
    %c1_316 = arith.constant 1 : index
    %c48_317 = arith.constant 48 : index
    %694 = vector.load %arg6[%c1_316, %c48_317] : memref<2x358xf32, #tpu.memory_space<vmem>>, vector<1x256xf32>
    %695 = vector.broadcast %70 : f32 to vector<1x256xf32>
    %696 = arith.mulf %695, %694 : vector<1x256xf32>
    %697 = arith.addf %693, %696 : vector<1x256xf32>
    %c1_318 = arith.constant 1 : index
    %c64_319 = arith.constant 64 : index
    %698 = vector.load %arg6[%c1_318, %c64_319] : memref<2x358xf32, #tpu.memory_space<vmem>>, vector<1x256xf32>
    %699 = vector.broadcast %77 : f32 to vector<1x256xf32>
    %700 = arith.mulf %699, %698 : vector<1x256xf32>
    %701 = arith.addf %697, %700 : vector<1x256xf32>
    %c1_320 = arith.constant 1 : index
    %c80_321 = arith.constant 80 : index
    %702 = vector.load %arg6[%c1_320, %c80_321] : memref<2x358xf32, #tpu.memory_space<vmem>>, vector<1x256xf32>
    %703 = vector.broadcast %84 : f32 to vector<1x256xf32>
    %704 = arith.mulf %703, %702 : vector<1x256xf32>
    %705 = arith.addf %701, %704 : vector<1x256xf32>
    %c1_322 = arith.constant 1 : index
    %c96_323 = arith.constant 96 : index
    %706 = vector.load %arg6[%c1_322, %c96_323] : memref<2x358xf32, #tpu.memory_space<vmem>>, vector<1x256xf32>
    %707 = vector.broadcast %91 : f32 to vector<1x256xf32>
    %708 = arith.mulf %707, %706 : vector<1x256xf32>
    %709 = arith.addf %705, %708 : vector<1x256xf32>
    %c0_324 = arith.constant 0 : index
    %c0_325 = arith.constant 0 : index
    %710 = vector.load %arg3[%c0_324, %c0_325] : memref<7x256xf32, #tpu.memory_space<vmem>>, vector<1x256xf32>
    %711 = arith.mulf %709, %710 : vector<1x256xf32>
    %712 = arith.addf %654, %711 : vector<1x256xf32>
    %c0_326 = arith.constant 0 : index
    %c1_327 = arith.constant 1 : index
    %713 = vector.load %arg6[%c0_326, %c1_327] : memref<2x358xf32, #tpu.memory_space<vmem>>, vector<1x256xf32>
    %714 = vector.broadcast %1 : f32 to vector<1x256xf32>
    %715 = arith.mulf %714, %713 : vector<1x256xf32>
    %c0_328 = arith.constant 0 : index
    %c17_329 = arith.constant 17 : index
    %716 = vector.load %arg6[%c0_328, %c17_329] : memref<2x358xf32, #tpu.memory_space<vmem>>, vector<1x256xf32>
    %717 = vector.broadcast %8 : f32 to vector<1x256xf32>
    %718 = arith.mulf %717, %716 : vector<1x256xf32>
    %719 = arith.addf %715, %718 : vector<1x256xf32>
    %c0_330 = arith.constant 0 : index
    %c33_331 = arith.constant 33 : index
    %720 = vector.load %arg6[%c0_330, %c33_331] : memref<2x358xf32, #tpu.memory_space<vmem>>, vector<1x256xf32>
    %721 = vector.broadcast %15 : f32 to vector<1x256xf32>
    %722 = arith.mulf %721, %720 : vector<1x256xf32>
    %723 = arith.addf %719, %722 : vector<1x256xf32>
    %c0_332 = arith.constant 0 : index
    %c49_333 = arith.constant 49 : index
    %724 = vector.load %arg6[%c0_332, %c49_333] : memref<2x358xf32, #tpu.memory_space<vmem>>, vector<1x256xf32>
    %725 = vector.broadcast %22 : f32 to vector<1x256xf32>
    %726 = arith.mulf %725, %724 : vector<1x256xf32>
    %727 = arith.addf %723, %726 : vector<1x256xf32>
    %c0_334 = arith.constant 0 : index
    %c65_335 = arith.constant 65 : index
    %728 = vector.load %arg6[%c0_334, %c65_335] : memref<2x358xf32, #tpu.memory_space<vmem>>, vector<1x256xf32>
    %729 = vector.broadcast %29 : f32 to vector<1x256xf32>
    %730 = arith.mulf %729, %728 : vector<1x256xf32>
    %731 = arith.addf %727, %730 : vector<1x256xf32>
    %c0_336 = arith.constant 0 : index
    %c81_337 = arith.constant 81 : index
    %732 = vector.load %arg6[%c0_336, %c81_337] : memref<2x358xf32, #tpu.memory_space<vmem>>, vector<1x256xf32>
    %733 = vector.broadcast %36 : f32 to vector<1x256xf32>
    %734 = arith.mulf %733, %732 : vector<1x256xf32>
    %735 = arith.addf %731, %734 : vector<1x256xf32>
    %c0_338 = arith.constant 0 : index
    %c97_339 = arith.constant 97 : index
    %736 = vector.load %arg6[%c0_338, %c97_339] : memref<2x358xf32, #tpu.memory_space<vmem>>, vector<1x256xf32>
    %737 = vector.broadcast %43 : f32 to vector<1x256xf32>
    %738 = arith.mulf %737, %736 : vector<1x256xf32>
    %739 = arith.addf %735, %738 : vector<1x256xf32>
    %c1_340 = arith.constant 1 : index
    %c1_341 = arith.constant 1 : index
    %740 = vector.load %arg6[%c1_340, %c1_341] : memref<2x358xf32, #tpu.memory_space<vmem>>, vector<1x256xf32>
    %741 = vector.broadcast %50 : f32 to vector<1x256xf32>
    %742 = arith.mulf %741, %740 : vector<1x256xf32>
    %743 = arith.addf %739, %742 : vector<1x256xf32>
    %c1_342 = arith.constant 1 : index
    %c17_343 = arith.constant 17 : index
    %744 = vector.load %arg6[%c1_342, %c17_343] : memref<2x358xf32, #tpu.memory_space<vmem>>, vector<1x256xf32>
    %745 = vector.broadcast %57 : f32 to vector<1x256xf32>
    %746 = arith.mulf %745, %744 : vector<1x256xf32>
    %747 = arith.addf %743, %746 : vector<1x256xf32>
    %c1_344 = arith.constant 1 : index
    %c33_345 = arith.constant 33 : index
    %748 = vector.load %arg6[%c1_344, %c33_345] : memref<2x358xf32, #tpu.memory_space<vmem>>, vector<1x256xf32>
    %749 = vector.broadcast %64 : f32 to vector<1x256xf32>
    %750 = arith.mulf %749, %748 : vector<1x256xf32>
    %751 = arith.addf %747, %750 : vector<1x256xf32>
    %c1_346 = arith.constant 1 : index
    %c49_347 = arith.constant 49 : index
    %752 = vector.load %arg6[%c1_346, %c49_347] : memref<2x358xf32, #tpu.memory_space<vmem>>, vector<1x256xf32>
    %753 = vector.broadcast %71 : f32 to vector<1x256xf32>
    %754 = arith.mulf %753, %752 : vector<1x256xf32>
    %755 = arith.addf %751, %754 : vector<1x256xf32>
    %c1_348 = arith.constant 1 : index
    %c65_349 = arith.constant 65 : index
    %756 = vector.load %arg6[%c1_348, %c65_349] : memref<2x358xf32, #tpu.memory_space<vmem>>, vector<1x256xf32>
    %757 = vector.broadcast %78 : f32 to vector<1x256xf32>
    %758 = arith.mulf %757, %756 : vector<1x256xf32>
    %759 = arith.addf %755, %758 : vector<1x256xf32>
    %c1_350 = arith.constant 1 : index
    %c81_351 = arith.constant 81 : index
    %760 = vector.load %arg6[%c1_350, %c81_351] : memref<2x358xf32, #tpu.memory_space<vmem>>, vector<1x256xf32>
    %761 = vector.broadcast %85 : f32 to vector<1x256xf32>
    %762 = arith.mulf %761, %760 : vector<1x256xf32>
    %763 = arith.addf %759, %762 : vector<1x256xf32>
    %c1_352 = arith.constant 1 : index
    %c97_353 = arith.constant 97 : index
    %764 = vector.load %arg6[%c1_352, %c97_353] : memref<2x358xf32, #tpu.memory_space<vmem>>, vector<1x256xf32>
    %765 = vector.broadcast %92 : f32 to vector<1x256xf32>
    %766 = arith.mulf %765, %764 : vector<1x256xf32>
    %767 = arith.addf %763, %766 : vector<1x256xf32>
    %c1_354 = arith.constant 1 : index
    %c0_355 = arith.constant 0 : index
    %768 = vector.load %arg3[%c1_354, %c0_355] : memref<7x256xf32, #tpu.memory_space<vmem>>, vector<1x256xf32>
    %769 = arith.mulf %767, %768 : vector<1x256xf32>
    %770 = arith.addf %712, %769 : vector<1x256xf32>
    %c0_356 = arith.constant 0 : index
    %c2_357 = arith.constant 2 : index
    %771 = vector.load %arg6[%c0_356, %c2_357] : memref<2x358xf32, #tpu.memory_space<vmem>>, vector<1x256xf32>
    %772 = vector.broadcast %2 : f32 to vector<1x256xf32>
    %773 = arith.mulf %772, %771 : vector<1x256xf32>
    %c0_358 = arith.constant 0 : index
    %c18_359 = arith.constant 18 : index
    %774 = vector.load %arg6[%c0_358, %c18_359] : memref<2x358xf32, #tpu.memory_space<vmem>>, vector<1x256xf32>
    %775 = vector.broadcast %9 : f32 to vector<1x256xf32>
    %776 = arith.mulf %775, %774 : vector<1x256xf32>
    %777 = arith.addf %773, %776 : vector<1x256xf32>
    %c0_360 = arith.constant 0 : index
    %c34_361 = arith.constant 34 : index
    %778 = vector.load %arg6[%c0_360, %c34_361] : memref<2x358xf32, #tpu.memory_space<vmem>>, vector<1x256xf32>
    %779 = vector.broadcast %16 : f32 to vector<1x256xf32>
    %780 = arith.mulf %779, %778 : vector<1x256xf32>
    %781 = arith.addf %777, %780 : vector<1x256xf32>
    %c0_362 = arith.constant 0 : index
    %c50_363 = arith.constant 50 : index
    %782 = vector.load %arg6[%c0_362, %c50_363] : memref<2x358xf32, #tpu.memory_space<vmem>>, vector<1x256xf32>
    %783 = vector.broadcast %23 : f32 to vector<1x256xf32>
    %784 = arith.mulf %783, %782 : vector<1x256xf32>
    %785 = arith.addf %781, %784 : vector<1x256xf32>
    %c0_364 = arith.constant 0 : index
    %c66_365 = arith.constant 66 : index
    %786 = vector.load %arg6[%c0_364, %c66_365] : memref<2x358xf32, #tpu.memory_space<vmem>>, vector<1x256xf32>
    %787 = vector.broadcast %30 : f32 to vector<1x256xf32>
    %788 = arith.mulf %787, %786 : vector<1x256xf32>
    %789 = arith.addf %785, %788 : vector<1x256xf32>
    %c0_366 = arith.constant 0 : index
    %c82_367 = arith.constant 82 : index
    %790 = vector.load %arg6[%c0_366, %c82_367] : memref<2x358xf32, #tpu.memory_space<vmem>>, vector<1x256xf32>
    %791 = vector.broadcast %37 : f32 to vector<1x256xf32>
    %792 = arith.mulf %791, %790 : vector<1x256xf32>
    %793 = arith.addf %789, %792 : vector<1x256xf32>
    %c0_368 = arith.constant 0 : index
    %c98_369 = arith.constant 98 : index
    %794 = vector.load %arg6[%c0_368, %c98_369] : memref<2x358xf32, #tpu.memory_space<vmem>>, vector<1x256xf32>
    %795 = vector.broadcast %44 : f32 to vector<1x256xf32>
    %796 = arith.mulf %795, %794 : vector<1x256xf32>
    %797 = arith.addf %793, %796 : vector<1x256xf32>
    %c1_370 = arith.constant 1 : index
    %c2_371 = arith.constant 2 : index
    %798 = vector.load %arg6[%c1_370, %c2_371] : memref<2x358xf32, #tpu.memory_space<vmem>>, vector<1x256xf32>
    %799 = vector.broadcast %51 : f32 to vector<1x256xf32>
    %800 = arith.mulf %799, %798 : vector<1x256xf32>
    %801 = arith.addf %797, %800 : vector<1x256xf32>
    %c1_372 = arith.constant 1 : index
    %c18_373 = arith.constant 18 : index
    %802 = vector.load %arg6[%c1_372, %c18_373] : memref<2x358xf32, #tpu.memory_space<vmem>>, vector<1x256xf32>
    %803 = vector.broadcast %58 : f32 to vector<1x256xf32>
    %804 = arith.mulf %803, %802 : vector<1x256xf32>
    %805 = arith.addf %801, %804 : vector<1x256xf32>
    %c1_374 = arith.constant 1 : index
    %c34_375 = arith.constant 34 : index
    %806 = vector.load %arg6[%c1_374, %c34_375] : memref<2x358xf32, #tpu.memory_space<vmem>>, vector<1x256xf32>
    %807 = vector.broadcast %65 : f32 to vector<1x256xf32>
    %808 = arith.mulf %807, %806 : vector<1x256xf32>
    %809 = arith.addf %805, %808 : vector<1x256xf32>
    %c1_376 = arith.constant 1 : index
    %c50_377 = arith.constant 50 : index
    %810 = vector.load %arg6[%c1_376, %c50_377] : memref<2x358xf32, #tpu.memory_space<vmem>>, vector<1x256xf32>
    %811 = vector.broadcast %72 : f32 to vector<1x256xf32>
    %812 = arith.mulf %811, %810 : vector<1x256xf32>
    %813 = arith.addf %809, %812 : vector<1x256xf32>
    %c1_378 = arith.constant 1 : index
    %c66_379 = arith.constant 66 : index
    %814 = vector.load %arg6[%c1_378, %c66_379] : memref<2x358xf32, #tpu.memory_space<vmem>>, vector<1x256xf32>
    %815 = vector.broadcast %79 : f32 to vector<1x256xf32>
    %816 = arith.mulf %815, %814 : vector<1x256xf32>
    %817 = arith.addf %813, %816 : vector<1x256xf32>
    %c1_380 = arith.constant 1 : index
    %c82_381 = arith.constant 82 : index
    %818 = vector.load %arg6[%c1_380, %c82_381] : memref<2x358xf32, #tpu.memory_space<vmem>>, vector<1x256xf32>
    %819 = vector.broadcast %86 : f32 to vector<1x256xf32>
    %820 = arith.mulf %819, %818 : vector<1x256xf32>
    %821 = arith.addf %817, %820 : vector<1x256xf32>
    %c1_382 = arith.constant 1 : index
    %c98_383 = arith.constant 98 : index
    %822 = vector.load %arg6[%c1_382, %c98_383] : memref<2x358xf32, #tpu.memory_space<vmem>>, vector<1x256xf32>
    %823 = vector.broadcast %93 : f32 to vector<1x256xf32>
    %824 = arith.mulf %823, %822 : vector<1x256xf32>
    %825 = arith.addf %821, %824 : vector<1x256xf32>
    %c2_384 = arith.constant 2 : index
    %c0_385 = arith.constant 0 : index
    %826 = vector.load %arg3[%c2_384, %c0_385] : memref<7x256xf32, #tpu.memory_space<vmem>>, vector<1x256xf32>
    %827 = arith.mulf %825, %826 : vector<1x256xf32>
    %828 = arith.addf %770, %827 : vector<1x256xf32>
    %c0_386 = arith.constant 0 : index
    %c3_387 = arith.constant 3 : index
    %829 = vector.load %arg6[%c0_386, %c3_387] : memref<2x358xf32, #tpu.memory_space<vmem>>, vector<1x256xf32>
    %830 = vector.broadcast %3 : f32 to vector<1x256xf32>
    %831 = arith.mulf %830, %829 : vector<1x256xf32>
    %c0_388 = arith.constant 0 : index
    %c19_389 = arith.constant 19 : index
    %832 = vector.load %arg6[%c0_388, %c19_389] : memref<2x358xf32, #tpu.memory_space<vmem>>, vector<1x256xf32>
    %833 = vector.broadcast %10 : f32 to vector<1x256xf32>
    %834 = arith.mulf %833, %832 : vector<1x256xf32>
    %835 = arith.addf %831, %834 : vector<1x256xf32>
    %c0_390 = arith.constant 0 : index
    %c35_391 = arith.constant 35 : index
    %836 = vector.load %arg6[%c0_390, %c35_391] : memref<2x358xf32, #tpu.memory_space<vmem>>, vector<1x256xf32>
    %837 = vector.broadcast %17 : f32 to vector<1x256xf32>
    %838 = arith.mulf %837, %836 : vector<1x256xf32>
    %839 = arith.addf %835, %838 : vector<1x256xf32>
    %c0_392 = arith.constant 0 : index
    %c51_393 = arith.constant 51 : index
    %840 = vector.load %arg6[%c0_392, %c51_393] : memref<2x358xf32, #tpu.memory_space<vmem>>, vector<1x256xf32>
    %841 = vector.broadcast %24 : f32 to vector<1x256xf32>
    %842 = arith.mulf %841, %840 : vector<1x256xf32>
    %843 = arith.addf %839, %842 : vector<1x256xf32>
    %c0_394 = arith.constant 0 : index
    %c67_395 = arith.constant 67 : index
    %844 = vector.load %arg6[%c0_394, %c67_395] : memref<2x358xf32, #tpu.memory_space<vmem>>, vector<1x256xf32>
    %845 = vector.broadcast %31 : f32 to vector<1x256xf32>
    %846 = arith.mulf %845, %844 : vector<1x256xf32>
    %847 = arith.addf %843, %846 : vector<1x256xf32>
    %c0_396 = arith.constant 0 : index
    %c83_397 = arith.constant 83 : index
    %848 = vector.load %arg6[%c0_396, %c83_397] : memref<2x358xf32, #tpu.memory_space<vmem>>, vector<1x256xf32>
    %849 = vector.broadcast %38 : f32 to vector<1x256xf32>
    %850 = arith.mulf %849, %848 : vector<1x256xf32>
    %851 = arith.addf %847, %850 : vector<1x256xf32>
    %c0_398 = arith.constant 0 : index
    %c99_399 = arith.constant 99 : index
    %852 = vector.load %arg6[%c0_398, %c99_399] : memref<2x358xf32, #tpu.memory_space<vmem>>, vector<1x256xf32>
    %853 = vector.broadcast %45 : f32 to vector<1x256xf32>
    %854 = arith.mulf %853, %852 : vector<1x256xf32>
    %855 = arith.addf %851, %854 : vector<1x256xf32>
    %c1_400 = arith.constant 1 : index
    %c3_401 = arith.constant 3 : index
    %856 = vector.load %arg6[%c1_400, %c3_401] : memref<2x358xf32, #tpu.memory_space<vmem>>, vector<1x256xf32>
    %857 = vector.broadcast %52 : f32 to vector<1x256xf32>
    %858 = arith.mulf %857, %856 : vector<1x256xf32>
    %859 = arith.addf %855, %858 : vector<1x256xf32>
    %c1_402 = arith.constant 1 : index
    %c19_403 = arith.constant 19 : index
    %860 = vector.load %arg6[%c1_402, %c19_403] : memref<2x358xf32, #tpu.memory_space<vmem>>, vector<1x256xf32>
    %861 = vector.broadcast %59 : f32 to vector<1x256xf32>
    %862 = arith.mulf %861, %860 : vector<1x256xf32>
    %863 = arith.addf %859, %862 : vector<1x256xf32>
    %c1_404 = arith.constant 1 : index
    %c35_405 = arith.constant 35 : index
    %864 = vector.load %arg6[%c1_404, %c35_405] : memref<2x358xf32, #tpu.memory_space<vmem>>, vector<1x256xf32>
    %865 = vector.broadcast %66 : f32 to vector<1x256xf32>
    %866 = arith.mulf %865, %864 : vector<1x256xf32>
    %867 = arith.addf %863, %866 : vector<1x256xf32>
    %c1_406 = arith.constant 1 : index
    %c51_407 = arith.constant 51 : index
    %868 = vector.load %arg6[%c1_406, %c51_407] : memref<2x358xf32, #tpu.memory_space<vmem>>, vector<1x256xf32>
    %869 = vector.broadcast %73 : f32 to vector<1x256xf32>
    %870 = arith.mulf %869, %868 : vector<1x256xf32>
    %871 = arith.addf %867, %870 : vector<1x256xf32>
    %c1_408 = arith.constant 1 : index
    %c67_409 = arith.constant 67 : index
    %872 = vector.load %arg6[%c1_408, %c67_409] : memref<2x358xf32, #tpu.memory_space<vmem>>, vector<1x256xf32>
    %873 = vector.broadcast %80 : f32 to vector<1x256xf32>
    %874 = arith.mulf %873, %872 : vector<1x256xf32>
    %875 = arith.addf %871, %874 : vector<1x256xf32>
    %c1_410 = arith.constant 1 : index
    %c83_411 = arith.constant 83 : index
    %876 = vector.load %arg6[%c1_410, %c83_411] : memref<2x358xf32, #tpu.memory_space<vmem>>, vector<1x256xf32>
    %877 = vector.broadcast %87 : f32 to vector<1x256xf32>
    %878 = arith.mulf %877, %876 : vector<1x256xf32>
    %879 = arith.addf %875, %878 : vector<1x256xf32>
    %c1_412 = arith.constant 1 : index
    %c99_413 = arith.constant 99 : index
    %880 = vector.load %arg6[%c1_412, %c99_413] : memref<2x358xf32, #tpu.memory_space<vmem>>, vector<1x256xf32>
    %881 = vector.broadcast %94 : f32 to vector<1x256xf32>
    %882 = arith.mulf %881, %880 : vector<1x256xf32>
    %883 = arith.addf %879, %882 : vector<1x256xf32>
    %c3_414 = arith.constant 3 : index
    %c0_415 = arith.constant 0 : index
    %884 = vector.load %arg3[%c3_414, %c0_415] : memref<7x256xf32, #tpu.memory_space<vmem>>, vector<1x256xf32>
    %885 = arith.mulf %883, %884 : vector<1x256xf32>
    %886 = arith.addf %828, %885 : vector<1x256xf32>
    %c0_416 = arith.constant 0 : index
    %c4_417 = arith.constant 4 : index
    %887 = vector.load %arg6[%c0_416, %c4_417] : memref<2x358xf32, #tpu.memory_space<vmem>>, vector<1x256xf32>
    %888 = vector.broadcast %4 : f32 to vector<1x256xf32>
    %889 = arith.mulf %888, %887 : vector<1x256xf32>
    %c0_418 = arith.constant 0 : index
    %c20_419 = arith.constant 20 : index
    %890 = vector.load %arg6[%c0_418, %c20_419] : memref<2x358xf32, #tpu.memory_space<vmem>>, vector<1x256xf32>
    %891 = vector.broadcast %11 : f32 to vector<1x256xf32>
    %892 = arith.mulf %891, %890 : vector<1x256xf32>
    %893 = arith.addf %889, %892 : vector<1x256xf32>
    %c0_420 = arith.constant 0 : index
    %c36_421 = arith.constant 36 : index
    %894 = vector.load %arg6[%c0_420, %c36_421] : memref<2x358xf32, #tpu.memory_space<vmem>>, vector<1x256xf32>
    %895 = vector.broadcast %18 : f32 to vector<1x256xf32>
    %896 = arith.mulf %895, %894 : vector<1x256xf32>
    %897 = arith.addf %893, %896 : vector<1x256xf32>
    %c0_422 = arith.constant 0 : index
    %c52_423 = arith.constant 52 : index
    %898 = vector.load %arg6[%c0_422, %c52_423] : memref<2x358xf32, #tpu.memory_space<vmem>>, vector<1x256xf32>
    %899 = vector.broadcast %25 : f32 to vector<1x256xf32>
    %900 = arith.mulf %899, %898 : vector<1x256xf32>
    %901 = arith.addf %897, %900 : vector<1x256xf32>
    %c0_424 = arith.constant 0 : index
    %c68_425 = arith.constant 68 : index
    %902 = vector.load %arg6[%c0_424, %c68_425] : memref<2x358xf32, #tpu.memory_space<vmem>>, vector<1x256xf32>
    %903 = vector.broadcast %32 : f32 to vector<1x256xf32>
    %904 = arith.mulf %903, %902 : vector<1x256xf32>
    %905 = arith.addf %901, %904 : vector<1x256xf32>
    %c0_426 = arith.constant 0 : index
    %c84_427 = arith.constant 84 : index
    %906 = vector.load %arg6[%c0_426, %c84_427] : memref<2x358xf32, #tpu.memory_space<vmem>>, vector<1x256xf32>
    %907 = vector.broadcast %39 : f32 to vector<1x256xf32>
    %908 = arith.mulf %907, %906 : vector<1x256xf32>
    %909 = arith.addf %905, %908 : vector<1x256xf32>
    %c0_428 = arith.constant 0 : index
    %c100_429 = arith.constant 100 : index
    %910 = vector.load %arg6[%c0_428, %c100_429] : memref<2x358xf32, #tpu.memory_space<vmem>>, vector<1x256xf32>
    %911 = vector.broadcast %46 : f32 to vector<1x256xf32>
    %912 = arith.mulf %911, %910 : vector<1x256xf32>
    %913 = arith.addf %909, %912 : vector<1x256xf32>
    %c1_430 = arith.constant 1 : index
    %c4_431 = arith.constant 4 : index
    %914 = vector.load %arg6[%c1_430, %c4_431] : memref<2x358xf32, #tpu.memory_space<vmem>>, vector<1x256xf32>
    %915 = vector.broadcast %53 : f32 to vector<1x256xf32>
    %916 = arith.mulf %915, %914 : vector<1x256xf32>
    %917 = arith.addf %913, %916 : vector<1x256xf32>
    %c1_432 = arith.constant 1 : index
    %c20_433 = arith.constant 20 : index
    %918 = vector.load %arg6[%c1_432, %c20_433] : memref<2x358xf32, #tpu.memory_space<vmem>>, vector<1x256xf32>
    %919 = vector.broadcast %60 : f32 to vector<1x256xf32>
    %920 = arith.mulf %919, %918 : vector<1x256xf32>
    %921 = arith.addf %917, %920 : vector<1x256xf32>
    %c1_434 = arith.constant 1 : index
    %c36_435 = arith.constant 36 : index
    %922 = vector.load %arg6[%c1_434, %c36_435] : memref<2x358xf32, #tpu.memory_space<vmem>>, vector<1x256xf32>
    %923 = vector.broadcast %67 : f32 to vector<1x256xf32>
    %924 = arith.mulf %923, %922 : vector<1x256xf32>
    %925 = arith.addf %921, %924 : vector<1x256xf32>
    %c1_436 = arith.constant 1 : index
    %c52_437 = arith.constant 52 : index
    %926 = vector.load %arg6[%c1_436, %c52_437] : memref<2x358xf32, #tpu.memory_space<vmem>>, vector<1x256xf32>
    %927 = vector.broadcast %74 : f32 to vector<1x256xf32>
    %928 = arith.mulf %927, %926 : vector<1x256xf32>
    %929 = arith.addf %925, %928 : vector<1x256xf32>
    %c1_438 = arith.constant 1 : index
    %c68_439 = arith.constant 68 : index
    %930 = vector.load %arg6[%c1_438, %c68_439] : memref<2x358xf32, #tpu.memory_space<vmem>>, vector<1x256xf32>
    %931 = vector.broadcast %81 : f32 to vector<1x256xf32>
    %932 = arith.mulf %931, %930 : vector<1x256xf32>
    %933 = arith.addf %929, %932 : vector<1x256xf32>
    %c1_440 = arith.constant 1 : index
    %c84_441 = arith.constant 84 : index
    %934 = vector.load %arg6[%c1_440, %c84_441] : memref<2x358xf32, #tpu.memory_space<vmem>>, vector<1x256xf32>
    %935 = vector.broadcast %88 : f32 to vector<1x256xf32>
    %936 = arith.mulf %935, %934 : vector<1x256xf32>
    %937 = arith.addf %933, %936 : vector<1x256xf32>
    %c1_442 = arith.constant 1 : index
    %c100_443 = arith.constant 100 : index
    %938 = vector.load %arg6[%c1_442, %c100_443] : memref<2x358xf32, #tpu.memory_space<vmem>>, vector<1x256xf32>
    %939 = vector.broadcast %95 : f32 to vector<1x256xf32>
    %940 = arith.mulf %939, %938 : vector<1x256xf32>
    %941 = arith.addf %937, %940 : vector<1x256xf32>
    %c4_444 = arith.constant 4 : index
    %c0_445 = arith.constant 0 : index
    %942 = vector.load %arg3[%c4_444, %c0_445] : memref<7x256xf32, #tpu.memory_space<vmem>>, vector<1x256xf32>
    %943 = arith.mulf %941, %942 : vector<1x256xf32>
    %944 = arith.addf %886, %943 : vector<1x256xf32>
    %c0_446 = arith.constant 0 : index
    %c5_447 = arith.constant 5 : index
    %945 = vector.load %arg6[%c0_446, %c5_447] : memref<2x358xf32, #tpu.memory_space<vmem>>, vector<1x256xf32>
    %946 = vector.broadcast %5 : f32 to vector<1x256xf32>
    %947 = arith.mulf %946, %945 : vector<1x256xf32>
    %c0_448 = arith.constant 0 : index
    %c21_449 = arith.constant 21 : index
    %948 = vector.load %arg6[%c0_448, %c21_449] : memref<2x358xf32, #tpu.memory_space<vmem>>, vector<1x256xf32>
    %949 = vector.broadcast %12 : f32 to vector<1x256xf32>
    %950 = arith.mulf %949, %948 : vector<1x256xf32>
    %951 = arith.addf %947, %950 : vector<1x256xf32>
    %c0_450 = arith.constant 0 : index
    %c37_451 = arith.constant 37 : index
    %952 = vector.load %arg6[%c0_450, %c37_451] : memref<2x358xf32, #tpu.memory_space<vmem>>, vector<1x256xf32>
    %953 = vector.broadcast %19 : f32 to vector<1x256xf32>
    %954 = arith.mulf %953, %952 : vector<1x256xf32>
    %955 = arith.addf %951, %954 : vector<1x256xf32>
    %c0_452 = arith.constant 0 : index
    %c53_453 = arith.constant 53 : index
    %956 = vector.load %arg6[%c0_452, %c53_453] : memref<2x358xf32, #tpu.memory_space<vmem>>, vector<1x256xf32>
    %957 = vector.broadcast %26 : f32 to vector<1x256xf32>
    %958 = arith.mulf %957, %956 : vector<1x256xf32>
    %959 = arith.addf %955, %958 : vector<1x256xf32>
    %c0_454 = arith.constant 0 : index
    %c69_455 = arith.constant 69 : index
    %960 = vector.load %arg6[%c0_454, %c69_455] : memref<2x358xf32, #tpu.memory_space<vmem>>, vector<1x256xf32>
    %961 = vector.broadcast %33 : f32 to vector<1x256xf32>
    %962 = arith.mulf %961, %960 : vector<1x256xf32>
    %963 = arith.addf %959, %962 : vector<1x256xf32>
    %c0_456 = arith.constant 0 : index
    %c85_457 = arith.constant 85 : index
    %964 = vector.load %arg6[%c0_456, %c85_457] : memref<2x358xf32, #tpu.memory_space<vmem>>, vector<1x256xf32>
    %965 = vector.broadcast %40 : f32 to vector<1x256xf32>
    %966 = arith.mulf %965, %964 : vector<1x256xf32>
    %967 = arith.addf %963, %966 : vector<1x256xf32>
    %c0_458 = arith.constant 0 : index
    %c101_459 = arith.constant 101 : index
    %968 = vector.load %arg6[%c0_458, %c101_459] : memref<2x358xf32, #tpu.memory_space<vmem>>, vector<1x256xf32>
    %969 = vector.broadcast %47 : f32 to vector<1x256xf32>
    %970 = arith.mulf %969, %968 : vector<1x256xf32>
    %971 = arith.addf %967, %970 : vector<1x256xf32>
    %c1_460 = arith.constant 1 : index
    %c5_461 = arith.constant 5 : index
    %972 = vector.load %arg6[%c1_460, %c5_461] : memref<2x358xf32, #tpu.memory_space<vmem>>, vector<1x256xf32>
    %973 = vector.broadcast %54 : f32 to vector<1x256xf32>
    %974 = arith.mulf %973, %972 : vector<1x256xf32>
    %975 = arith.addf %971, %974 : vector<1x256xf32>
    %c1_462 = arith.constant 1 : index
    %c21_463 = arith.constant 21 : index
    %976 = vector.load %arg6[%c1_462, %c21_463] : memref<2x358xf32, #tpu.memory_space<vmem>>, vector<1x256xf32>
    %977 = vector.broadcast %61 : f32 to vector<1x256xf32>
    %978 = arith.mulf %977, %976 : vector<1x256xf32>
    %979 = arith.addf %975, %978 : vector<1x256xf32>
    %c1_464 = arith.constant 1 : index
    %c37_465 = arith.constant 37 : index
    %980 = vector.load %arg6[%c1_464, %c37_465] : memref<2x358xf32, #tpu.memory_space<vmem>>, vector<1x256xf32>
    %981 = vector.broadcast %68 : f32 to vector<1x256xf32>
    %982 = arith.mulf %981, %980 : vector<1x256xf32>
    %983 = arith.addf %979, %982 : vector<1x256xf32>
    %c1_466 = arith.constant 1 : index
    %c53_467 = arith.constant 53 : index
    %984 = vector.load %arg6[%c1_466, %c53_467] : memref<2x358xf32, #tpu.memory_space<vmem>>, vector<1x256xf32>
    %985 = vector.broadcast %75 : f32 to vector<1x256xf32>
    %986 = arith.mulf %985, %984 : vector<1x256xf32>
    %987 = arith.addf %983, %986 : vector<1x256xf32>
    %c1_468 = arith.constant 1 : index
    %c69_469 = arith.constant 69 : index
    %988 = vector.load %arg6[%c1_468, %c69_469] : memref<2x358xf32, #tpu.memory_space<vmem>>, vector<1x256xf32>
    %989 = vector.broadcast %82 : f32 to vector<1x256xf32>
    %990 = arith.mulf %989, %988 : vector<1x256xf32>
    %991 = arith.addf %987, %990 : vector<1x256xf32>
    %c1_470 = arith.constant 1 : index
    %c85_471 = arith.constant 85 : index
    %992 = vector.load %arg6[%c1_470, %c85_471] : memref<2x358xf32, #tpu.memory_space<vmem>>, vector<1x256xf32>
    %993 = vector.broadcast %89 : f32 to vector<1x256xf32>
    %994 = arith.mulf %993, %992 : vector<1x256xf32>
    %995 = arith.addf %991, %994 : vector<1x256xf32>
    %c1_472 = arith.constant 1 : index
    %c101_473 = arith.constant 101 : index
    %996 = vector.load %arg6[%c1_472, %c101_473] : memref<2x358xf32, #tpu.memory_space<vmem>>, vector<1x256xf32>
    %997 = vector.broadcast %96 : f32 to vector<1x256xf32>
    %998 = arith.mulf %997, %996 : vector<1x256xf32>
    %999 = arith.addf %995, %998 : vector<1x256xf32>
    %c5_474 = arith.constant 5 : index
    %c0_475 = arith.constant 0 : index
    %1000 = vector.load %arg3[%c5_474, %c0_475] : memref<7x256xf32, #tpu.memory_space<vmem>>, vector<1x256xf32>
    %1001 = arith.mulf %999, %1000 : vector<1x256xf32>
    %1002 = arith.addf %944, %1001 : vector<1x256xf32>
    %c0_476 = arith.constant 0 : index
    %c6_477 = arith.constant 6 : index
    %1003 = vector.load %arg6[%c0_476, %c6_477] : memref<2x358xf32, #tpu.memory_space<vmem>>, vector<1x256xf32>
    %1004 = vector.broadcast %6 : f32 to vector<1x256xf32>
    %1005 = arith.mulf %1004, %1003 : vector<1x256xf32>
    %c0_478 = arith.constant 0 : index
    %c22_479 = arith.constant 22 : index
    %1006 = vector.load %arg6[%c0_478, %c22_479] : memref<2x358xf32, #tpu.memory_space<vmem>>, vector<1x256xf32>
    %1007 = vector.broadcast %13 : f32 to vector<1x256xf32>
    %1008 = arith.mulf %1007, %1006 : vector<1x256xf32>
    %1009 = arith.addf %1005, %1008 : vector<1x256xf32>
    %c0_480 = arith.constant 0 : index
    %c38_481 = arith.constant 38 : index
    %1010 = vector.load %arg6[%c0_480, %c38_481] : memref<2x358xf32, #tpu.memory_space<vmem>>, vector<1x256xf32>
    %1011 = vector.broadcast %20 : f32 to vector<1x256xf32>
    %1012 = arith.mulf %1011, %1010 : vector<1x256xf32>
    %1013 = arith.addf %1009, %1012 : vector<1x256xf32>
    %c0_482 = arith.constant 0 : index
    %c54_483 = arith.constant 54 : index
    %1014 = vector.load %arg6[%c0_482, %c54_483] : memref<2x358xf32, #tpu.memory_space<vmem>>, vector<1x256xf32>
    %1015 = vector.broadcast %27 : f32 to vector<1x256xf32>
    %1016 = arith.mulf %1015, %1014 : vector<1x256xf32>
    %1017 = arith.addf %1013, %1016 : vector<1x256xf32>
    %c0_484 = arith.constant 0 : index
    %c70_485 = arith.constant 70 : index
    %1018 = vector.load %arg6[%c0_484, %c70_485] : memref<2x358xf32, #tpu.memory_space<vmem>>, vector<1x256xf32>
    %1019 = vector.broadcast %34 : f32 to vector<1x256xf32>
    %1020 = arith.mulf %1019, %1018 : vector<1x256xf32>
    %1021 = arith.addf %1017, %1020 : vector<1x256xf32>
    %c0_486 = arith.constant 0 : index
    %c86_487 = arith.constant 86 : index
    %1022 = vector.load %arg6[%c0_486, %c86_487] : memref<2x358xf32, #tpu.memory_space<vmem>>, vector<1x256xf32>
    %1023 = vector.broadcast %41 : f32 to vector<1x256xf32>
    %1024 = arith.mulf %1023, %1022 : vector<1x256xf32>
    %1025 = arith.addf %1021, %1024 : vector<1x256xf32>
    %c0_488 = arith.constant 0 : index
    %c102_489 = arith.constant 102 : index
    %1026 = vector.load %arg6[%c0_488, %c102_489] : memref<2x358xf32, #tpu.memory_space<vmem>>, vector<1x256xf32>
    %1027 = vector.broadcast %48 : f32 to vector<1x256xf32>
    %1028 = arith.mulf %1027, %1026 : vector<1x256xf32>
    %1029 = arith.addf %1025, %1028 : vector<1x256xf32>
    %c1_490 = arith.constant 1 : index
    %c6_491 = arith.constant 6 : index
    %1030 = vector.load %arg6[%c1_490, %c6_491] : memref<2x358xf32, #tpu.memory_space<vmem>>, vector<1x256xf32>
    %1031 = vector.broadcast %55 : f32 to vector<1x256xf32>
    %1032 = arith.mulf %1031, %1030 : vector<1x256xf32>
    %1033 = arith.addf %1029, %1032 : vector<1x256xf32>
    %c1_492 = arith.constant 1 : index
    %c22_493 = arith.constant 22 : index
    %1034 = vector.load %arg6[%c1_492, %c22_493] : memref<2x358xf32, #tpu.memory_space<vmem>>, vector<1x256xf32>
    %1035 = vector.broadcast %62 : f32 to vector<1x256xf32>
    %1036 = arith.mulf %1035, %1034 : vector<1x256xf32>
    %1037 = arith.addf %1033, %1036 : vector<1x256xf32>
    %c1_494 = arith.constant 1 : index
    %c38_495 = arith.constant 38 : index
    %1038 = vector.load %arg6[%c1_494, %c38_495] : memref<2x358xf32, #tpu.memory_space<vmem>>, vector<1x256xf32>
    %1039 = vector.broadcast %69 : f32 to vector<1x256xf32>
    %1040 = arith.mulf %1039, %1038 : vector<1x256xf32>
    %1041 = arith.addf %1037, %1040 : vector<1x256xf32>
    %c1_496 = arith.constant 1 : index
    %c54_497 = arith.constant 54 : index
    %1042 = vector.load %arg6[%c1_496, %c54_497] : memref<2x358xf32, #tpu.memory_space<vmem>>, vector<1x256xf32>
    %1043 = vector.broadcast %76 : f32 to vector<1x256xf32>
    %1044 = arith.mulf %1043, %1042 : vector<1x256xf32>
    %1045 = arith.addf %1041, %1044 : vector<1x256xf32>
    %c1_498 = arith.constant 1 : index
    %c70_499 = arith.constant 70 : index
    %1046 = vector.load %arg6[%c1_498, %c70_499] : memref<2x358xf32, #tpu.memory_space<vmem>>, vector<1x256xf32>
    %1047 = vector.broadcast %83 : f32 to vector<1x256xf32>
    %1048 = arith.mulf %1047, %1046 : vector<1x256xf32>
    %1049 = arith.addf %1045, %1048 : vector<1x256xf32>
    %c1_500 = arith.constant 1 : index
    %c86_501 = arith.constant 86 : index
    %1050 = vector.load %arg6[%c1_500, %c86_501] : memref<2x358xf32, #tpu.memory_space<vmem>>, vector<1x256xf32>
    %1051 = vector.broadcast %90 : f32 to vector<1x256xf32>
    %1052 = arith.mulf %1051, %1050 : vector<1x256xf32>
    %1053 = arith.addf %1049, %1052 : vector<1x256xf32>
    %c1_502 = arith.constant 1 : index
    %c102_503 = arith.constant 102 : index
    %1054 = vector.load %arg6[%c1_502, %c102_503] : memref<2x358xf32, #tpu.memory_space<vmem>>, vector<1x256xf32>
    %1055 = vector.broadcast %97 : f32 to vector<1x256xf32>
    %1056 = arith.mulf %1055, %1054 : vector<1x256xf32>
    %1057 = arith.addf %1053, %1056 : vector<1x256xf32>
    %c6_504 = arith.constant 6 : index
    %c0_505 = arith.constant 0 : index
    %1058 = vector.load %arg3[%c6_504, %c0_505] : memref<7x256xf32, #tpu.memory_space<vmem>>, vector<1x256xf32>
    %1059 = arith.mulf %1057, %1058 : vector<1x256xf32>
    %1060 = arith.addf %1002, %1059 : vector<1x256xf32>
    %1061 = arith.negf %1060 : vector<1x256xf32>
    %1062 = math.exp %1061 : vector<1x256xf32>
    %cst_506 = arith.constant 1.000000e+00 : f32
    %1063 = vector.broadcast %cst_506 : f32 to vector<1x256xf32>
    %1064 = arith.addf %1063, %1062 : vector<1x256xf32>
    %1065 = arith.divf %1063, %1064 : vector<1x256xf32>
    %1066 = vector.shape_cast %1065 : vector<1x256xf32> to vector<1x256xf32>
    %1067 = vector.broadcast %1066 : vector<1x256xf32> to vector<8x256xf32>
    %c0_i32_507 = arith.constant 0 : i32
    %c8_i32_508 = arith.constant 8 : i32
    %1068 = arith.muli %c0_i32_507, %c8_i32_508 : i32
    %1069 = tpu.assume_multiple %1068, 8 : i32
    %c1_509 = arith.constant 1 : index
    %1070 = arith.index_cast %1069 : i32 to index
    %c0_510 = arith.constant 0 : index
    %1071 = vector.load %arg4[%c1_509, %1070, %c0_510] : memref<2x36x256xf32, #tpu.memory_space<vmem>>, vector<1x8x256xf32>
    %1072 = vector.shape_cast %1071 : vector<1x8x256xf32> to vector<8x256xf32>
    %1073 = arith.mulf %1072, %1067 : vector<8x256xf32>
    %c1_511 = arith.constant 1 : index
    %1074 = arith.index_cast %1069 : i32 to index
    %c0_512 = arith.constant 0 : index
    %1075 = vector.load %arg5[%c1_511, %1074, %c0_512] : memref<2x36x256xf32, #tpu.memory_space<vmem>>, vector<1x8x256xf32>
    %1076 = vector.shape_cast %1075 : vector<1x8x256xf32> to vector<8x256xf32>
    %1077 = vector.shape_cast %1073 : vector<8x256xf32> to vector<1x8x256xf32>
    tpu.vector_store %arg5[%c1_511, %1074, %c0_512], %1077 {strides = array<i32>} : memref<2x36x256xf32, #tpu.memory_space<vmem>>, vector<1x8x256xf32>,
    %c1_i32_513 = arith.constant 1 : i32
    %c8_i32_514 = arith.constant 8 : i32
    %1078 = arith.muli %c1_i32_513, %c8_i32_514 : i32
    %1079 = tpu.assume_multiple %1078, 8 : i32
    %c1_515 = arith.constant 1 : index
    %1080 = arith.index_cast %1079 : i32 to index
    %c0_516 = arith.constant 0 : index
    %1081 = vector.load %arg4[%c1_515, %1080, %c0_516] : memref<2x36x256xf32, #tpu.memory_space<vmem>>, vector<1x8x256xf32>
    %1082 = vector.shape_cast %1081 : vector<1x8x256xf32> to vector<8x256xf32>
    %1083 = arith.mulf %1082, %1067 : vector<8x256xf32>
    %c1_517 = arith.constant 1 : index
    %1084 = arith.index_cast %1079 : i32 to index
    %c0_518 = arith.constant 0 : index
    %1085 = vector.load %arg5[%c1_517, %1084, %c0_518] : memref<2x36x256xf32, #tpu.memory_space<vmem>>, vector<1x8x256xf32>
    %1086 = vector.shape_cast %1085 : vector<1x8x256xf32> to vector<8x256xf32>
    %1087 = vector.shape_cast %1083 : vector<8x256xf32> to vector<1x8x256xf32>
    tpu.vector_store %arg5[%c1_517, %1084, %c0_518], %1087 {strides = array<i32>} : memref<2x36x256xf32, #tpu.memory_space<vmem>>, vector<1x8x256xf32>,
    %c2_i32_519 = arith.constant 2 : i32
    %c8_i32_520 = arith.constant 8 : i32
    %1088 = arith.muli %c2_i32_519, %c8_i32_520 : i32
    %1089 = tpu.assume_multiple %1088, 8 : i32
    %c1_521 = arith.constant 1 : index
    %1090 = arith.index_cast %1089 : i32 to index
    %c0_522 = arith.constant 0 : index
    %1091 = vector.load %arg4[%c1_521, %1090, %c0_522] : memref<2x36x256xf32, #tpu.memory_space<vmem>>, vector<1x8x256xf32>
    %1092 = vector.shape_cast %1091 : vector<1x8x256xf32> to vector<8x256xf32>
    %1093 = arith.mulf %1092, %1067 : vector<8x256xf32>
    %c1_523 = arith.constant 1 : index
    %1094 = arith.index_cast %1089 : i32 to index
    %c0_524 = arith.constant 0 : index
    %1095 = vector.load %arg5[%c1_523, %1094, %c0_524] : memref<2x36x256xf32, #tpu.memory_space<vmem>>, vector<1x8x256xf32>
    %1096 = vector.shape_cast %1095 : vector<1x8x256xf32> to vector<8x256xf32>
    %1097 = vector.shape_cast %1093 : vector<8x256xf32> to vector<1x8x256xf32>
    tpu.vector_store %arg5[%c1_523, %1094, %c0_524], %1097 {strides = array<i32>} : memref<2x36x256xf32, #tpu.memory_space<vmem>>, vector<1x8x256xf32>,
    %c3_i32_525 = arith.constant 3 : i32
    %c8_i32_526 = arith.constant 8 : i32
    %1098 = arith.muli %c3_i32_525, %c8_i32_526 : i32
    %1099 = tpu.assume_multiple %1098, 8 : i32
    %c1_527 = arith.constant 1 : index
    %1100 = arith.index_cast %1099 : i32 to index
    %c0_528 = arith.constant 0 : index
    %1101 = vector.load %arg4[%c1_527, %1100, %c0_528] : memref<2x36x256xf32, #tpu.memory_space<vmem>>, vector<1x8x256xf32>
    %1102 = vector.shape_cast %1101 : vector<1x8x256xf32> to vector<8x256xf32>
    %1103 = arith.mulf %1102, %1067 : vector<8x256xf32>
    %c1_529 = arith.constant 1 : index
    %1104 = arith.index_cast %1099 : i32 to index
    %c0_530 = arith.constant 0 : index
    %1105 = vector.load %arg5[%c1_529, %1104, %c0_530] : memref<2x36x256xf32, #tpu.memory_space<vmem>>, vector<1x8x256xf32>
    %1106 = vector.shape_cast %1105 : vector<1x8x256xf32> to vector<8x256xf32>
    %1107 = vector.shape_cast %1103 : vector<8x256xf32> to vector<1x8x256xf32>
    tpu.vector_store %arg5[%c1_529, %1104, %c0_530], %1107 {strides = array<i32>} : memref<2x36x256xf32, #tpu.memory_space<vmem>>, vector<1x8x256xf32>,
    %c4_i32_531 = arith.constant 4 : i32
    %c1_532 = arith.constant 1 : index
    %c32_533 = arith.constant 32 : index
    %c0_534 = arith.constant 0 : index
    %1108 = vector.load %arg4[%c1_532, %c32_533, %c0_534] : memref<2x36x256xf32, #tpu.memory_space<vmem>>, vector<1x4x256xf32>
    %1109 = vector.shape_cast %1108 : vector<1x4x256xf32> to vector<4x256xf32>
    %1110 = vector.broadcast %1065 : vector<1x256xf32> to vector<4x256xf32>
    %1111 = arith.mulf %1109, %1110 : vector<4x256xf32>
    %c1_535 = arith.constant 1 : index
    %c32_536 = arith.constant 32 : index
    %c0_537 = arith.constant 0 : index
    %1112 = vector.load %arg5[%c1_535, %c32_536, %c0_537] : memref<2x36x256xf32, #tpu.memory_space<vmem>>, vector<1x4x256xf32>
    %1113 = vector.shape_cast %1112 : vector<1x4x256xf32> to vector<4x256xf32>
    %1114 = vector.shape_cast %1111 : vector<4x256xf32> to vector<1x4x256xf32>
    tpu.vector_store %arg5[%c1_535, %c32_536, %c0_537], %1114 {strides = array<i32>} : memref<2x36x256xf32, #tpu.memory_space<vmem>>, vector<1x4x256xf32>,
    return
  }
  func.func @transform_0(%arg0: i32) -> i32 {
    %c0_i32 = arith.constant 0 : i32
    %c0_i32_0 = arith.constant 0 : i32
    return %c0_i32 : i32
  }
  func.func @transform_1(%arg0: i32) -> i32 {
    %c0_i32 = arith.constant 0 : i32
    %c0_i32_0 = arith.constant 0 : i32
    return %c0_i32 : i32
  }
  func.func @transform_2(%arg0: i32) -> (i32, i32) {
    %c0_i32 = arith.constant 0 : i32
    %c0_i32_0 = arith.constant 0 : i32
    %c0_i32_1 = arith.constant 0 : i32
    return %c0_i32, %c0_i32_0 : i32, i32
  }
  func.func @transform_3(%arg0: i32) -> (i32, i32, i32) {
    %c0_i32 = arith.constant 0 : i32
    %c0_i32_0 = arith.constant 0 : i32
    %c0_i32_1 = arith.constant 0 : i32
    return %arg0, %c0_i32, %c0_i32_0 : i32, i32, i32
  }
  func.func @transform_4(%arg0: i32) -> (i32, i32, i32) {
    %c0_i32 = arith.constant 0 : i32
    %c0_i32_0 = arith.constant 0 : i32
    %c0_i32_1 = arith.constant 0 : i32
    return %arg0, %c0_i32, %c0_i32_0 : i32, i32, i32
  }
}

</mosaic_0001>

<llo_original>
// kernel: tpu_custom_call.1
$region0: #{tpu_custom_call.1}
  #allocation0 [shape = 'u32[]', space=smem, size = 0x4, offset = 0x4, fixed_abs, tag = 'smem constant byte address 0x4 - core index']
  #allocation1 [shape = 'u32[144,128]{1,0:T(1,128)}', space=vmem, size = 0x12000, scoped, tag = 'internal scratch']
  #allocation2 [shape = 'f32[2,358]{1,0:T(2,128)}', space=vmem, size = 0xc00, scoped, tag = 'scratch operand']
  #allocation3 [shape = 'f32[1]{0:T(128)S(6)}', space=smem, size = 0x200, scoped, tag = 'scoped memory for tpu_custom_call.1']
  %s0 = inlined_call_operand.vmem [shape: f32[98], index: 0, kind: input, shape index: {}]
  %s1 = inlined_call_operand.<no memory space> [shape: f32[1], index: 1, kind: input, shape index: {}]
  %s2 = inlined_call_operand.vmem [shape: f32[7,256], index: 2, kind: input, shape index: {}]
  %s3 = inlined_call_operand.vmem [shape: f32[2,36,256], index: 3, kind: input, shape index: {}, may-alias: {3,4}]
  %s4 = inlined_call_operand.vmem [shape: f32[2,36,256], index: 4, kind: output, shape index: {}, may-alias: {3,4}]
  %s5 = sld [smem:[#allocation0]]
  $region30: #{tpu_custom_call.1} parent=0
    _
  %s7 = ssub.s32 1, %s5
  %s8 = scalar_select 0, %s7, %s5
  %9 = sst [smem:[#allocation3]] %s1
  $region1: #{tpu_custom_call.1} parent=0
    #allocation4 [shape = 'u8[512]{0}', space=smem, size = 0x200, scoped, tag = 'input window, operand 0, single buffered']
    #allocation5 [shape = 's32[1]{0}', space=sflag, size = 0x4, scoped, tag = 'scoped memory for tpu_custom_call.1']
    %10 = vsyncpa [#allocation5], 0
    // Predicated region
    $region2: #{tpu_custom_call.1} parent=1 // pred_check
      _
    $region3: #{tpu_custom_call.1} parent=1 // pred_check_branch
      %12 = sbr.rel (0) target = $region5
    $region4: #{tpu_custom_call.1} parent=1 // pred_region
      %s14 = ssub.s32 16, 16
      %15 = vsyncadd [#allocation5], %s14
      %s17 = sshll.u32 %s0, 4
      %s18 = int_to_ptr.vmem [resolvable:$true] %s17
      %20 = dma.vmem_to_smem %s18, 16, [#allocation4], [#allocation5]
    $region5: #{tpu_custom_call.1} parent=1 // pred_fallthru
      _
    // Predicated region
    $region6: #{tpu_custom_call.1} parent=1 // pred_check
      _
    $region7: #{tpu_custom_call.1} parent=1 // pred_check_branch
      %22 = sbr.rel (0) target = $region9
    $region8: #{tpu_custom_call.1} parent=1 // pred_region
      _
    $region9: #{tpu_custom_call.1} parent=1 // pred_fallthru
      _
    // Predicated region
    $region10: #{tpu_custom_call.1} parent=1 // pred_check
      _
    $region11: #{tpu_custom_call.1} parent=1 // pred_check_branch
      %24 = sbr.rel (0) target = $region13
    $region12: #{tpu_custom_call.1} parent=1 // pred_region
      _
    $region13: #{tpu_custom_call.1} parent=1 // pred_fallthru
      _
    // Predicated region
    $region14: #{tpu_custom_call.1} parent=1 // pred_check
      _
    $region15: #{tpu_custom_call.1} parent=1 // pred_check_branch
      %26 = sbr.rel (0) target = $region17
    $region16: #{tpu_custom_call.1} parent=1 // pred_region
      _
    $region17: #{tpu_custom_call.1} parent=1 // pred_fallthru
      _
    // Predicated region
    $region18: #{tpu_custom_call.1} parent=1 // pred_check
      _
    $region19: #{tpu_custom_call.1} parent=1 // pred_check_branch
      %28 = sbr.rel (0) target = $region21
    $region20: #{tpu_custom_call.1} parent=1 // pred_region
      %29 = dma.done [#allocation5], 16
    $region21: #{tpu_custom_call.1} parent=1 // pred_fallthru
      _
    %30 = sfence
    %s31 = sld [smem:[#allocation4]]
    %s32 = sld [smem:[#allocation4 + $0x1]]
    %s33 = sld [smem:[#allocation4 + $0x2]]
    %s34 = sld [smem:[#allocation4 + $0x3]]
    %s35 = sld [smem:[#allocation4 + $0x4]]
    %s36 = sld [smem:[#allocation4 + $0x5]]
    %s37 = sld [smem:[#allocation4 + $0x6]]
    %s38 = sld [smem:[#allocation4 + $0x7]]
    %s39 = sld [smem:[#allocation4 + $0x8]]
    %s40 = sld [smem:[#allocation4 + $0x9]]
    %s41 = sld [smem:[#allocation4 + $0xa]]
    %s42 = sld [smem:[#allocation4 + $0xb]]
    %s43 = sld [smem:[#allocation4 + $0xc]]
    %s44 = sld [smem:[#allocation4 + $0xd]]
    %s45 = sld [smem:[#allocation4 + $0xe]]
    %s46 = sld [smem:[#allocation4 + $0xf]]
    %s47 = sld [smem:[#allocation4 + $0x10]]
    %s48 = sld [smem:[#allocation4 + $0x11]]
    %s49 = sld [smem:[#allocation4 + $0x12]]
    %s50 = sld [smem:[#allocation4 + $0x13]]
    %s51 = sld [smem:[#allocation4 + $0x14]]
    %s52 = sld [smem:[#allocation4 + $0x15]]
    %s53 = sld [smem:[#allocation4 + $0x16]]
    %s54 = sld [smem:[#allocation4 + $0x17]]
    %s55 = sld [smem:[#allocation4 + $0x18]]
    %s56 = sld [smem:[#allocation4 + $0x19]]
    %s57 = sld [smem:[#allocation4 + $0x1a]]
    %s58 = sld [smem:[#allocation4 + $0x1b]]
    %s59 = sld [smem:[#allocation4 + $0x1c]]
    %s60 = sld [smem:[#allocation4 + $0x1d]]
    %s61 = sld [smem:[#allocation4 + $0x1e]]
    %s62 = sld [smem:[#allocation4 + $0x1f]]
    %s63 = sld [smem:[#allocation4 + $0x20]]
    %s64 = sld [smem:[#allocation4 + $0x21]]
    %s65 = sld [smem:[#allocation4 + $0x22]]
    %s66 = sld [smem:[#allocation4 + $0x23]]
    %s67 = sld [smem:[#allocation4 + $0x24]]
    %s68 = sld [smem:[#allocation4 + $0x25]]
    %s69 = sld [smem:[#allocation4 + $0x26]]
    %s70 = sld [smem:[#allocation4 + $0x27]]
    %s71 = sld [smem:[#allocation4 + $0x28]]
    %s72 = sld [smem:[#allocation4 + $0x29]]
    %s73 = sld [smem:[#allocation4 + $0x2a]]
    %s74 = sld [smem:[#allocation4 + $0x2b]]
    %s75 = sld [smem:[#allocation4 + $0x2c]]
    %s76 = sld [smem:[#allocation4 + $0x2d]]
    %s77 = sld [smem:[#allocation4 + $0x2e]]
    %s78 = sld [smem:[#allocation4 + $0x2f]]
    %s79 = sld [smem:[#allocation4 + $0x30]]
    %s80 = sld [smem:[#allocation4 + $0x31]]
    %s81 = sld [smem:[#allocation4 + $0x32]]
    %s82 = sld [smem:[#allocation4 + $0x33]]
    %s83 = sld [smem:[#allocation4 + $0x34]]
    %s84 = sld [smem:[#allocation4 + $0x35]]
    %s85 = sld [smem:[#allocation4 + $0x36]]
    %s86 = sld [smem:[#allocation4 + $0x37]]
    %s87 = sld [smem:[#allocation4 + $0x38]]
    %s88 = sld [smem:[#allocation4 + $0x39]]
    %s89 = sld [smem:[#allocation4 + $0x3a]]
    %s90 = sld [smem:[#allocation4 + $0x3b]]
    %s91 = sld [smem:[#allocation4 + $0x3c]]
    %s92 = sld [smem:[#allocation4 + $0x3d]]
    %s93 = sld [smem:[#allocation4 + $0x3e]]
    %s94 = sld [smem:[#allocation4 + $0x3f]]
    %s95 = sld [smem:[#allocation4 + $0x40]]
    %s96 = sld [smem:[#allocation4 + $0x41]]
    %s97 = sld [smem:[#allocation4 + $0x42]]
    %s98 = sld [smem:[#allocation4 + $0x43]]
    %s99 = sld [smem:[#allocation4 + $0x44]]
    %s100 = sld [smem:[#allocation4 + $0x45]]
    %s101 = sld [smem:[#allocation4 + $0x46]]
    %s102 = sld [smem:[#allocation4 + $0x47]]
    %s103 = sld [smem:[#allocation4 + $0x48]]
    %s104 = sld [smem:[#allocation4 + $0x49]]
    %s105 = sld [smem:[#allocation4 + $0x4a]]
    %s106 = sld [smem:[#allocation4 + $0x4b]]
    %s107 = sld [smem:[#allocation4 + $0x4c]]
    %s108 = sld [smem:[#allocation4 + $0x4d]]
    %s109 = sld [smem:[#allocation4 + $0x4e]]
    %s110 = sld [smem:[#allocation4 + $0x4f]]
    %s111 = sld [smem:[#allocation4 + $0x50]]
    %s112 = sld [smem:[#allocation4 + $0x51]]
    %s113 = sld [smem:[#allocation4 + $0x52]]
    %s114 = sld [smem:[#allocation4 + $0x53]]
    %s115 = sld [smem:[#allocation4 + $0x54]]
    %s116 = sld [smem:[#allocation4 + $0x55]]
    %s117 = sld [smem:[#allocation4 + $0x56]]
    %s118 = sld [smem:[#allocation4 + $0x57]]
    %s119 = sld [smem:[#allocation4 + $0x58]]
    %s120 = sld [smem:[#allocation4 + $0x59]]
    %s121 = sld [smem:[#allocation4 + $0x5a]]
    %s122 = sld [smem:[#allocation4 + $0x5b]]
    %s123 = sld [smem:[#allocation4 + $0x5c]]
    %s124 = sld [smem:[#allocation4 + $0x5d]]
    %s125 = sld [smem:[#allocation4 + $0x5e]]
    %s126 = sld [smem:[#allocation4 + $0x5f]]
    %s127 = sld [smem:[#allocation4 + $0x60]]
    %s128 = sld [smem:[#allocation4 + $0x61]]
    %s129 = sld [smem:[#allocation3]]
    %vm130 = vcmask 1041408
    %vm131 = vcmask 1043458
    %vm132 = vmor %vm131, %vm130
    %vm133 = vcmask 832516
    %vm134 = vmor %vm133, %vm132
    %135 = vst.msk [vmem:[#allocation2] sm:$0x3f] %vm134, 0.0
    %s136 = smul.u32 0, 2
    %s137 = smul.addr %s136, 8
    %s138 = scalar_lea.vmem %s3, %s137
    %v139 = vld [vmem:[%s138] sm:$0xff]
    %v140 = vld [vmem:[%s138 + $0x8] sm:$0xff]
    %v141 = vadd.f32 %v139, 0.0
    %v142 = vadd.f32 %v140, 0.0
    %s143 = smul.u32 1, 2
    %s144 = smul.addr %s143, 8
    %s145 = scalar_lea.vmem %s3, %s144
    %v146 = vld [vmem:[%s145] sm:$0xff]
    %v147 = vld [vmem:[%s145 + $0x8] sm:$0xff]
    %v148 = vmax.f32 %v139, %v146
    %v149 = vmax.f32 %v140, %v147
    %v150 = vadd.f32 %v141, %v146
    %v151 = vadd.f32 %v142, %v147
    %s152 = smul.u32 2, 2
    %s153 = smul.addr %s152, 8
    %s154 = scalar_lea.vmem %s3, %s153
    %v155 = vld [vmem:[%s154] sm:$0xff]
    %v156 = vld [vmem:[%s154 + $0x8] sm:$0xff]
    %v157 = vmax.f32 %v148, %v155
    %v158 = vmax.f32 %v149, %v156
    %v159 = vadd.f32 %v150, %v155
    %v160 = vadd.f32 %v151, %v156
    %s161 = smul.u32 3, 2
    %s162 = smul.addr %s161, 8
    %s163 = scalar_lea.vmem %s3, %s162
    %v164 = vld [vmem:[%s163] sm:$0xff]
    %v165 = vld [vmem:[%s163 + $0x8] sm:$0xff]
    %v166 = vmax.f32 %v157, %v164
    %v167 = vmax.f32 %v158, %v165
    %v168 = vadd.f32 %v159, %v164
    %v169 = vadd.f32 %v160, %v165
    %v170 = vrot.slane %v166, 4
    %v171 = vmax.f32 %v166, %v170
    %v172 = vrot.slane %v171, 2
    %v173 = vmax.f32 %v171, %v172
    %v174 = vrot.slane %v173, 1
    %v175 = vmax.f32 %v173, %v174
    %v176 = vrot.slane %v167, 4
    %v177 = vmax.f32 %v167, %v176
    %v178 = vrot.slane %v177, 2
    %v179 = vmax.f32 %v177, %v178
    %v180 = vrot.slane %v179, 1
    %v181 = vmax.f32 %v179, %v180
    %v182 = vrot.slane %v168, 4
    %v183 = vadd.f32 %v168, %v182
    %v184 = vrot.slane %v183, 2
    %v185 = vadd.f32 %v183, %v184
    %v186 = vrot.slane %v185, 1
    %v187 = vadd.f32 %v185, %v186
    %v188 = vrot.slane %v169, 4
    %v189 = vadd.f32 %v169, %v188
    %v190 = vrot.slane %v189, 2
    %v191 = vadd.f32 %v189, %v190
    %v192 = vrot.slane %v191, 1
    %v193 = vadd.f32 %v191, %v192
    %v194 = vld [vmem:[%s3 + $0x40] sm:$0xf]
    %v195 = vld [vmem:[%s3 + $0x48] sm:$0xf]
    %vm196 = vcmask 1043456
    %v197 = vsel %vm196, %v194, -inf
    %v198 = vrot.slane %v197, 4
    %v199 = vmax.f32 %v197, %v198
    %v200 = vrot.slane %v199, 2
    %v201 = vmax.f32 %v199, %v200
    %v202 = vrot.slane %v201, 1
    %v203 = vmax.f32 %v201, %v202
    %v204 = vsel %vm196, %v195, -inf
    %v205 = vrot.slane %v204, 4
    %v206 = vmax.f32 %v204, %v205
    %v207 = vrot.slane %v206, 2
    %v208 = vmax.f32 %v206, %v207
    %v209 = vrot.slane %v208, 1
    %v210 = vmax.f32 %v208, %v209
    %v211 = vmax.f32 %v175, %v203
    %v212 = vmax.f32 %v181, %v210
    %v213 = vsel %vm196, %v194, 0.0
    %v214 = vrot.slane %v213, 4
    %v215 = vadd.f32 %v213, %v214
    %v216 = vrot.slane %v215, 2
    %v217 = vadd.f32 %v215, %v216
    %v218 = vrot.slane %v217, 1
    %v219 = vadd.f32 %v217, %v218
    %v220 = vsel %vm196, %v195, 0.0
    %v221 = vrot.slane %v220, 4
    %v222 = vadd.f32 %v220, %v221
    %v223 = vrot.slane %v222, 2
    %v224 = vadd.f32 %v222, %v223
    %v225 = vrot.slane %v224, 1
    %v226 = vadd.f32 %v224, %v225
    %v227 = vadd.f32 %v187, %v219
    %v228 = vadd.f32 %v193, %v226
    %v229 = vmul.f32 %v227, 0.027777778
    %v230 = vmul.f32 %v228, 0.027777778
    %v233 = vcombine.low %v211, %v212
    %v235 = vunpack.c.l.s4 1966171168
    %v236 = vunpack.c.0.s8 %v235
    %v237 = vlaneseq
    %v238 = vshrl.u32 %v237, 7
    %v239 = vsub.s32 %v236, %v238
    %v240 = vrot.slane %v233, %v239
    %v242 = vunpack.c.l.s4 1966171168
    %v243 = vunpack.c.0.s8 %v242
    %v244 = vlaneseq
    %v245 = vshrl.u32 %v244, 7
    %v246 = vsub.s32 %v243, %v245
    %v247 = vrot.slane %v240, %v246
    %248 = vrot.lane.b32.xlu0 %v247, 51
    %v249 = vpop.permute.xlu0 %248
    %v250 = vrot.slane %v249, 7
    %vm251 = vcmask 416768
    %v252 = vsel %vm251, %v250, %v249
    %v254 = vlaneseq
    %vm255 = vcmp.ge.s32.totalorder %v254, 51
    %vm256 = vcmp.lt.s32.totalorder %v254, 307
    %vm257 = vmand %vm255, %vm256
    %258 = vst.msk [vmem:[#allocation2] ss:$2 sm:$0x7] %vm257, %v252
    %v261 = vcombine.low %v229, %v230
    %v263 = vunpack.c.l.s4 1966171168
    %v264 = vunpack.c.0.s8 %v263
    %v265 = vlaneseq
    %v266 = vshrl.u32 %v265, 7
    %v267 = vsub.s32 %v264, %v266
    %v268 = vrot.slane %v261, %v267
    %v270 = vunpack.c.l.s4 1966171168
    %v271 = vunpack.c.0.s8 %v270
    %v272 = vlaneseq
    %v273 = vshrl.u32 %v272, 7
    %v274 = vsub.s32 %v271, %v273
    %v275 = vrot.slane %v268, %v274
    %276 = vrot.lane.b32.xlu0 %v275, 51
    %v277 = vpop.permute.xlu0 %276
    %v278 = vrot.slane %v277, 7
    %v279 = vsel %vm251, %v278, %v277
    %s281 = scalar_lea.vmem [#allocation2], 1
    %282 = vst.msk [vmem:[%s281] ss:$2 sm:$0x7] %vm257, %v279
    %v283 = vstv %s129
    %v284 = vld [vmem:[#allocation2] ss:$2 sm:$0x3]
    %v285 = vstv %s31
    %v286 = vmul.f32 %v285, %v284
    %v287 = vld [vmem:[#allocation2] ss:$2 sm:$0x7]
    %v288 = vstv %s38
    %v289 = vmul.f32 %v288, %v287
    %291 = vrot.lane.b32.xlu0 %v289, 112
    %v292 = vpop.permute.xlu0 %291
    %v293 = vrot.slane %v292, 1
    %vm294 = vcmask 916480
    %v295 = vsel %vm294, %v292, %v293
    %v297 = vadd.f32 %v286, %v295
    %v298 = vstv %s45
    %v299 = vmul.f32 %v298, %v287
    %301 = vrot.lane.b32.xlu0 %v299, 96
    %v302 = vpop.permute.xlu0 %301
    %v303 = vrot.slane %v302, 1
    %vm304 = vcmask 785408
    %v305 = vsel %vm304, %v302, %v303
    %v307 = vadd.f32 %v297, %v305
    %v308 = vstv %s52
    %v309 = vmul.f32 %v308, %v287
    %311 = vrot.lane.b32.xlu0 %v309, 80
    %v312 = vpop.permute.xlu0 %311
    %v313 = vrot.slane %v312, 1
    %vm314 = vcmask 654336
    %v315 = vsel %vm314, %v312, %v313
    %v317 = vadd.f32 %v307, %v315
    %v318 = vstv %s59
    %v319 = vmul.f32 %v318, %v287
    %321 = vrot.lane.b32.xlu0 %v319, 64
    %v322 = vpop.permute.xlu0 %321
    %v323 = vrot.slane %v322, 1
    %vm324 = vcmask 523264
    %v325 = vsel %vm324, %v322, %v323
    %v327 = vadd.f32 %v317, %v325
    %v328 = vstv %s66
    %v329 = vmul.f32 %v328, %v287
    %331 = vrot.lane.b32.xlu0 %v329, 48
    %v332 = vpop.permute.xlu0 %331
    %v333 = vrot.slane %v332, 1
    %vm334 = vcmask 392192
    %v335 = vsel %vm334, %v332, %v333
    %v337 = vadd.f32 %v327, %v335
    %v338 = vstv %s73
    %v339 = vmul.f32 %v338, %v287
    %341 = vrot.lane.b32.xlu0 %v339, 32
    %v342 = vpop.permute.xlu0 %341
    %v343 = vrot.slane %v342, 1
    %vm344 = vcmask 261120
    %v345 = vsel %vm344, %v342, %v343
    %v347 = vadd.f32 %v337, %v345
    %v348 = vld [vmem:[%s281] ss:$2 sm:$0x3]
    %v349 = vstv %s80
    %v350 = vmul.f32 %v349, %v348
    %v351 = vadd.f32 %v347, %v350
    %v352 = vld [vmem:[%s281] ss:$2 sm:$0x7]
    %v353 = vstv %s87
    %v354 = vmul.f32 %v353, %v352
    %356 = vrot.lane.b32.xlu0 %v354, 112
    %v357 = vpop.permute.xlu0 %356
    %v358 = vrot.slane %v357, 1
    %v359 = vsel %vm294, %v357, %v358
    %v361 = vadd.f32 %v351, %v359
    %v362 = vstv %s94
    %v363 = vmul.f32 %v362, %v352
    %365 = vrot.lane.b32.xlu0 %v363, 96
    %v366 = vpop.permute.xlu0 %365
    %v367 = vrot.slane %v366, 1
    %v368 = vsel %vm304, %v366, %v367
    %v370 = vadd.f32 %v361, %v368
    %v371 = vstv %s101
    %v372 = vmul.f32 %v371, %v352
    %374 = vrot.lane.b32.xlu0 %v372, 80
    %v375 = vpop.permute.xlu0 %374
    %v376 = vrot.slane %v375, 1
    %v377 = vsel %vm314, %v375, %v376
    %v379 = vadd.f32 %v370, %v377
    %v380 = vstv %s108
    %v381 = vmul.f32 %v380, %v352
    %383 = vrot.lane.b32.xlu0 %v381, 64
    %v384 = vpop.permute.xlu0 %383
    %v385 = vrot.slane %v384, 1
    %v386 = vsel %vm324, %v384, %v385
    %v388 = vadd.f32 %v379, %v386
    %v389 = vstv %s115
    %v390 = vmul.f32 %v389, %v352
    %392 = vrot.lane.b32.xlu0 %v390, 48
    %v393 = vpop.permute.xlu0 %392
    %v394 = vrot.slane %v393, 1
    %v395 = vsel %vm334, %v393, %v394
    %v397 = vadd.f32 %v388, %v395
    %v398 = vstv %s122
    %v399 = vmul.f32 %v398, %v352
    %401 = vrot.lane.b32.xlu0 %v399, 32
    %v402 = vpop.permute.xlu0 %401
    %v403 = vrot.slane %v402, 1
    %v404 = vsel %vm344, %v402, %v403
    %v406 = vadd.f32 %v397, %v404
    %v407 = vld [vmem:[%s2] ss:$8 sm:$0x3]
    %v408 = vmul.f32 %v406, %v407
    %v409 = vadd.f32 %v283, %v408
    %v410 = vstv %s32
    %v411 = vmul.f32 %v410, %v287
    %v412 = vstv %s39
    %v413 = vmul.f32 %v412, %v287
    %415 = vrot.lane.b32.xlu0 %v413, 112
    %v416 = vpop.permute.xlu0 %415
    %v417 = vrot.slane %v416, 1
    %v418 = vsel %vm294, %v416, %v417
    %v420 = vadd.f32 %v411, %v418
    %v421 = vstv %s46
    %v422 = vmul.f32 %v421, %v287
    %424 = vrot.lane.b32.xlu0 %v422, 96
    %v425 = vpop.permute.xlu0 %424
    %v426 = vrot.slane %v425, 1
    %v427 = vsel %vm304, %v425, %v426
    %v429 = vadd.f32 %v420, %v427
    %v430 = vstv %s53
    %v431 = vmul.f32 %v430, %v287
    %433 = vrot.lane.b32.xlu0 %v431, 80
    %v434 = vpop.permute.xlu0 %433
    %v435 = vrot.slane %v434, 1
    %v436 = vsel %vm314, %v434, %v435
    %v438 = vadd.f32 %v429, %v436
    %v439 = vstv %s60
    %v440 = vmul.f32 %v439, %v287
    %442 = vrot.lane.b32.xlu0 %v440, 64
    %v443 = vpop.permute.xlu0 %442
    %v444 = vrot.slane %v443, 1
    %v445 = vsel %vm324, %v443, %v444
    %v447 = vadd.f32 %v438, %v445
    %v448 = vstv %s67
    %v449 = vmul.f32 %v448, %v287
    %451 = vrot.lane.b32.xlu0 %v449, 48
    %v452 = vpop.permute.xlu0 %451
    %v453 = vrot.slane %v452, 1
    %v454 = vsel %vm334, %v452, %v453
    %v456 = vadd.f32 %v447, %v454
    %v457 = vstv %s74
    %v458 = vmul.f32 %v457, %v287
    %460 = vrot.lane.b32.xlu0 %v458, 32
    %v461 = vpop.permute.xlu0 %460
    %v462 = vrot.slane %v461, 1
    %v463 = vsel %vm344, %v461, %v462
    %v465 = vadd.f32 %v456, %v463
    %v466 = vstv %s81
    %v467 = vmul.f32 %v466, %v352
    %v468 = vadd.f32 %v465, %v467
    %v469 = vstv %s88
    %v470 = vmul.f32 %v469, %v352
    %472 = vrot.lane.b32.xlu0 %v470, 112
    %v473 = vpop.permute.xlu0 %472
    %v474 = vrot.slane %v473, 1
    %v475 = vsel %vm294, %v473, %v474
    %v477 = vadd.f32 %v468, %v475
    %v478 = vstv %s95
    %v479 = vmul.f32 %v478, %v352
    %481 = vrot.lane.b32.xlu0 %v479, 96
    %v482 = vpop.permute.xlu0 %481
    %v483 = vrot.slane %v482, 1
    %v484 = vsel %vm304, %v482, %v483
    %v486 = vadd.f32 %v477, %v484
    %v487 = vstv %s102
    %v488 = vmul.f32 %v487, %v352
    %490 = vrot.lane.b32.xlu0 %v488, 80
    %v491 = vpop.permute.xlu0 %490
    %v492 = vrot.slane %v491, 1
    %v493 = vsel %vm314, %v491, %v492
    %v495 = vadd.f32 %v486, %v493
    %v496 = vstv %s109
    %v497 = vmul.f32 %v496, %v352
    %499 = vrot.lane.b32.xlu0 %v497, 64
    %v500 = vpop.permute.xlu0 %499
    %v501 = vrot.slane %v500, 1
    %v502 = vsel %vm324, %v500, %v501
    %v504 = vadd.f32 %v495, %v502
    %v505 = vstv %s116
    %v506 = vmul.f32 %v505, %v352
    %508 = vrot.lane.b32.xlu0 %v506, 48
    %v509 = vpop.permute.xlu0 %508
    %v510 = vrot.slane %v509, 1
    %v511 = vsel %vm334, %v509, %v510
    %v513 = vadd.f32 %v504, %v511
    %v514 = vstv %s123
    %v515 = vmul.f32 %v514, %v352
    %517 = vrot.lane.b32.xlu0 %v515, 32
    %v518 = vpop.permute.xlu0 %517
    %v519 = vrot.slane %v518, 1
    %v520 = vsel %vm344, %v518, %v519
    %v522 = vadd.f32 %v513, %v520
    %s523 = scalar_lea.vmem %s2, 1
    %v524 = vld [vmem:[%s523] ss:$8 sm:$0x3]
    %526 = vrot.lane.b32.xlu0 %v524, 1
    %v527 = vpop.permute.xlu0 %526
    %v528 = vrot.slane %v527, 7
    %vm529 = vcmask 7168
    %v530 = vsel %vm529, %v528, %v527
    %v532 = vmul.f32 %v522, %v530
    %534 = vrot.lane.b32.xlu0 %v532, 127
    %v535 = vpop.permute.xlu0 %534
    %v536 = vrot.slane %v535, 1
    %vm537 = vcmask 1039360
    %v538 = vsel %vm537, %v535, %v536
    %v540 = vadd.f32 %v409, %v538
    %v541 = vstv %s33
    %v542 = vmul.f32 %v541, %v287
    %v543 = vstv %s40
    %v544 = vmul.f32 %v543, %v287
    %546 = vrot.lane.b32.xlu0 %v544, 112
    %v547 = vpop.permute.xlu0 %546
    %v548 = vrot.slane %v547, 1
    %v549 = vsel %vm294, %v547, %v548
    %v551 = vadd.f32 %v542, %v549
    %v552 = vstv %s47
    %v553 = vmul.f32 %v552, %v287
    %555 = vrot.lane.b32.xlu0 %v553, 96
    %v556 = vpop.permute.xlu0 %555
    %v557 = vrot.slane %v556, 1
    %v558 = vsel %vm304, %v556, %v557
    %v560 = vadd.f32 %v551, %v558
    %v561 = vstv %s54
    %v562 = vmul.f32 %v561, %v287
    %564 = vrot.lane.b32.xlu0 %v562, 80
    %v565 = vpop.permute.xlu0 %564
    %v566 = vrot.slane %v565, 1
    %v567 = vsel %vm314, %v565, %v566
    %v569 = vadd.f32 %v560, %v567
    %v570 = vstv %s61
    %v571 = vmul.f32 %v570, %v287
    %573 = vrot.lane.b32.xlu0 %v571, 64
    %v574 = vpop.permute.xlu0 %573
    %v575 = vrot.slane %v574, 1
    %v576 = vsel %vm324, %v574, %v575
    %v578 = vadd.f32 %v569, %v576
    %v579 = vstv %s68
    %v580 = vmul.f32 %v579, %v287
    %582 = vrot.lane.b32.xlu0 %v580, 48
    %v583 = vpop.permute.xlu0 %582
    %v584 = vrot.slane %v583, 1
    %v585 = vsel %vm334, %v583, %v584
    %v587 = vadd.f32 %v578, %v585
    %v588 = vstv %s75
    %v589 = vmul.f32 %v588, %v287
    %591 = vrot.lane.b32.xlu0 %v589, 32
    %v592 = vpop.permute.xlu0 %591
    %v593 = vrot.slane %v592, 1
    %v594 = vsel %vm344, %v592, %v593
    %v596 = vadd.f32 %v587, %v594
    %v597 = vstv %s82
    %v598 = vmul.f32 %v597, %v352
    %v599 = vadd.f32 %v596, %v598
    %v600 = vstv %s89
    %v601 = vmul.f32 %v600, %v352
    %603 = vrot.lane.b32.xlu0 %v601, 112
    %v604 = vpop.permute.xlu0 %603
    %v605 = vrot.slane %v604, 1
    %v606 = vsel %vm294, %v604, %v605
    %v608 = vadd.f32 %v599, %v606
    %v609 = vstv %s96
    %v610 = vmul.f32 %v609, %v352
    %612 = vrot.lane.b32.xlu0 %v610, 96
    %v613 = vpop.permute.xlu0 %612
    %v614 = vrot.slane %v613, 1
    %v615 = vsel %vm304, %v613, %v614
    %v617 = vadd.f32 %v608, %v615
    %v618 = vstv %s103
    %v619 = vmul.f32 %v618, %v352
    %621 = vrot.lane.b32.xlu0 %v619, 80
    %v622 = vpop.permute.xlu0 %621
    %v623 = vrot.slane %v622, 1
    %v624 = vsel %vm314, %v622, %v623
    %v626 = vadd.f32 %v617, %v624
    %v627 = vstv %s110
    %v628 = vmul.f32 %v627, %v352
    %630 = vrot.lane.b32.xlu0 %v628, 64
    %v631 = vpop.permute.xlu0 %630
    %v632 = vrot.slane %v631, 1
    %v633 = vsel %vm324, %v631, %v632
    %v635 = vadd.f32 %v626, %v633
    %v636 = vstv %s117
    %v637 = vmul.f32 %v636, %v352
    %639 = vrot.lane.b32.xlu0 %v637, 48
    %v640 = vpop.permute.xlu0 %639
    %v641 = vrot.slane %v640, 1
    %v642 = vsel %vm334, %v640, %v641
    %v644 = vadd.f32 %v635, %v642
    %v645 = vstv %s124
    %v646 = vmul.f32 %v645, %v352
    %648 = vrot.lane.b32.xlu0 %v646, 32
    %v649 = vpop.permute.xlu0 %648
    %v650 = vrot.slane %v649, 1
    %v651 = vsel %vm344, %v649, %v650
    %v653 = vadd.f32 %v644, %v651
    %s654 = scalar_lea.vmem %s2, 2
    %v655 = vld [vmem:[%s654] ss:$8 sm:$0x3]
    %657 = vrot.lane.b32.xlu0 %v655, 2
    %v658 = vpop.permute.xlu0 %657
    %v659 = vrot.slane %v658, 7
    %vm660 = vcmask 15360
    %v661 = vsel %vm660, %v659, %v658
    %v663 = vmul.f32 %v653, %v661
    %665 = vrot.lane.b32.xlu0 %v663, 126
    %v666 = vpop.permute.xlu0 %665
    %v667 = vrot.slane %v666, 1
    %vm668 = vcmask 1031168
    %v669 = vsel %vm668, %v666, %v667
    %v671 = vadd.f32 %v540, %v669
    %v672 = vstv %s34
    %v673 = vmul.f32 %v672, %v287
    %v674 = vstv %s41
    %v675 = vmul.f32 %v674, %v287
    %677 = vrot.lane.b32.xlu0 %v675, 112
    %v678 = vpop.permute.xlu0 %677
    %v679 = vrot.slane %v678, 1
    %v680 = vsel %vm294, %v678, %v679
    %v682 = vadd.f32 %v673, %v680
    %v683 = vstv %s48
    %v684 = vmul.f32 %v683, %v287
    %686 = vrot.lane.b32.xlu0 %v684, 96
    %v687 = vpop.permute.xlu0 %686
    %v688 = vrot.slane %v687, 1
    %v689 = vsel %vm304, %v687, %v688
    %v691 = vadd.f32 %v682, %v689
    %v692 = vstv %s55
    %v693 = vmul.f32 %v692, %v287
    %695 = vrot.lane.b32.xlu0 %v693, 80
    %v696 = vpop.permute.xlu0 %695
    %v697 = vrot.slane %v696, 1
    %v698 = vsel %vm314, %v696, %v697
    %v700 = vadd.f32 %v691, %v698
    %v701 = vstv %s62
    %v702 = vmul.f32 %v701, %v287
    %704 = vrot.lane.b32.xlu0 %v702, 64
    %v705 = vpop.permute.xlu0 %704
    %v706 = vrot.slane %v705, 1
    %v707 = vsel %vm324, %v705, %v706
    %v709 = vadd.f32 %v700, %v707
    %v710 = vstv %s69
    %v711 = vmul.f32 %v710, %v287
    %713 = vrot.lane.b32.xlu0 %v711, 48
    %v714 = vpop.permute.xlu0 %713
    %v715 = vrot.slane %v714, 1
    %v716 = vsel %vm334, %v714, %v715
    %v718 = vadd.f32 %v709, %v716
    %v719 = vstv %s76
    %v720 = vmul.f32 %v719, %v287
    %722 = vrot.lane.b32.xlu0 %v720, 32
    %v723 = vpop.permute.xlu0 %722
    %v724 = vrot.slane %v723, 1
    %v725 = vsel %vm344, %v723, %v724
    %v727 = vadd.f32 %v718, %v725
    %v728 = vstv %s83
    %v729 = vmul.f32 %v728, %v352
    %v730 = vadd.f32 %v727, %v729
    %v731 = vstv %s90
    %v732 = vmul.f32 %v731, %v352
    %734 = vrot.lane.b32.xlu0 %v732, 112
    %v735 = vpop.permute.xlu0 %734
    %v736 = vrot.slane %v735, 1
    %v737 = vsel %vm294, %v735, %v736
    %v739 = vadd.f32 %v730, %v737
    %v740 = vstv %s97
    %v741 = vmul.f32 %v740, %v352
    %743 = vrot.lane.b32.xlu0 %v741, 96
    %v744 = vpop.permute.xlu0 %743
    %v745 = vrot.slane %v744, 1
    %v746 = vsel %vm304, %v744, %v745
    %v748 = vadd.f32 %v739, %v746
    %v749 = vstv %s104
    %v750 = vmul.f32 %v749, %v352
    %752 = vrot.lane.b32.xlu0 %v750, 80
    %v753 = vpop.permute.xlu0 %752
    %v754 = vrot.slane %v753, 1
    %v755 = vsel %vm314, %v753, %v754
    %v757 = vadd.f32 %v748, %v755
    %v758 = vstv %s111
    %v759 = vmul.f32 %v758, %v352
    %761 = vrot.lane.b32.xlu0 %v759, 64
    %v762 = vpop.permute.xlu0 %761
    %v763 = vrot.slane %v762, 1
    %v764 = vsel %vm324, %v762, %v763
    %v766 = vadd.f32 %v757, %v764
    %v767 = vstv %s118
    %v768 = vmul.f32 %v767, %v352
    %770 = vrot.lane.b32.xlu0 %v768, 48
    %v771 = vpop.permute.xlu0 %770
    %v772 = vrot.slane %v771, 1
    %v773 = vsel %vm334, %v771, %v772
    %v775 = vadd.f32 %v766, %v773
    %v776 = vstv %s125
    %v777 = vmul.f32 %v776, %v352
    %779 = vrot.lane.b32.xlu0 %v777, 32
    %v780 = vpop.permute.xlu0 %779
    %v781 = vrot.slane %v780, 1
    %v782 = vsel %vm344, %v780, %v781
    %v784 = vadd.f32 %v775, %v782
    %s785 = scalar_lea.vmem %s2, 3
    %v786 = vld [vmem:[%s785] ss:$8 sm:$0x3]
    %788 = vrot.lane.b32.xlu0 %v786, 3
    %v789 = vpop.permute.xlu0 %788
    %v790 = vrot.slane %v789, 7
    %vm791 = vcmask 23552
    %v792 = vsel %vm791, %v790, %v789
    %v794 = vmul.f32 %v784, %v792
    %796 = vrot.lane.b32.xlu0 %v794, 125
    %v797 = vpop.permute.xlu0 %796
    %v798 = vrot.slane %v797, 1
    %vm799 = vcmask 1022976
    %v800 = vsel %vm799, %v797, %v798
    %v802 = vadd.f32 %v671, %v800
    %v803 = vstv %s35
    %v804 = vmul.f32 %v803, %v287
    %v805 = vstv %s42
    %v806 = vmul.f32 %v805, %v287
    %808 = vrot.lane.b32.xlu0 %v806, 112
    %v809 = vpop.permute.xlu0 %808
    %v810 = vrot.slane %v809, 1
    %v811 = vsel %vm294, %v809, %v810
    %v813 = vadd.f32 %v804, %v811
    %v814 = vstv %s49
    %v815 = vmul.f32 %v814, %v287
    %817 = vrot.lane.b32.xlu0 %v815, 96
    %v818 = vpop.permute.xlu0 %817
    %v819 = vrot.slane %v818, 1
    %v820 = vsel %vm304, %v818, %v819
    %v822 = vadd.f32 %v813, %v820
    %v823 = vstv %s56
    %v824 = vmul.f32 %v823, %v287
    %826 = vrot.lane.b32.xlu0 %v824, 80
    %v827 = vpop.permute.xlu0 %826
    %v828 = vrot.slane %v827, 1
    %v829 = vsel %vm314, %v827, %v828
    %v831 = vadd.f32 %v822, %v829
    %v832 = vstv %s63
    %v833 = vmul.f32 %v832, %v287
    %835 = vrot.lane.b32.xlu0 %v833, 64
    %v836 = vpop.permute.xlu0 %835
    %v837 = vrot.slane %v836, 1
    %v838 = vsel %vm324, %v836, %v837
    %v840 = vadd.f32 %v831, %v838
    %v841 = vstv %s70
    %v842 = vmul.f32 %v841, %v287
    %844 = vrot.lane.b32.xlu0 %v842, 48
    %v845 = vpop.permute.xlu0 %844
    %v846 = vrot.slane %v845, 1
    %v847 = vsel %vm334, %v845, %v846
    %v849 = vadd.f32 %v840, %v847
    %v850 = vstv %s77
    %v851 = vmul.f32 %v850, %v287
    %853 = vrot.lane.b32.xlu0 %v851, 32
    %v854 = vpop.permute.xlu0 %853
    %v855 = vrot.slane %v854, 1
    %v856 = vsel %vm344, %v854, %v855
    %v858 = vadd.f32 %v849, %v856
    %v859 = vstv %s84
    %v860 = vmul.f32 %v859, %v352
    %v861 = vadd.f32 %v858, %v860
    %v862 = vstv %s91
    %v863 = vmul.f32 %v862, %v352
    %865 = vrot.lane.b32.xlu0 %v863, 112
    %v866 = vpop.permute.xlu0 %865
    %v867 = vrot.slane %v866, 1
    %v868 = vsel %vm294, %v866, %v867
    %v870 = vadd.f32 %v861, %v868
    %v871 = vstv %s98
    %v872 = vmul.f32 %v871, %v352
    %874 = vrot.lane.b32.xlu0 %v872, 96
    %v875 = vpop.permute.xlu0 %874
    %v876 = vrot.slane %v875, 1
    %v877 = vsel %vm304, %v875, %v876
    %v879 = vadd.f32 %v870, %v877
    %v880 = vstv %s105
    %v881 = vmul.f32 %v880, %v352
    %883 = vrot.lane.b32.xlu0 %v881, 80
    %v884 = vpop.permute.xlu0 %883
    %v885 = vrot.slane %v884, 1
    %v886 = vsel %vm314, %v884, %v885
    %v888 = vadd.f32 %v879, %v886
    %v889 = vstv %s112
    %v890 = vmul.f32 %v889, %v352
    %892 = vrot.lane.b32.xlu0 %v890, 64
    %v893 = vpop.permute.xlu0 %892
    %v894 = vrot.slane %v893, 1
    %v895 = vsel %vm324, %v893, %v894
    %v897 = vadd.f32 %v888, %v895
    %v898 = vstv %s119
    %v899 = vmul.f32 %v898, %v352
    %901 = vrot.lane.b32.xlu0 %v899, 48
    %v902 = vpop.permute.xlu0 %901
    %v903 = vrot.slane %v902, 1
    %v904 = vsel %vm334, %v902, %v903
    %v906 = vadd.f32 %v897, %v904
    %v907 = vstv %s126
    %v908 = vmul.f32 %v907, %v352
    %910 = vrot.lane.b32.xlu0 %v908, 32
    %v911 = vpop.permute.xlu0 %910
    %v912 = vrot.slane %v911, 1
    %v913 = vsel %vm344, %v911, %v912
    %v915 = vadd.f32 %v906, %v913
    %s916 = scalar_lea.vmem %s2, 4
    %v917 = vld [vmem:[%s916] ss:$8 sm:$0x3]
    %919 = vrot.lane.b32.xlu0 %v917, 4
    %v920 = vpop.permute.xlu0 %919
    %v921 = vrot.slane %v920, 7
    %vm922 = vcmask 31744
    %v923 = vsel %vm922, %v921, %v920
    %v925 = vmul.f32 %v915, %v923
    %927 = vrot.lane.b32.xlu0 %v925, 124
    %v928 = vpop.permute.xlu0 %927
    %v929 = vrot.slane %v928, 1
    %vm930 = vcmask 1014784
    %v931 = vsel %vm930, %v928, %v929
    %v933 = vadd.f32 %v802, %v931
    %v934 = vstv %s36
    %v935 = vmul.f32 %v934, %v287
    %v936 = vstv %s43
    %v937 = vmul.f32 %v936, %v287
    %939 = vrot.lane.b32.xlu0 %v937, 112
    %v940 = vpop.permute.xlu0 %939
    %v941 = vrot.slane %v940, 1
    %v942 = vsel %vm294, %v940, %v941
    %v944 = vadd.f32 %v935, %v942
    %v945 = vstv %s50
    %v946 = vmul.f32 %v945, %v287
    %948 = vrot.lane.b32.xlu0 %v946, 96
    %v949 = vpop.permute.xlu0 %948
    %v950 = vrot.slane %v949, 1
    %v951 = vsel %vm304, %v949, %v950
    %v953 = vadd.f32 %v944, %v951
    %v954 = vstv %s57
    %v955 = vmul.f32 %v954, %v287
    %957 = vrot.lane.b32.xlu0 %v955, 80
    %v958 = vpop.permute.xlu0 %957
    %v959 = vrot.slane %v958, 1
    %v960 = vsel %vm314, %v958, %v959
    %v962 = vadd.f32 %v953, %v960
    %v963 = vstv %s64
    %v964 = vmul.f32 %v963, %v287
    %966 = vrot.lane.b32.xlu0 %v964, 64
    %v967 = vpop.permute.xlu0 %966
    %v968 = vrot.slane %v967, 1
    %v969 = vsel %vm324, %v967, %v968
    %v971 = vadd.f32 %v962, %v969
    %v972 = vstv %s71
    %v973 = vmul.f32 %v972, %v287
    %975 = vrot.lane.b32.xlu0 %v973, 48
    %v976 = vpop.permute.xlu0 %975
    %v977 = vrot.slane %v976, 1
    %v978 = vsel %vm334, %v976, %v977
    %v980 = vadd.f32 %v971, %v978
    %v981 = vstv %s78
    %v982 = vmul.f32 %v981, %v287
    %984 = vrot.lane.b32.xlu0 %v982, 32
    %v985 = vpop.permute.xlu0 %984
    %v986 = vrot.slane %v985, 1
    %v987 = vsel %vm344, %v985, %v986
    %v989 = vadd.f32 %v980, %v987
    %v990 = vstv %s85
    %v991 = vmul.f32 %v990, %v352
    %v992 = vadd.f32 %v989, %v991
    %v993 = vstv %s92
    %v994 = vmul.f32 %v993, %v352
    %996 = vrot.lane.b32.xlu0 %v994, 112
    %v997 = vpop.permute.xlu0 %996
    %v998 = vrot.slane %v997, 1
    %v999 = vsel %vm294, %v997, %v998
    %v1001 = vadd.f32 %v992, %v999
    %v1002 = vstv %s99
    %v1003 = vmul.f32 %v1002, %v352
    %1005 = vrot.lane.b32.xlu0 %v1003, 96
    %v1006 = vpop.permute.xlu0 %1005
    %v1007 = vrot.slane %v1006, 1
    %v1008 = vsel %vm304, %v1006, %v1007
    %v1010 = vadd.f32 %v1001, %v1008
    %v1011 = vstv %s106
    %v1012 = vmul.f32 %v1011, %v352
    %1014 = vrot.lane.b32.xlu0 %v1012, 80
    %v1015 = vpop.permute.xlu0 %1014
    %v1016 = vrot.slane %v1015, 1
    %v1017 = vsel %vm314, %v1015, %v1016
    %v1019 = vadd.f32 %v1010, %v1017
    %v1020 = vstv %s113
    %v1021 = vmul.f32 %v1020, %v352
    %1023 = vrot.lane.b32.xlu0 %v1021, 64
    %v1024 = vpop.permute.xlu0 %1023
    %v1025 = vrot.slane %v1024, 1
    %v1026 = vsel %vm324, %v1024, %v1025
    %v1028 = vadd.f32 %v1019, %v1026
    %v1029 = vstv %s120
    %v1030 = vmul.f32 %v1029, %v352
    %1032 = vrot.lane.b32.xlu0 %v1030, 48
    %v1033 = vpop.permute.xlu0 %1032
    %v1034 = vrot.slane %v1033, 1
    %v1035 = vsel %vm334, %v1033, %v1034
    %v1037 = vadd.f32 %v1028, %v1035
    %v1038 = vstv %s127
    %v1039 = vmul.f32 %v1038, %v352
    %1041 = vrot.lane.b32.xlu0 %v1039, 32
    %v1042 = vpop.permute.xlu0 %1041
    %v1043 = vrot.slane %v1042, 1
    %v1044 = vsel %vm344, %v1042, %v1043
    %v1046 = vadd.f32 %v1037, %v1044
    %s1047 = scalar_lea.vmem %s2, 5
    %v1048 = vld [vmem:[%s1047] ss:$8 sm:$0x3]
    %1050 = vrot.lane.b32.xlu0 %v1048, 5
    %v1051 = vpop.permute.xlu0 %1050
    %v1052 = vrot.slane %v1051, 7
    %vm1053 = vcmask 39936
    %v1054 = vsel %vm1053, %v1052, %v1051
    %v1056 = vmul.f32 %v1046, %v1054
    %1058 = vrot.lane.b32.xlu0 %v1056, 123
    %v1059 = vpop.permute.xlu0 %1058
    %v1060 = vrot.slane %v1059, 1
    %vm1061 = vcmask 1006592
    %v1062 = vsel %vm1061, %v1059, %v1060
    %v1064 = vadd.f32 %v933, %v1062
    %v1065 = vstv %s37
    %v1066 = vmul.f32 %v1065, %v287
    %v1067 = vstv %s44
    %v1068 = vmul.f32 %v1067, %v287
    %1070 = vrot.lane.b32.xlu0 %v1068, 112
    %v1071 = vpop.permute.xlu0 %1070
    %v1072 = vrot.slane %v1071, 1
    %v1073 = vsel %vm294, %v1071, %v1072
    %v1075 = vadd.f32 %v1066, %v1073
    %v1076 = vstv %s51
    %v1077 = vmul.f32 %v1076, %v287
    %1079 = vrot.lane.b32.xlu0 %v1077, 96
    %v1080 = vpop.permute.xlu0 %1079
    %v1081 = vrot.slane %v1080, 1
    %v1082 = vsel %vm304, %v1080, %v1081
    %v1084 = vadd.f32 %v1075, %v1082
    %v1085 = vstv %s58
    %v1086 = vmul.f32 %v1085, %v287
    %1088 = vrot.lane.b32.xlu0 %v1086, 80
    %v1089 = vpop.permute.xlu0 %1088
    %v1090 = vrot.slane %v1089, 1
    %v1091 = vsel %vm314, %v1089, %v1090
    %v1093 = vadd.f32 %v1084, %v1091
    %v1094 = vstv %s65
    %v1095 = vmul.f32 %v1094, %v287
    %1097 = vrot.lane.b32.xlu0 %v1095, 64
    %v1098 = vpop.permute.xlu0 %1097
    %v1099 = vrot.slane %v1098, 1
    %v1100 = vsel %vm324, %v1098, %v1099
    %v1102 = vadd.f32 %v1093, %v1100
    %v1103 = vstv %s72
    %v1104 = vmul.f32 %v1103, %v287
    %1106 = vrot.lane.b32.xlu0 %v1104, 48
    %v1107 = vpop.permute.xlu0 %1106
    %v1108 = vrot.slane %v1107, 1
    %v1109 = vsel %vm334, %v1107, %v1108
    %v1111 = vadd.f32 %v1102, %v1109
    %v1112 = vstv %s79
    %v1113 = vmul.f32 %v1112, %v287
    %1115 = vrot.lane.b32.xlu0 %v1113, 32
    %v1116 = vpop.permute.xlu0 %1115
    %v1117 = vrot.slane %v1116, 1
    %v1118 = vsel %vm344, %v1116, %v1117
    %v1120 = vadd.f32 %v1111, %v1118
    %v1121 = vstv %s86
    %v1122 = vmul.f32 %v1121, %v352
    %v1123 = vadd.f32 %v1120, %v1122
    %v1124 = vstv %s93
    %v1125 = vmul.f32 %v1124, %v352
    %1127 = vrot.lane.b32.xlu0 %v1125, 112
    %v1128 = vpop.permute.xlu0 %1127
    %v1129 = vrot.slane %v1128, 1
    %v1130 = vsel %vm294, %v1128, %v1129
    %v1132 = vadd.f32 %v1123, %v1130
    %v1133 = vstv %s100
    %v1134 = vmul.f32 %v1133, %v352
    %1136 = vrot.lane.b32.xlu0 %v1134, 96
    %v1137 = vpop.permute.xlu0 %1136
    %v1138 = vrot.slane %v1137, 1
    %v1139 = vsel %vm304, %v1137, %v1138
    %v1141 = vadd.f32 %v1132, %v1139
    %v1142 = vstv %s107
    %v1143 = vmul.f32 %v1142, %v352
    %1145 = vrot.lane.b32.xlu0 %v1143, 80
    %v1146 = vpop.permute.xlu0 %1145
    %v1147 = vrot.slane %v1146, 1
    %v1148 = vsel %vm314, %v1146, %v1147
    %v1150 = vadd.f32 %v1141, %v1148
    %v1151 = vstv %s114
    %v1152 = vmul.f32 %v1151, %v352
    %1154 = vrot.lane.b32.xlu0 %v1152, 64
    %v1155 = vpop.permute.xlu0 %1154
    %v1156 = vrot.slane %v1155, 1
    %v1157 = vsel %vm324, %v1155, %v1156
    %v1159 = vadd.f32 %v1150, %v1157
    %v1160 = vstv %s121
    %v1161 = vmul.f32 %v1160, %v352
    %1163 = vrot.lane.b32.xlu0 %v1161, 48
    %v1164 = vpop.permute.xlu0 %1163
    %v1165 = vrot.slane %v1164, 1
    %v1166 = vsel %vm334, %v1164, %v1165
    %v1168 = vadd.f32 %v1159, %v1166
    %v1169 = vstv %s128
    %v1170 = vmul.f32 %v1169, %v352
    %1172 = vrot.lane.b32.xlu0 %v1170, 32
    %v1173 = vpop.permute.xlu0 %1172
    %v1174 = vrot.slane %v1173, 1
    %v1175 = vsel %vm344, %v1173, %v1174
    %v1177 = vadd.f32 %v1168, %v1175
    %s1178 = scalar_lea.vmem %s2, 6
    %v1179 = vld [vmem:[%s1178] ss:$8 sm:$0x3]
    %1181 = vrot.lane.b32.xlu0 %v1179, 6
    %v1182 = vpop.permute.xlu0 %1181
    %v1183 = vrot.slane %v1182, 7
    %vm1184 = vcmask 48128
    %v1185 = vsel %vm1184, %v1183, %v1182
    %v1187 = vmul.f32 %v1177, %v1185
    %1189 = vrot.lane.b32.xlu0 %v1187, 122
    %v1190 = vpop.permute.xlu0 %1189
    %v1191 = vrot.slane %v1190, 1
    %vm1192 = vcmask 998400
    %v1193 = vsel %vm1192, %v1190, %v1191
    %v1195 = vadd.f32 %v1064, %v1193
    %v1196 = vxor.u32 %v1195, 2147483648
    %v1197 = vmul.f32 %v1196, 1.442695
    %v1198 = vpow.pop %v1197
    %v1199 = vadd.f32 %v1198, 1.0
    %v1200 = vrcp.pop %v1199
    %v1201 = vmul.f32 1.0, %v1200
    %v1203 = vlaneseq
    %v1204 = vshrl.u32 %v1203, 7
    %v1205 = vsub.s32 0, %v1204
    %v1206 = vrot.slane %v1201, %v1205
    %v1207 = vlaneseq
    %v1208 = vshrl.u32 %v1207, 7
    %v1209 = vsub.s32 1, %v1208
    %v1210 = vrot.slane %v1201, %v1209
    %v1213 = vld [vmem:[%s138] sm:$0xff]
    %v1214 = vld [vmem:[%s138 + $0x8] sm:$0xff]
    %v1215 = vmul.f32 %v1213, %v1206
    %v1216 = vmul.f32 %v1214, %v1210
    %s1217 = smul.addr %s136, 8
    %s1218 = scalar_lea.vmem %s4, %s1217
    %1219 = vst [vmem:[%s1218] sm:$0xff] %v1215
    %1220 = vst [vmem:[%s1218 + $0x8] sm:$0xff] %v1216
    %v1221 = vld [vmem:[%s145] sm:$0xff]
    %v1222 = vld [vmem:[%s145 + $0x8] sm:$0xff]
    %v1223 = vmul.f32 %v1221, %v1206
    %v1224 = vmul.f32 %v1222, %v1210
    %s1225 = smul.addr %s143, 8
    %s1226 = scalar_lea.vmem %s4, %s1225
    %1227 = vst [vmem:[%s1226] sm:$0xff] %v1223
    %1228 = vst [vmem:[%s1226 + $0x8] sm:$0xff] %v1224
    %v1229 = vld [vmem:[%s154] sm:$0xff]
    %v1230 = vld [vmem:[%s154 + $0x8] sm:$0xff]
    %v1231 = vmul.f32 %v1229, %v1206
    %v1232 = vmul.f32 %v1230, %v1210
    %s1233 = smul.addr %s152, 8
    %s1234 = scalar_lea.vmem %s4, %s1233
    %1235 = vst [vmem:[%s1234] sm:$0xff] %v1231
    %1236 = vst [vmem:[%s1234 + $0x8] sm:$0xff] %v1232
    %v1237 = vld [vmem:[%s163] sm:$0xff]
    %v1238 = vld [vmem:[%s163 + $0x8] sm:$0xff]
    %v1239 = vmul.f32 %v1237, %v1206
    %v1240 = vmul.f32 %v1238, %v1210
    %s1241 = smul.addr %s161, 8
    %s1242 = scalar_lea.vmem %s4, %s1241
    %1243 = vst [vmem:[%s1242] sm:$0xff] %v1239
    %1244 = vst [vmem:[%s1242 + $0x8] sm:$0xff] %v1240
    %v1245 = vld [vmem:[%s3 + $0x40] sm:$0xf]
    %v1246 = vld [vmem:[%s3 + $0x48] sm:$0xf]
    %v1247 = vmul.f32 %v1245, %v1206
    %v1248 = vmul.f32 %v1246, %v1210
    %1249 = vst [vmem:[%s4 + $0x40] sm:$0xf] %v1247
    %1250 = vst [vmem:[%s4 + $0x48] sm:$0xf] %v1248
    %s1251 = sadd.s32 %s136, 10
    %s1252 = smul.addr %s1251, 8
    %s1253 = scalar_lea.vmem %s3, %s1252
    %v1254 = vld [vmem:[%s1253] sm:$0xff]
    %v1255 = vld [vmem:[%s1253 + $0x8] sm:$0xff]
    %v1256 = vadd.f32 %v1254, 0.0
    %v1257 = vadd.f32 %v1255, 0.0
    %s1258 = sadd.s32 %s143, 10
    %s1259 = smul.addr %s1258, 8
    %s1260 = scalar_lea.vmem %s3, %s1259
    %v1261 = vld [vmem:[%s1260] sm:$0xff]
    %v1262 = vld [vmem:[%s1260 + $0x8] sm:$0xff]
    %v1263 = vmax.f32 %v1254, %v1261
    %v1264 = vmax.f32 %v1255, %v1262
    %v1265 = vadd.f32 %v1256, %v1261
    %v1266 = vadd.f32 %v1257, %v1262
    %s1267 = sadd.s32 %s152, 10
    %s1268 = smul.addr %s1267, 8
    %s1269 = scalar_lea.vmem %s3, %s1268
    %v1270 = vld [vmem:[%s1269] sm:$0xff]
    %v1271 = vld [vmem:[%s1269 + $0x8] sm:$0xff]
    %v1272 = vmax.f32 %v1263, %v1270
    %v1273 = vmax.f32 %v1264, %v1271
    %v1274 = vadd.f32 %v1265, %v1270
    %v1275 = vadd.f32 %v1266, %v1271
    %s1276 = sadd.s32 %s161, 10
    %s1277 = smul.addr %s1276, 8
    %s1278 = scalar_lea.vmem %s3, %s1277
    %v1279 = vld [vmem:[%s1278] sm:$0xff]
    %v1280 = vld [vmem:[%s1278 + $0x8] sm:$0xff]
    %v1281 = vmax.f32 %v1272, %v1279
    %v1282 = vmax.f32 %v1273, %v1280
    %v1283 = vadd.f32 %v1274, %v1279
    %v1284 = vadd.f32 %v1275, %v1280
    %v1285 = vrot.slane %v1281, 4
    %v1286 = vmax.f32 %v1281, %v1285
    %v1287 = vrot.slane %v1286, 2
    %v1288 = vmax.f32 %v1286, %v1287
    %v1289 = vrot.slane %v1288, 1
    %v1290 = vmax.f32 %v1288, %v1289
    %v1291 = vrot.slane %v1282, 4
    %v1292 = vmax.f32 %v1282, %v1291
    %v1293 = vrot.slane %v1292, 2
    %v1294 = vmax.f32 %v1292, %v1293
    %v1295 = vrot.slane %v1294, 1
    %v1296 = vmax.f32 %v1294, %v1295
    %v1297 = vrot.slane %v1283, 4
    %v1298 = vadd.f32 %v1283, %v1297
    %v1299 = vrot.slane %v1298, 2
    %v1300 = vadd.f32 %v1298, %v1299
    %v1301 = vrot.slane %v1300, 1
    %v1302 = vadd.f32 %v1300, %v1301
    %v1303 = vrot.slane %v1284, 4
    %v1304 = vadd.f32 %v1284, %v1303
    %v1305 = vrot.slane %v1304, 2
    %v1306 = vadd.f32 %v1304, %v1305
    %v1307 = vrot.slane %v1306, 1
    %v1308 = vadd.f32 %v1306, %v1307
    %s1309 = scalar_lea.vmem %s3, 80
    %v1310 = vld [vmem:[%s1309 + $0x40] sm:$0xf]
    %v1311 = vld [vmem:[%s1309 + $0x48] sm:$0xf]
    %v1312 = vsel %vm196, %v1310, -inf
    %v1313 = vrot.slane %v1312, 4
    %v1314 = vmax.f32 %v1312, %v1313
    %v1315 = vrot.slane %v1314, 2
    %v1316 = vmax.f32 %v1314, %v1315
    %v1317 = vrot.slane %v1316, 1
    %v1318 = vmax.f32 %v1316, %v1317
    %v1319 = vsel %vm196, %v1311, -inf
    %v1320 = vrot.slane %v1319, 4
    %v1321 = vmax.f32 %v1319, %v1320
    %v1322 = vrot.slane %v1321, 2
    %v1323 = vmax.f32 %v1321, %v1322
    %v1324 = vrot.slane %v1323, 1
    %v1325 = vmax.f32 %v1323, %v1324
    %v1326 = vmax.f32 %v1290, %v1318
    %v1327 = vmax.f32 %v1296, %v1325
    %v1328 = vsel %vm196, %v1310, 0.0
    %v1329 = vrot.slane %v1328, 4
    %v1330 = vadd.f32 %v1328, %v1329
    %v1331 = vrot.slane %v1330, 2
    %v1332 = vadd.f32 %v1330, %v1331
    %v1333 = vrot.slane %v1332, 1
    %v1334 = vadd.f32 %v1332, %v1333
    %v1335 = vsel %vm196, %v1311, 0.0
    %v1336 = vrot.slane %v1335, 4
    %v1337 = vadd.f32 %v1335, %v1336
    %v1338 = vrot.slane %v1337, 2
    %v1339 = vadd.f32 %v1337, %v1338
    %v1340 = vrot.slane %v1339, 1
    %v1341 = vadd.f32 %v1339, %v1340
    %v1342 = vadd.f32 %v1302, %v1334
    %v1343 = vadd.f32 %v1308, %v1341
    %v1344 = vmul.f32 %v1342, 0.027777778
    %v1345 = vmul.f32 %v1343, 0.027777778
    %v1348 = vcombine.low %v1326, %v1327
    %v1350 = vunpack.c.l.s4 1966171168
    %v1351 = vunpack.c.0.s8 %v1350
    %v1352 = vlaneseq
    %v1353 = vshrl.u32 %v1352, 7
    %v1354 = vsub.s32 %v1351, %v1353
    %v1355 = vrot.slane %v1348, %v1354
    %v1357 = vunpack.c.l.s4 1966171168
    %v1358 = vunpack.c.0.s8 %v1357
    %v1359 = vlaneseq
    %v1360 = vshrl.u32 %v1359, 7
    %v1361 = vsub.s32 %v1358, %v1360
    %v1362 = vrot.slane %v1355, %v1361
    %1363 = vrot.lane.b32.xlu0 %v1362, 51
    %v1364 = vpop.permute.xlu0 %1363
    %v1365 = vrot.slane %v1364, 7
    %v1366 = vsel %vm251, %v1365, %v1364
    %1368 = vst.msk [vmem:[#allocation2] ss:$2 sm:$0x7] %vm257, %v1366
    %v1371 = vcombine.low %v1344, %v1345
    %v1373 = vunpack.c.l.s4 1966171168
    %v1374 = vunpack.c.0.s8 %v1373
    %v1375 = vlaneseq
    %v1376 = vshrl.u32 %v1375, 7
    %v1377 = vsub.s32 %v1374, %v1376
    %v1378 = vrot.slane %v1371, %v1377
    %v1380 = vunpack.c.l.s4 1966171168
    %v1381 = vunpack.c.0.s8 %v1380
    %v1382 = vlaneseq
    %v1383 = vshrl.u32 %v1382, 7
    %v1384 = vsub.s32 %v1381, %v1383
    %v1385 = vrot.slane %v1378, %v1384
    %1386 = vrot.lane.b32.xlu0 %v1385, 51
    %v1387 = vpop.permute.xlu0 %1386
    %v1388 = vrot.slane %v1387, 7
    %v1389 = vsel %vm251, %v1388, %v1387
    %1391 = vst.msk [vmem:[%s281] ss:$2 sm:$0x7] %vm257, %v1389
    %v1392 = vld [vmem:[#allocation2] ss:$2 sm:$0x3]
    %v1393 = vmul.f32 %v285, %v1392
    %v1394 = vld [vmem:[#allocation2] ss:$2 sm:$0x7]
    %v1395 = vmul.f32 %v288, %v1394
    %1397 = vrot.lane.b32.xlu0 %v1395, 112
    %v1398 = vpop.permute.xlu0 %1397
    %v1399 = vrot.slane %v1398, 1
    %v1400 = vsel %vm294, %v1398, %v1399
    %v1402 = vadd.f32 %v1393, %v1400
    %v1403 = vmul.f32 %v298, %v1394
    %1405 = vrot.lane.b32.xlu0 %v1403, 96
    %v1406 = vpop.permute.xlu0 %1405
    %v1407 = vrot.slane %v1406, 1
    %v1408 = vsel %vm304, %v1406, %v1407
    %v1410 = vadd.f32 %v1402, %v1408
    %v1411 = vmul.f32 %v308, %v1394
    %1413 = vrot.lane.b32.xlu0 %v1411, 80
    %v1414 = vpop.permute.xlu0 %1413
    %v1415 = vrot.slane %v1414, 1
    %v1416 = vsel %vm314, %v1414, %v1415
    %v1418 = vadd.f32 %v1410, %v1416
    %v1419 = vmul.f32 %v318, %v1394
    %1421 = vrot.lane.b32.xlu0 %v1419, 64
    %v1422 = vpop.permute.xlu0 %1421
    %v1423 = vrot.slane %v1422, 1
    %v1424 = vsel %vm324, %v1422, %v1423
    %v1426 = vadd.f32 %v1418, %v1424
    %v1427 = vmul.f32 %v328, %v1394
    %1429 = vrot.lane.b32.xlu0 %v1427, 48
    %v1430 = vpop.permute.xlu0 %1429
    %v1431 = vrot.slane %v1430, 1
    %v1432 = vsel %vm334, %v1430, %v1431
    %v1434 = vadd.f32 %v1426, %v1432
    %v1435 = vmul.f32 %v338, %v1394
    %1437 = vrot.lane.b32.xlu0 %v1435, 32
    %v1438 = vpop.permute.xlu0 %1437
    %v1439 = vrot.slane %v1438, 1
    %v1440 = vsel %vm344, %v1438, %v1439
    %v1442 = vadd.f32 %v1434, %v1440
    %v1443 = vld [vmem:[%s281] ss:$2 sm:$0x3]
    %v1444 = vmul.f32 %v349, %v1443
    %v1445 = vadd.f32 %v1442, %v1444
    %v1446 = vld [vmem:[%s281] ss:$2 sm:$0x7]
    %v1447 = vmul.f32 %v353, %v1446
    %1449 = vrot.lane.b32.xlu0 %v1447, 112
    %v1450 = vpop.permute.xlu0 %1449
    %v1451 = vrot.slane %v1450, 1
    %v1452 = vsel %vm294, %v1450, %v1451
    %v1454 = vadd.f32 %v1445, %v1452
    %v1455 = vmul.f32 %v362, %v1446
    %1457 = vrot.lane.b32.xlu0 %v1455, 96
    %v1458 = vpop.permute.xlu0 %1457
    %v1459 = vrot.slane %v1458, 1
    %v1460 = vsel %vm304, %v1458, %v1459
    %v1462 = vadd.f32 %v1454, %v1460
    %v1463 = vmul.f32 %v371, %v1446
    %1465 = vrot.lane.b32.xlu0 %v1463, 80
    %v1466 = vpop.permute.xlu0 %1465
    %v1467 = vrot.slane %v1466, 1
    %v1468 = vsel %vm314, %v1466, %v1467
    %v1470 = vadd.f32 %v1462, %v1468
    %v1471 = vmul.f32 %v380, %v1446
    %1473 = vrot.lane.b32.xlu0 %v1471, 64
    %v1474 = vpop.permute.xlu0 %1473
    %v1475 = vrot.slane %v1474, 1
    %v1476 = vsel %vm324, %v1474, %v1475
    %v1478 = vadd.f32 %v1470, %v1476
    %v1479 = vmul.f32 %v389, %v1446
    %1481 = vrot.lane.b32.xlu0 %v1479, 48
    %v1482 = vpop.permute.xlu0 %1481
    %v1483 = vrot.slane %v1482, 1
    %v1484 = vsel %vm334, %v1482, %v1483
    %v1486 = vadd.f32 %v1478, %v1484
    %v1487 = vmul.f32 %v398, %v1446
    %1489 = vrot.lane.b32.xlu0 %v1487, 32
    %v1490 = vpop.permute.xlu0 %1489
    %v1491 = vrot.slane %v1490, 1
    %v1492 = vsel %vm344, %v1490, %v1491
    %v1494 = vadd.f32 %v1486, %v1492
    %v1495 = vld [vmem:[%s2] ss:$8 sm:$0x3]
    %v1496 = vmul.f32 %v1494, %v1495
    %v1497 = vadd.f32 %v283, %v1496
    %v1498 = vmul.f32 %v410, %v1394
    %v1499 = vmul.f32 %v412, %v1394
    %1501 = vrot.lane.b32.xlu0 %v1499, 112
    %v1502 = vpop.permute.xlu0 %1501
    %v1503 = vrot.slane %v1502, 1
    %v1504 = vsel %vm294, %v1502, %v1503
    %v1506 = vadd.f32 %v1498, %v1504
    %v1507 = vmul.f32 %v421, %v1394
    %1509 = vrot.lane.b32.xlu0 %v1507, 96
    %v1510 = vpop.permute.xlu0 %1509
    %v1511 = vrot.slane %v1510, 1
    %v1512 = vsel %vm304, %v1510, %v1511
    %v1514 = vadd.f32 %v1506, %v1512
    %v1515 = vmul.f32 %v430, %v1394
    %1517 = vrot.lane.b32.xlu0 %v1515, 80
    %v1518 = vpop.permute.xlu0 %1517
    %v1519 = vrot.slane %v1518, 1
    %v1520 = vsel %vm314, %v1518, %v1519
    %v1522 = vadd.f32 %v1514, %v1520
    %v1523 = vmul.f32 %v439, %v1394
    %1525 = vrot.lane.b32.xlu0 %v1523, 64
    %v1526 = vpop.permute.xlu0 %1525
    %v1527 = vrot.slane %v1526, 1
    %v1528 = vsel %vm324, %v1526, %v1527
    %v1530 = vadd.f32 %v1522, %v1528
    %v1531 = vmul.f32 %v448, %v1394
    %1533 = vrot.lane.b32.xlu0 %v1531, 48
    %v1534 = vpop.permute.xlu0 %1533
    %v1535 = vrot.slane %v1534, 1
    %v1536 = vsel %vm334, %v1534, %v1535
    %v1538 = vadd.f32 %v1530, %v1536
    %v1539 = vmul.f32 %v457, %v1394
    %1541 = vrot.lane.b32.xlu0 %v1539, 32
    %v1542 = vpop.permute.xlu0 %1541
    %v1543 = vrot.slane %v1542, 1
    %v1544 = vsel %vm344, %v1542, %v1543
    %v1546 = vadd.f32 %v1538, %v1544
    %v1547 = vmul.f32 %v466, %v1446
    %v1548 = vadd.f32 %v1546, %v1547
    %v1549 = vmul.f32 %v469, %v1446
    %1551 = vrot.lane.b32.xlu0 %v1549, 112
    %v1552 = vpop.permute.xlu0 %1551
    %v1553 = vrot.slane %v1552, 1
    %v1554 = vsel %vm294, %v1552, %v1553
    %v1556 = vadd.f32 %v1548, %v1554
    %v1557 = vmul.f32 %v478, %v1446
    %1559 = vrot.lane.b32.xlu0 %v1557, 96
    %v1560 = vpop.permute.xlu0 %1559
    %v1561 = vrot.slane %v1560, 1
    %v1562 = vsel %vm304, %v1560, %v1561
    %v1564 = vadd.f32 %v1556, %v1562
    %v1565 = vmul.f32 %v487, %v1446
    %1567 = vrot.lane.b32.xlu0 %v1565, 80
    %v1568 = vpop.permute.xlu0 %1567
    %v1569 = vrot.slane %v1568, 1
    %v1570 = vsel %vm314, %v1568, %v1569
    %v1572 = vadd.f32 %v1564, %v1570
    %v1573 = vmul.f32 %v496, %v1446
    %1575 = vrot.lane.b32.xlu0 %v1573, 64
    %v1576 = vpop.permute.xlu0 %1575
    %v1577 = vrot.slane %v1576, 1
    %v1578 = vsel %vm324, %v1576, %v1577
    %v1580 = vadd.f32 %v1572, %v1578
    %v1581 = vmul.f32 %v505, %v1446
    %1583 = vrot.lane.b32.xlu0 %v1581, 48
    %v1584 = vpop.permute.xlu0 %1583
    %v1585 = vrot.slane %v1584, 1
    %v1586 = vsel %vm334, %v1584, %v1585
    %v1588 = vadd.f32 %v1580, %v1586
    %v1589 = vmul.f32 %v514, %v1446
    %1591 = vrot.lane.b32.xlu0 %v1589, 32
    %v1592 = vpop.permute.xlu0 %1591
    %v1593 = vrot.slane %v1592, 1
    %v1594 = vsel %vm344, %v1592, %v1593
    %v1596 = vadd.f32 %v1588, %v1594
    %v1597 = vld [vmem:[%s523] ss:$8 sm:$0x3]
    %1599 = vrot.lane.b32.xlu0 %v1597, 1
    %v1600 = vpop.permute.xlu0 %1599
    %v1601 = vrot.slane %v1600, 7
    %v1602 = vsel %vm529, %v1601, %v1600
    %v1604 = vmul.f32 %v1596, %v1602
    %1606 = vrot.lane.b32.xlu0 %v1604, 127
    %v1607 = vpop.permute.xlu0 %1606
    %v1608 = vrot.slane %v1607, 1
    %v1609 = vsel %vm537, %v1607, %v1608
    %v1611 = vadd.f32 %v1497, %v1609
    %v1612 = vmul.f32 %v541, %v1394
    %v1613 = vmul.f32 %v543, %v1394
    %1615 = vrot.lane.b32.xlu0 %v1613, 112
    %v1616 = vpop.permute.xlu0 %1615
    %v1617 = vrot.slane %v1616, 1
    %v1618 = vsel %vm294, %v1616, %v1617
    %v1620 = vadd.f32 %v1612, %v1618
    %v1621 = vmul.f32 %v552, %v1394
    %1623 = vrot.lane.b32.xlu0 %v1621, 96
    %v1624 = vpop.permute.xlu0 %1623
    %v1625 = vrot.slane %v1624, 1
    %v1626 = vsel %vm304, %v1624, %v1625
    %v1628 = vadd.f32 %v1620, %v1626
    %v1629 = vmul.f32 %v561, %v1394
    %1631 = vrot.lane.b32.xlu0 %v1629, 80
    %v1632 = vpop.permute.xlu0 %1631
    %v1633 = vrot.slane %v1632, 1
    %v1634 = vsel %vm314, %v1632, %v1633
    %v1636 = vadd.f32 %v1628, %v1634
    %v1637 = vmul.f32 %v570, %v1394
    %1639 = vrot.lane.b32.xlu0 %v1637, 64
    %v1640 = vpop.permute.xlu0 %1639
    %v1641 = vrot.slane %v1640, 1
    %v1642 = vsel %vm324, %v1640, %v1641
    %v1644 = vadd.f32 %v1636, %v1642
    %v1645 = vmul.f32 %v579, %v1394
    %1647 = vrot.lane.b32.xlu0 %v1645, 48
    %v1648 = vpop.permute.xlu0 %1647
    %v1649 = vrot.slane %v1648, 1
    %v1650 = vsel %vm334, %v1648, %v1649
    %v1652 = vadd.f32 %v1644, %v1650
    %v1653 = vmul.f32 %v588, %v1394
    %1655 = vrot.lane.b32.xlu0 %v1653, 32
    %v1656 = vpop.permute.xlu0 %1655
    %v1657 = vrot.slane %v1656, 1
    %v1658 = vsel %vm344, %v1656, %v1657
    %v1660 = vadd.f32 %v1652, %v1658
    %v1661 = vmul.f32 %v597, %v1446
    %v1662 = vadd.f32 %v1660, %v1661
    %v1663 = vmul.f32 %v600, %v1446
    %1665 = vrot.lane.b32.xlu0 %v1663, 112
    %v1666 = vpop.permute.xlu0 %1665
    %v1667 = vrot.slane %v1666, 1
    %v1668 = vsel %vm294, %v1666, %v1667
    %v1670 = vadd.f32 %v1662, %v1668
    %v1671 = vmul.f32 %v609, %v1446
    %1673 = vrot.lane.b32.xlu0 %v1671, 96
    %v1674 = vpop.permute.xlu0 %1673
    %v1675 = vrot.slane %v1674, 1
    %v1676 = vsel %vm304, %v1674, %v1675
    %v1678 = vadd.f32 %v1670, %v1676
    %v1679 = vmul.f32 %v618, %v1446
    %1681 = vrot.lane.b32.xlu0 %v1679, 80
    %v1682 = vpop.permute.xlu0 %1681
    %v1683 = vrot.slane %v1682, 1
    %v1684 = vsel %vm314, %v1682, %v1683
    %v1686 = vadd.f32 %v1678, %v1684
    %v1687 = vmul.f32 %v627, %v1446
    %1689 = vrot.lane.b32.xlu0 %v1687, 64
    %v1690 = vpop.permute.xlu0 %1689
    %v1691 = vrot.slane %v1690, 1
    %v1692 = vsel %vm324, %v1690, %v1691
    %v1694 = vadd.f32 %v1686, %v1692
    %v1695 = vmul.f32 %v636, %v1446
    %1697 = vrot.lane.b32.xlu0 %v1695, 48
    %v1698 = vpop.permute.xlu0 %1697
    %v1699 = vrot.slane %v1698, 1
    %v1700 = vsel %vm334, %v1698, %v1699
    %v1702 = vadd.f32 %v1694, %v1700
    %v1703 = vmul.f32 %v645, %v1446
    %1705 = vrot.lane.b32.xlu0 %v1703, 32
    %v1706 = vpop.permute.xlu0 %1705
    %v1707 = vrot.slane %v1706, 1
    %v1708 = vsel %vm344, %v1706, %v1707
    %v1710 = vadd.f32 %v1702, %v1708
    %v1711 = vld [vmem:[%s654] ss:$8 sm:$0x3]
    %1713 = vrot.lane.b32.xlu0 %v1711, 2
    %v1714 = vpop.permute.xlu0 %1713
    %v1715 = vrot.slane %v1714, 7
    %v1716 = vsel %vm660, %v1715, %v1714
    %v1718 = vmul.f32 %v1710, %v1716
    %1720 = vrot.lane.b32.xlu0 %v1718, 126
    %v1721 = vpop.permute.xlu0 %1720
    %v1722 = vrot.slane %v1721, 1
    %v1723 = vsel %vm668, %v1721, %v1722
    %v1725 = vadd.f32 %v1611, %v1723
    %v1726 = vmul.f32 %v672, %v1394
    %v1727 = vmul.f32 %v674, %v1394
    %1729 = vrot.lane.b32.xlu0 %v1727, 112
    %v1730 = vpop.permute.xlu0 %1729
    %v1731 = vrot.slane %v1730, 1
    %v1732 = vsel %vm294, %v1730, %v1731
    %v1734 = vadd.f32 %v1726, %v1732
    %v1735 = vmul.f32 %v683, %v1394
    %1737 = vrot.lane.b32.xlu0 %v1735, 96
    %v1738 = vpop.permute.xlu0 %1737
    %v1739 = vrot.slane %v1738, 1
    %v1740 = vsel %vm304, %v1738, %v1739
    %v1742 = vadd.f32 %v1734, %v1740
    %v1743 = vmul.f32 %v692, %v1394
    %1745 = vrot.lane.b32.xlu0 %v1743, 80
    %v1746 = vpop.permute.xlu0 %1745
    %v1747 = vrot.slane %v1746, 1
    %v1748 = vsel %vm314, %v1746, %v1747
    %v1750 = vadd.f32 %v1742, %v1748
    %v1751 = vmul.f32 %v701, %v1394
    %1753 = vrot.lane.b32.xlu0 %v1751, 64
    %v1754 = vpop.permute.xlu0 %1753
    %v1755 = vrot.slane %v1754, 1
    %v1756 = vsel %vm324, %v1754, %v1755
    %v1758 = vadd.f32 %v1750, %v1756
    %v1759 = vmul.f32 %v710, %v1394
    %1761 = vrot.lane.b32.xlu0 %v1759, 48
    %v1762 = vpop.permute.xlu0 %1761
    %v1763 = vrot.slane %v1762, 1
    %v1764 = vsel %vm334, %v1762, %v1763
    %v1766 = vadd.f32 %v1758, %v1764
    %v1767 = vmul.f32 %v719, %v1394
    %1769 = vrot.lane.b32.xlu0 %v1767, 32
    %v1770 = vpop.permute.xlu0 %1769
    %v1771 = vrot.slane %v1770, 1
    %v1772 = vsel %vm344, %v1770, %v1771
    %v1774 = vadd.f32 %v1766, %v1772
    %v1775 = vmul.f32 %v728, %v1446
    %v1776 = vadd.f32 %v1774, %v1775
    %v1777 = vmul.f32 %v731, %v1446
    %1779 = vrot.lane.b32.xlu0 %v1777, 112
    %v1780 = vpop.permute.xlu0 %1779
    %v1781 = vrot.slane %v1780, 1
    %v1782 = vsel %vm294, %v1780, %v1781
    %v1784 = vadd.f32 %v1776, %v1782
    %v1785 = vmul.f32 %v740, %v1446
    %1787 = vrot.lane.b32.xlu0 %v1785, 96
    %v1788 = vpop.permute.xlu0 %1787
    %v1789 = vrot.slane %v1788, 1
    %v1790 = vsel %vm304, %v1788, %v1789
    %v1792 = vadd.f32 %v1784, %v1790
    %v1793 = vmul.f32 %v749, %v1446
    %1795 = vrot.lane.b32.xlu0 %v1793, 80
    %v1796 = vpop.permute.xlu0 %1795
    %v1797 = vrot.slane %v1796, 1
    %v1798 = vsel %vm314, %v1796, %v1797
    %v1800 = vadd.f32 %v1792, %v1798
    %v1801 = vmul.f32 %v758, %v1446
    %1803 = vrot.lane.b32.xlu0 %v1801, 64
    %v1804 = vpop.permute.xlu0 %1803
    %v1805 = vrot.slane %v1804, 1
    %v1806 = vsel %vm324, %v1804, %v1805
    %v1808 = vadd.f32 %v1800, %v1806
    %v1809 = vmul.f32 %v767, %v1446
    %1811 = vrot.lane.b32.xlu0 %v1809, 48
    %v1812 = vpop.permute.xlu0 %1811
    %v1813 = vrot.slane %v1812, 1
    %v1814 = vsel %vm334, %v1812, %v1813
    %v1816 = vadd.f32 %v1808, %v1814
    %v1817 = vmul.f32 %v776, %v1446
    %1819 = vrot.lane.b32.xlu0 %v1817, 32
    %v1820 = vpop.permute.xlu0 %1819
    %v1821 = vrot.slane %v1820, 1
    %v1822 = vsel %vm344, %v1820, %v1821
    %v1824 = vadd.f32 %v1816, %v1822
    %v1825 = vld [vmem:[%s785] ss:$8 sm:$0x3]
    %1827 = vrot.lane.b32.xlu0 %v1825, 3
    %v1828 = vpop.permute.xlu0 %1827
    %v1829 = vrot.slane %v1828, 7
    %v1830 = vsel %vm791, %v1829, %v1828
    %v1832 = vmul.f32 %v1824, %v1830
    %1834 = vrot.lane.b32.xlu0 %v1832, 125
    %v1835 = vpop.permute.xlu0 %1834
    %v1836 = vrot.slane %v1835, 1
    %v1837 = vsel %vm799, %v1835, %v1836
    %v1839 = vadd.f32 %v1725, %v1837
    %v1840 = vmul.f32 %v803, %v1394
    %v1841 = vmul.f32 %v805, %v1394
    %1843 = vrot.lane.b32.xlu0 %v1841, 112
    %v1844 = vpop.permute.xlu0 %1843
    %v1845 = vrot.slane %v1844, 1
    %v1846 = vsel %vm294, %v1844, %v1845
    %v1848 = vadd.f32 %v1840, %v1846
    %v1849 = vmul.f32 %v814, %v1394
    %1851 = vrot.lane.b32.xlu0 %v1849, 96
    %v1852 = vpop.permute.xlu0 %1851
    %v1853 = vrot.slane %v1852, 1
    %v1854 = vsel %vm304, %v1852, %v1853
    %v1856 = vadd.f32 %v1848, %v1854
    %v1857 = vmul.f32 %v823, %v1394
    %1859 = vrot.lane.b32.xlu0 %v1857, 80
    %v1860 = vpop.permute.xlu0 %1859
    %v1861 = vrot.slane %v1860, 1
    %v1862 = vsel %vm314, %v1860, %v1861
    %v1864 = vadd.f32 %v1856, %v1862
    %v1865 = vmul.f32 %v832, %v1394
    %1867 = vrot.lane.b32.xlu0 %v1865, 64
    %v1868 = vpop.permute.xlu0 %1867
    %v1869 = vrot.slane %v1868, 1
    %v1870 = vsel %vm324, %v1868, %v1869
    %v1872 = vadd.f32 %v1864, %v1870
    %v1873 = vmul.f32 %v841, %v1394
    %1875 = vrot.lane.b32.xlu0 %v1873, 48
    %v1876 = vpop.permute.xlu0 %1875
    %v1877 = vrot.slane %v1876, 1
    %v1878 = vsel %vm334, %v1876, %v1877
    %v1880 = vadd.f32 %v1872, %v1878
    %v1881 = vmul.f32 %v850, %v1394
    %1883 = vrot.lane.b32.xlu0 %v1881, 32
    %v1884 = vpop.permute.xlu0 %1883
    %v1885 = vrot.slane %v1884, 1
    %v1886 = vsel %vm344, %v1884, %v1885
    %v1888 = vadd.f32 %v1880, %v1886
    %v1889 = vmul.f32 %v859, %v1446
    %v1890 = vadd.f32 %v1888, %v1889
    %v1891 = vmul.f32 %v862, %v1446
    %1893 = vrot.lane.b32.xlu0 %v1891, 112
    %v1894 = vpop.permute.xlu0 %1893
    %v1895 = vrot.slane %v1894, 1
    %v1896 = vsel %vm294, %v1894, %v1895
    %v1898 = vadd.f32 %v1890, %v1896
    %v1899 = vmul.f32 %v871, %v1446
    %1901 = vrot.lane.b32.xlu0 %v1899, 96
    %v1902 = vpop.permute.xlu0 %1901
    %v1903 = vrot.slane %v1902, 1
    %v1904 = vsel %vm304, %v1902, %v1903
    %v1906 = vadd.f32 %v1898, %v1904
    %v1907 = vmul.f32 %v880, %v1446
    %1909 = vrot.lane.b32.xlu0 %v1907, 80
    %v1910 = vpop.permute.xlu0 %1909
    %v1911 = vrot.slane %v1910, 1
    %v1912 = vsel %vm314, %v1910, %v1911
    %v1914 = vadd.f32 %v1906, %v1912
    %v1915 = vmul.f32 %v889, %v1446
    %1917 = vrot.lane.b32.xlu0 %v1915, 64
    %v1918 = vpop.permute.xlu0 %1917
    %v1919 = vrot.slane %v1918, 1
    %v1920 = vsel %vm324, %v1918, %v1919
    %v1922 = vadd.f32 %v1914, %v1920
    %v1923 = vmul.f32 %v898, %v1446
    %1925 = vrot.lane.b32.xlu0 %v1923, 48
    %v1926 = vpop.permute.xlu0 %1925
    %v1927 = vrot.slane %v1926, 1
    %v1928 = vsel %vm334, %v1926, %v1927
    %v1930 = vadd.f32 %v1922, %v1928
    %v1931 = vmul.f32 %v907, %v1446
    %1933 = vrot.lane.b32.xlu0 %v1931, 32
    %v1934 = vpop.permute.xlu0 %1933
    %v1935 = vrot.slane %v1934, 1
    %v1936 = vsel %vm344, %v1934, %v1935
    %v1938 = vadd.f32 %v1930, %v1936
    %v1939 = vld [vmem:[%s916] ss:$8 sm:$0x3]
    %1941 = vrot.lane.b32.xlu0 %v1939, 4
    %v1942 = vpop.permute.xlu0 %1941
    %v1943 = vrot.slane %v1942, 7
    %v1944 = vsel %vm922, %v1943, %v1942
    %v1946 = vmul.f32 %v1938, %v1944
    %1948 = vrot.lane.b32.xlu0 %v1946, 124
    %v1949 = vpop.permute.xlu0 %1948
    %v1950 = vrot.slane %v1949, 1
    %v1951 = vsel %vm930, %v1949, %v1950
    %v1953 = vadd.f32 %v1839, %v1951
    %v1954 = vmul.f32 %v934, %v1394
    %v1955 = vmul.f32 %v936, %v1394
    %1957 = vrot.lane.b32.xlu0 %v1955, 112
    %v1958 = vpop.permute.xlu0 %1957
    %v1959 = vrot.slane %v1958, 1
    %v1960 = vsel %vm294, %v1958, %v1959
    %v1962 = vadd.f32 %v1954, %v1960
    %v1963 = vmul.f32 %v945, %v1394
    %1965 = vrot.lane.b32.xlu0 %v1963, 96
    %v1966 = vpop.permute.xlu0 %1965
    %v1967 = vrot.slane %v1966, 1
    %v1968 = vsel %vm304, %v1966, %v1967
    %v1970 = vadd.f32 %v1962, %v1968
    %v1971 = vmul.f32 %v954, %v1394
    %1973 = vrot.lane.b32.xlu0 %v1971, 80
    %v1974 = vpop.permute.xlu0 %1973
    %v1975 = vrot.slane %v1974, 1
    %v1976 = vsel %vm314, %v1974, %v1975
    %v1978 = vadd.f32 %v1970, %v1976
    %v1979 = vmul.f32 %v963, %v1394
    %1981 = vrot.lane.b32.xlu0 %v1979, 64
    %v1982 = vpop.permute.xlu0 %1981
    %v1983 = vrot.slane %v1982, 1
    %v1984 = vsel %vm324, %v1982, %v1983
    %v1986 = vadd.f32 %v1978, %v1984
    %v1987 = vmul.f32 %v972, %v1394
    %1989 = vrot.lane.b32.xlu0 %v1987, 48
    %v1990 = vpop.permute.xlu0 %1989
    %v1991 = vrot.slane %v1990, 1
    %v1992 = vsel %vm334, %v1990, %v1991
    %v1994 = vadd.f32 %v1986, %v1992
    %v1995 = vmul.f32 %v981, %v1394
    %1997 = vrot.lane.b32.xlu0 %v1995, 32
    %v1998 = vpop.permute.xlu0 %1997
    %v1999 = vrot.slane %v1998, 1
    %v2000 = vsel %vm344, %v1998, %v1999
    %v2002 = vadd.f32 %v1994, %v2000
    %v2003 = vmul.f32 %v990, %v1446
    %v2004 = vadd.f32 %v2002, %v2003
    %v2005 = vmul.f32 %v993, %v1446
    %2007 = vrot.lane.b32.xlu0 %v2005, 112
    %v2008 = vpop.permute.xlu0 %2007
    %v2009 = vrot.slane %v2008, 1
    %v2010 = vsel %vm294, %v2008, %v2009
    %v2012 = vadd.f32 %v2004, %v2010
    %v2013 = vmul.f32 %v1002, %v1446
    %2015 = vrot.lane.b32.xlu0 %v2013, 96
    %v2016 = vpop.permute.xlu0 %2015
    %v2017 = vrot.slane %v2016, 1
    %v2018 = vsel %vm304, %v2016, %v2017
    %v2020 = vadd.f32 %v2012, %v2018
    %v2021 = vmul.f32 %v1011, %v1446
    %2023 = vrot.lane.b32.xlu0 %v2021, 80
    %v2024 = vpop.permute.xlu0 %2023
    %v2025 = vrot.slane %v2024, 1
    %v2026 = vsel %vm314, %v2024, %v2025
    %v2028 = vadd.f32 %v2020, %v2026
    %v2029 = vmul.f32 %v1020, %v1446
    %2031 = vrot.lane.b32.xlu0 %v2029, 64
    %v2032 = vpop.permute.xlu0 %2031
    %v2033 = vrot.slane %v2032, 1
    %v2034 = vsel %vm324, %v2032, %v2033
    %v2036 = vadd.f32 %v2028, %v2034
    %v2037 = vmul.f32 %v1029, %v1446
    %2039 = vrot.lane.b32.xlu0 %v2037, 48
    %v2040 = vpop.permute.xlu0 %2039
    %v2041 = vrot.slane %v2040, 1
    %v2042 = vsel %vm334, %v2040, %v2041
    %v2044 = vadd.f32 %v2036, %v2042
    %v2045 = vmul.f32 %v1038, %v1446
    %2047 = vrot.lane.b32.xlu0 %v2045, 32
    %v2048 = vpop.permute.xlu0 %2047
    %v2049 = vrot.slane %v2048, 1
    %v2050 = vsel %vm344, %v2048, %v2049
    %v2052 = vadd.f32 %v2044, %v2050
    %v2053 = vld [vmem:[%s1047] ss:$8 sm:$0x3]
    %2055 = vrot.lane.b32.xlu0 %v2053, 5
    %v2056 = vpop.permute.xlu0 %2055
    %v2057 = vrot.slane %v2056, 7
    %v2058 = vsel %vm1053, %v2057, %v2056
    %v2060 = vmul.f32 %v2052, %v2058
    %2062 = vrot.lane.b32.xlu0 %v2060, 123
    %v2063 = vpop.permute.xlu0 %2062
    %v2064 = vrot.slane %v2063, 1
    %v2065 = vsel %vm1061, %v2063, %v2064
    %v2067 = vadd.f32 %v1953, %v2065
    %v2068 = vmul.f32 %v1065, %v1394
    %v2069 = vmul.f32 %v1067, %v1394
    %2071 = vrot.lane.b32.xlu0 %v2069, 112
    %v2072 = vpop.permute.xlu0 %2071
    %v2073 = vrot.slane %v2072, 1
    %v2074 = vsel %vm294, %v2072, %v2073
    %v2076 = vadd.f32 %v2068, %v2074
    %v2077 = vmul.f32 %v1076, %v1394
    %2079 = vrot.lane.b32.xlu0 %v2077, 96
    %v2080 = vpop.permute.xlu0 %2079
    %v2081 = vrot.slane %v2080, 1
    %v2082 = vsel %vm304, %v2080, %v2081
    %v2084 = vadd.f32 %v2076, %v2082
    %v2085 = vmul.f32 %v1085, %v1394
    %2087 = vrot.lane.b32.xlu0 %v2085, 80
    %v2088 = vpop.permute.xlu0 %2087
    %v2089 = vrot.slane %v2088, 1
    %v2090 = vsel %vm314, %v2088, %v2089
    %v2092 = vadd.f32 %v2084, %v2090
    %v2093 = vmul.f32 %v1094, %v1394
    %2095 = vrot.lane.b32.xlu0 %v2093, 64
    %v2096 = vpop.permute.xlu0 %2095
    %v2097 = vrot.slane %v2096, 1
    %v2098 = vsel %vm324, %v2096, %v2097
    %v2100 = vadd.f32 %v2092, %v2098
    %v2101 = vmul.f32 %v1103, %v1394
    %2103 = vrot.lane.b32.xlu0 %v2101, 48
    %v2104 = vpop.permute.xlu0 %2103
    %v2105 = vrot.slane %v2104, 1
    %v2106 = vsel %vm334, %v2104, %v2105
    %v2108 = vadd.f32 %v2100, %v2106
    %v2109 = vmul.f32 %v1112, %v1394
    %2111 = vrot.lane.b32.xlu0 %v2109, 32
    %v2112 = vpop.permute.xlu0 %2111
    %v2113 = vrot.slane %v2112, 1
    %v2114 = vsel %vm344, %v2112, %v2113
    %v2116 = vadd.f32 %v2108, %v2114
    %v2117 = vmul.f32 %v1121, %v1446
    %v2118 = vadd.f32 %v2116, %v2117
    %v2119 = vmul.f32 %v1124, %v1446
    %2121 = vrot.lane.b32.xlu0 %v2119, 112
    %v2122 = vpop.permute.xlu0 %2121
    %v2123 = vrot.slane %v2122, 1
    %v2124 = vsel %vm294, %v2122, %v2123
    %v2126 = vadd.f32 %v2118, %v2124
    %v2127 = vmul.f32 %v1133, %v1446
    %2129 = vrot.lane.b32.xlu0 %v2127, 96
    %v2130 = vpop.permute.xlu0 %2129
    %v2131 = vrot.slane %v2130, 1
    %v2132 = vsel %vm304, %v2130, %v2131
    %v2134 = vadd.f32 %v2126, %v2132
    %v2135 = vmul.f32 %v1142, %v1446
    %2137 = vrot.lane.b32.xlu0 %v2135, 80
    %v2138 = vpop.permute.xlu0 %2137
    %v2139 = vrot.slane %v2138, 1
    %v2140 = vsel %vm314, %v2138, %v2139
    %v2142 = vadd.f32 %v2134, %v2140
    %v2143 = vmul.f32 %v1151, %v1446
    %2145 = vrot.lane.b32.xlu0 %v2143, 64
    %v2146 = vpop.permute.xlu0 %2145
    %v2147 = vrot.slane %v2146, 1
    %v2148 = vsel %vm324, %v2146, %v2147
    %v2150 = vadd.f32 %v2142, %v2148
    %v2151 = vmul.f32 %v1160, %v1446
    %2153 = vrot.lane.b32.xlu0 %v2151, 48
    %v2154 = vpop.permute.xlu0 %2153
    %v2155 = vrot.slane %v2154, 1
    %v2156 = vsel %vm334, %v2154, %v2155
    %v2158 = vadd.f32 %v2150, %v2156
    %v2159 = vmul.f32 %v1169, %v1446
    %2161 = vrot.lane.b32.xlu0 %v2159, 32
    %v2162 = vpop.permute.xlu0 %2161
    %v2163 = vrot.slane %v2162, 1
    %v2164 = vsel %vm344, %v2162, %v2163
    %v2166 = vadd.f32 %v2158, %v2164
    %v2167 = vld [vmem:[%s1178] ss:$8 sm:$0x3]
    %2169 = vrot.lane.b32.xlu0 %v2167, 6
    %v2170 = vpop.permute.xlu0 %2169
    %v2171 = vrot.slane %v2170, 7
    %v2172 = vsel %vm1184, %v2171, %v2170
    %v2174 = vmul.f32 %v2166, %v2172
    %2176 = vrot.lane.b32.xlu0 %v2174, 122
    %v2177 = vpop.permute.xlu0 %2176
    %v2178 = vrot.slane %v2177, 1
    %v2179 = vsel %vm1192, %v2177, %v2178
    %v2181 = vadd.f32 %v2067, %v2179
    %v2182 = vxor.u32 %v2181, 2147483648
    %v2183 = vmul.f32 %v2182, 1.442695
    %v2184 = vpow.pop %v2183
    %v2185 = vadd.f32 %v2184, 1.0
    %v2186 = vrcp.pop %v2185
    %v2187 = vmul.f32 1.0, %v2186
    %v2189 = vlaneseq
    %v2190 = vshrl.u32 %v2189, 7
    %v2191 = vsub.s32 0, %v2190
    %v2192 = vrot.slane %v2187, %v2191
    %v2193 = vlaneseq
    %v2194 = vshrl.u32 %v2193, 7
    %v2195 = vsub.s32 1, %v2194
    %v2196 = vrot.slane %v2187, %v2195
    %v2199 = vld [vmem:[%s1253] sm:$0xff]
    %v2200 = vld [vmem:[%s1253 + $0x8] sm:$0xff]
    %v2201 = vmul.f32 %v2199, %v2192
    %v2202 = vmul.f32 %v2200, %v2196
    %s2203 = smul.addr %s1251, 8
    %s2204 = scalar_lea.vmem %s4, %s2203
    %2205 = vst [vmem:[%s2204] sm:$0xff] %v2201
    %2206 = vst [vmem:[%s2204 + $0x8] sm:$0xff] %v2202
    %v2207 = vld [vmem:[%s1260] sm:$0xff]
    %v2208 = vld [vmem:[%s1260 + $0x8] sm:$0xff]
    %v2209 = vmul.f32 %v2207, %v2192
    %v2210 = vmul.f32 %v2208, %v2196
    %s2211 = smul.addr %s1258, 8
    %s2212 = scalar_lea.vmem %s4, %s2211
    %2213 = vst [vmem:[%s2212] sm:$0xff] %v2209
    %2214 = vst [vmem:[%s2212 + $0x8] sm:$0xff] %v2210
    %v2215 = vld [vmem:[%s1269] sm:$0xff]
    %v2216 = vld [vmem:[%s1269 + $0x8] sm:$0xff]
    %v2217 = vmul.f32 %v2215, %v2192
    %v2218 = vmul.f32 %v2216, %v2196
    %s2219 = smul.addr %s1267, 8
    %s2220 = scalar_lea.vmem %s4, %s2219
    %2221 = vst [vmem:[%s2220] sm:$0xff] %v2217
    %2222 = vst [vmem:[%s2220 + $0x8] sm:$0xff] %v2218
    %v2223 = vld [vmem:[%s1278] sm:$0xff]
    %v2224 = vld [vmem:[%s1278 + $0x8] sm:$0xff]
    %v2225 = vmul.f32 %v2223, %v2192
    %v2226 = vmul.f32 %v2224, %v2196
    %s2227 = smul.addr %s1276, 8
    %s2228 = scalar_lea.vmem %s4, %s2227
    %2229 = vst [vmem:[%s2228] sm:$0xff] %v2225
    %2230 = vst [vmem:[%s2228 + $0x8] sm:$0xff] %v2226
    %v2231 = vld [vmem:[%s1309 + $0x40] sm:$0xf]
    %v2232 = vld [vmem:[%s1309 + $0x48] sm:$0xf]
    %v2233 = vmul.f32 %v2231, %v2192
    %v2234 = vmul.f32 %v2232, %v2196
    %s2235 = scalar_lea.vmem %s4, 80
    %2236 = vst [vmem:[%s2235 + $0x40] sm:$0xf] %v2233
    %2237 = vst [vmem:[%s2235 + $0x48] sm:$0xf] %v2234
    // Predicated region
    $region22: #{tpu_custom_call.1} parent=1 // pred_check
      _
    $region23: #{tpu_custom_call.1} parent=1 // pred_check_branch
      %2239 = sbr.rel (0) target = $region25
    $region24: #{tpu_custom_call.1} parent=1 // pred_region
      _
    $region25: #{tpu_custom_call.1} parent=1 // pred_fallthru
      _
    // Predicated region
    $region26: #{tpu_custom_call.1} parent=1 // pred_check
      _
    $region27: #{tpu_custom_call.1} parent=1 // pred_check_branch
      %2241 = sbr.rel (0) target = $region29
    $region28: #{tpu_custom_call.1} parent=1 // pred_region
      _
    $region29: #{tpu_custom_call.1} parent=1 // pred_fallthru
      _
    %2242 = vsyncpa [#allocation5], 1

</llo_original>
